<compile_context>
chip_gen: v7x
topology: tpu7x:2x2x1
jax: 0.10.0
libtpu: 0.0.40
codegen_flags: <defaults>
</compile_context>

<pallas_src>
import functools
import math

import jax
import jax.numpy as jnp
from jax.experimental import pallas as pl
from jax.experimental.pallas import tpu as pltpu


# Max query rows per grid step (bounds the [H, tq, N] score tile in VMEM).
_MAX_Q_TILE = 256
# Operand dtype for MXU matmuls.  jnp.bfloat16 is recommended on v6e/v7x;
# f32 default keeps parity with the f32 PyTorch reference.
_DEFAULT_MATMUL_DTYPE = jnp.float32


# ----------------------------------------------------------------------------
# in-kernel helpers (traced inside the Pallas kernels)
# ----------------------------------------------------------------------------
def _erf(x):
    # Abramowitz & Stegun 7.1.26 (max abs err ~1.5e-7, i.e. f32-exact).
    a1, a2, a3, a4, a5 = 0.254829592, -0.284496736, 1.421413741, -1.453152027, 1.061405429
    p = 0.3275911
    sgn = jnp.where(x < 0.0, -1.0, 1.0)
    ax = jnp.abs(x)
    t = 1.0 / (1.0 + p * ax)
    poly = ((((a5 * t + a4) * t + a3) * t + a2) * t + a1) * t
    return sgn * (1.0 - poly * jnp.exp(-ax * ax))


def _gelu(x):
    # nn.GELU() default = exact erf formulation.
    return 0.5 * x * (1.0 + _erf(x * (1.0 / math.sqrt(2.0))))


def _layernorm(x, gamma, beta, eps=1e-5):
    mu = jnp.mean(x, axis=-1, keepdims=True)
    var = jnp.mean((x - mu) ** 2, axis=-1, keepdims=True)
    return (x - mu) * jax.lax.rsqrt(var + eps) * gamma + beta


def _mm(a, b, dtype):
    # MXU matmul with selectable operand dtype, f32 accumulation.
    return jnp.dot(a.astype(dtype), b.astype(dtype),
                   preferred_element_type=jnp.float32)


def _split_heads(t, num_heads, head_dim):
    # [M, D] -> [H, M, head_dim] via static column slices + leading-axis stack
    # (avoids an in-kernel minor-dim reshape).
    return jnp.stack([t[:, h * head_dim:(h + 1) * head_dim]
                      for h in range(num_heads)], axis=0)


def _merge_heads(t):
    # [H, M, head_dim] -> [M, H*head_dim]: one lane-dense value, written once.
    return jnp.concatenate([t[h] for h in range(t.shape[0])], axis=-1)


def _rope_half_split(t, cos, sin, head_dim):
    # Rotary in the de-interleaved (half-split) per-head layout.  Equivalent to
    # the PyTorch interleaved rotate_half because the per-head column
    # permutation is folded into Wq/Wk (glue) and is shared by Q and K, so
    # QK^T is invariant.  Pure VPU work: no MXU, no [D, D] "rot" weight.
    h2 = head_dim // 2
    a, b = t[..., :h2], t[..., h2:]
    ce, co = cos[None, :, :h2], cos[None, :, h2:]
    se, so = sin[None, :, :h2], sin[None, :, h2:]
    return jnp.concatenate([a * ce - b * se, b * co + a * so], axis=-1)


def _attention(qh, kh, vh, head_dim, dtype):
    # Heads batched into single dot_generals (feedback: no per-head loop).
    scale = 1.0 / math.sqrt(head_dim)
    s = jnp.einsum('hqc,hkc->hqk', qh.astype(dtype), kh.astype(dtype),
                   preferred_element_type=jnp.float32) * scale
    s = s - jnp.max(s, axis=-1, keepdims=True)
    p = jnp.exp(s)
    p = p / jnp.sum(p, axis=-1, keepdims=True)
    ctx = jnp.einsum('hqk,hkc->hqc', p.astype(dtype), vh.astype(dtype),
                     preferred_element_type=jnp.float32)
    return _merge_heads(ctx)


def _ffn(x, m, w1a, w1b, b1, gamma, beta, w2, b2, dtype):
    # Linear(cat(x, m)) realized as two half-matmuls (avoids in-kernel concat).
    h = _mm(x, w1a, dtype) + _mm(m, w1b, dtype) + b1
    h = _layernorm(h, gamma, beta)
    h = _gelu(h)
    return _mm(h, w2, dtype) + b2


# ----------------------------------------------------------------------------
# kernels
# ----------------------------------------------------------------------------
def self_block_kernel(xq_ref, xf_ref, cq_ref, sq_ref, cf_ref, sf_ref,
                      wq_ref, bq_ref, wk_ref, bk_ref, wv_ref, bv_ref,
                      wo_ref, bo_ref,
                      w1a_ref, w1b_ref, b1_ref, g_ref, be_ref, w2_ref, b2_ref,
                      out_ref, *, num_heads, head_dim, matmul_dtype):
    dt = matmul_dtype
    xq = xq_ref[0]    # [tq, D] query-row tile of this image
    xf = xf_ref[0]    # [N,  D] all rows of this image (for K/V)

    q = _mm(xq, wq_ref[...], dt) + bq_ref[...]
    k = _mm(xf, wk_ref[...], dt) + bk_ref[...]
    v = _mm(xf, wv_ref[...], dt) + bv_ref[...]

    qh = _rope_half_split(_split_heads(q, num_heads, head_dim),
                          cq_ref[0], sq_ref[0], head_dim)
    kh = _rope_half_split(_split_heads(k, num_heads, head_dim),
                          cf_ref[0], sf_ref[0], head_dim)
    vh = _split_heads(v, num_heads, head_dim)

    ctx = _attention(qh, kh, vh, head_dim, dt)                 # [tq, D]
    msg = _mm(ctx, wo_ref[...], dt) + bo_ref[...]
    out_ref[0] = xq + _ffn(xq, msg, w1a_ref[...], w1b_ref[...], b1_ref[...],
                           g_ref[...], be_ref[...], w2_ref[...], b2_ref[...], dt)


def cross_block_kernel(xq_ref, xk_ref,
                       wqk_ref, bqk_ref, wv_ref, bv_ref, wo_ref, bo_ref,
                       w1a_ref, w1b_ref, b1_ref, g_ref, be_ref, w2_ref, b2_ref,
                       out_ref, *, num_heads, head_dim, matmul_dtype):
    dt = matmul_dtype
    xq = xq_ref[0]    # [tq, D]  query-row tile of the "query" image
    xk = xk_ref[0]    # [Nk, D]  all rows of the other image

    qk_q = _mm(xq, wqk_ref[...], dt) + bqk_ref[...]
    qk_k = _mm(xk, wqk_ref[...], dt) + bqk_ref[...]
    v_k = _mm(xk, wv_ref[...], dt) + bv_ref[...]

    qh = _split_heads(qk_q, num_heads, head_dim)
    kh = _split_heads(qk_k, num_heads, head_dim)
    vh = _split_heads(v_k, num_heads, head_dim)

    ctx = _attention(qh, kh, vh, head_dim, dt)
    msg = _mm(ctx, wo_ref[...], dt) + bo_ref[...]
    out_ref[0] = xq + _ffn(xq, msg, w1a_ref[...], w1b_ref[...], b1_ref[...],
                           g_ref[...], be_ref[...], w2_ref[...], b2_ref[...], dt)


# ----------------------------------------------------------------------------
# wrappers (grids / BlockSpecs / pallas_call)
# ----------------------------------------------------------------------------
def _pick_q_tile(n):
    if n <= _MAX_Q_TILE:
        return n
    for t in range(_MAX_Q_TILE, 7, -1):
        if n % t == 0 and t % 8 == 0:
            return t
    # TODO(synk): mask a remainder tile (ragged N) instead of falling back.
    return n


def _resident(shape):
    zeros = (0,) * len(shape)
    return pl.BlockSpec(shape, lambda i, qi: zeros)   # weights stay resident


def _compiler_params():
    return pltpu.CompilerParams(
        dimension_semantics=("parallel", "parallel"),  # images/dirs x q-tiles
        vmem_limit_bytes=64 * 1024 * 1024)


def self_block(x, cos, sin, p, num_heads, matmul_dtype=_DEFAULT_MATMUL_DTYPE):
    """x: [G, N, D] stacked images; cos/sin: [G, N, head_dim] (de-interleaved)."""
    g, n, d = x.shape
    head_dim = d // num_heads
    tq = _pick_q_tile(n)
    grid = (g, n // tq)

    def tile3(last):
        return pl.BlockSpec((1, tq, last), lambda i, qi: (i, qi, 0))

    def full3(rows, last):
        return pl.BlockSpec((1, rows, last), lambda i, qi: (i, 0, 0))

    inputs = [x, x, cos, sin, cos, sin,
              p["wq"], p["bq"], p["wk"], p["bk"], p["wv"], p["bv"],
              p["wo"], p["bo"],
              p["w1a"], p["w1b"], p["b1"], p["g"], p["beta"], p["w2"], p["b2"]]
    in_specs = [tile3(d), full3(n, d),
                tile3(head_dim), tile3(head_dim),
                full3(n, head_dim), full3(n, head_dim)]
    in_specs += [_resident(a.shape) for a in inputs[6:]]

    kernel = functools.partial(self_block_kernel, num_heads=num_heads,
                               head_dim=head_dim, matmul_dtype=matmul_dtype)
    # TODO(synk): alias the stacked input to the output (input_output_aliases)
    # once the surrounding graph guarantees donation.
    return pl.pallas_call(
        kernel,
        out_shape=jax.ShapeDtypeStruct((g, n, d), jnp.float32),
        grid=grid,
        in_specs=in_specs,
        out_specs=tile3(d),
        compiler_params=_compiler_params(),
    )(*inputs)


def _cross_call(xq, xk, p, num_heads, matmul_dtype):
    g, nq, d = xq.shape
    _, nk, _ = xk.shape
    head_dim = d // num_heads
    tq = _pick_q_tile(nq)
    grid = (g, nq // tq)

    tile_q = pl.BlockSpec((1, tq, d), lambda i, qi: (i, qi, 0))
    full_k = pl.BlockSpec((1, nk, d), lambda i, qi: (i, 0, 0))

    inputs = [xq, xk,
              p["wqk"], p["bqk"], p["wv"], p["bv"], p["wo"], p["bo"],
              p["w1a"], p["w1b"], p["b1"], p["g"], p["beta"], p["w2"], p["b2"]]
    in_specs = [tile_q, full_k] + [_resident(a.shape) for a in inputs[2:]]

    kernel = functools.partial(cross_block_kernel, num_heads=num_heads,
                               head_dim=head_dim, matmul_dtype=matmul_dtype)
    return pl.pallas_call(
        kernel,
        out_shape=jax.ShapeDtypeStruct((g, nq, d), jnp.float32),
        grid=grid,
        in_specs=in_specs,
        out_specs=pl.BlockSpec((1, tq, d), lambda i, qi: (i, qi, 0)),
        compiler_params=_compiler_params(),
    )(*inputs)


def cross_block(x0, x1, p, num_heads, matmul_dtype=_DEFAULT_MATMUL_DTYPE):
    if x0.shape == x1.shape:
        # Both cross directions form one "parallel" grid axis (megacore on v7x,
        # shared-weight DMA amortization everywhere).
        y = _cross_call(jnp.stack([x0, x1]), jnp.stack([x1, x0]),
                        p, num_heads, matmul_dtype)
        return y[0], y[1]
    y0 = _cross_call(x0[None], x1[None], p, num_heads, matmul_dtype)[0]
    y1 = _cross_call(x1[None], x0[None], p, num_heads, matmul_dtype)[0]
    return y0, y1


def _deinterleave_last(t):
    # [..., hd] interleaved (pair) order -> half-split (even | odd) order.
    return jnp.concatenate([t[..., 0::2], t[..., 1::2]], axis=-1)


def _prep_rotary(enc):
    # enc: (2, 1, 1, N, head_dim) in the PyTorch broadcast layout.
    return _deinterleave_last(enc[0, 0, 0]), _deinterleave_last(enc[1, 0, 0])


def transformer_layer(desc0, desc1, enc0, enc1, self_p, cross_p, num_heads,
                      matmul_dtype=_DEFAULT_MATMUL_DTYPE):
    x0, x1 = desc0[0], desc1[0]                      # squeeze batch=1
    c0, s0 = _prep_rotary(enc0)
    c1, s1 = _prep_rotary(enc1)
    if x0.shape == x1.shape:
        y = self_block(jnp.stack([x0, x1]), jnp.stack([c0, c1]),
                       jnp.stack([s0, s1]), self_p, num_heads, matmul_dtype)
        y0, y1 = y[0], y[1]
    else:
        y0 = self_block(x0[None], c0[None], s0[None], self_p, num_heads, matmul_dtype)[0]
        y1 = self_block(x1[None], c1[None], s1[None], self_p, num_heads, matmul_dtype)[0]
    z0, z1 = cross_block(y0, y1, cross_p, num_heads, matmul_dtype)
    return z0[None], z1[None]


# ----------------------------------------------------------------------------
# parameter construction + re-layout (glue, plain JAX)
# ----------------------------------------------------------------------------
def _linear_params(key, in_dim, out_dim):
    kw, kb = jax.random.split(key)
    bound = 1.0 / math.sqrt(in_dim)
    w = jax.random.uniform(kw, (out_dim, in_dim), jnp.float32, -bound, bound)
    b = jax.random.uniform(kb, (out_dim,), jnp.float32, -bound, bound)
    return w, b


def init_torch_self_params(key, d):
    k1, k2, k3, k4 = jax.random.split(key, 4)
    wqkv, bqkv = _linear_params(k1, d, 3 * d)
    wo, bo = _linear_params(k2, d, d)
    w1, b1 = _linear_params(k3, 2 * d, 2 * d)
    w2, b2 = _linear_params(k4, 2 * d, d)
    return dict(Wqkv=wqkv, bqkv=bqkv, Wout=wo, bout=bo, W1=w1, b1=b1,
                ln_g=jnp.ones((2 * d,), jnp.float32),
                ln_b=jnp.zeros((2 * d,), jnp.float32), W2=w2, b2=b2)


def init_torch_cross_params(key, d):
    k1, k2, k3, k4, k5 = jax.random.split(key, 5)
    wqk, bqk = _linear_params(k1, d, d)
    wv, bv = _linear_params(k2, d, d)
    wo, bo = _linear_params(k3, d, d)
    w1, b1 = _linear_params(k4, 2 * d, 2 * d)
    w2, b2 = _linear_params(k5, 2 * d, d)
    return dict(Wqk=wqk, bqk=bqk, Wv=wv, bv=bv, Wout=wo, bout=bo, W1=w1, b1=b1,
                ln_g=jnp.ones((2 * d,), jnp.float32),
                ln_b=jnp.zeros((2 * d,), jnp.float32), W2=w2, b2=b2)


def _head_deinterleave_perm(num_heads, head_dim):
    half = jnp.concatenate([jnp.arange(0, head_dim, 2), jnp.arange(1, head_dim, 2)])
    return (jnp.arange(num_heads)[:, None] * head_dim + half[None, :]).reshape(-1)


def _ffn_kernel_params(tp):
    d = tp["W2"].shape[0]
    w1t = tp["W1"].T                     # [2D_in, 2D_out]; rows 0..D-1 = x part
    return dict(w1a=w1t[:d], w1b=w1t[d:], b1=tp["b1"][None, :],
                g=tp["ln_g"][None, :], beta=tp["ln_b"][None, :],
                w2=tp["W2"].T, b2=tp["b2"][None, :])


def prepare_self_params(tp, num_heads):
    d = tp["Wout"].shape[0]
    head_dim = d // num_heads
    assert d % num_heads == 0 and head_dim % 2 == 0
    perm = _head_deinterleave_perm(num_heads, head_dim)
    wqkv_t = tp["Wqkv"].T                # [D_in, 3D]; out col 3*(h*hd+j)+s
    wq, bq = wqkv_t[:, 0::3], tp["bqkv"][0::3]
    wk, bk = wqkv_t[:, 1::3], tp["bqkv"][1::3]
    wv, bv = wqkv_t[:, 2::3], tp["bqkv"][2::3]
    p = dict(
        # Q/K columns permuted to the half-split ("even|odd") per-head layout:
        # rotary becomes elementwise in-kernel; QK^T is invariant.
        wq=wq[:, perm], bq=bq[perm][None, :],
        wk=wk[:, perm], bk=bk[perm][None, :],
        wv=wv, bv=bv[None, :],
        wo=tp["Wout"].T, bo=tp["bout"][None, :])
    p.update(_ffn_kernel_params(tp))
    return p


def prepare_cross_params(tp):
    p = dict(wqk=tp["Wqk"].T, bqk=tp["bqk"][None, :],
             wv=tp["Wv"].T, bv=tp["bv"][None, :],
             wo=tp["Wout"].T, bo=tp["bout"][None, :])
    p.update(_ffn_kernel_params(tp))
    return p


# ----------------------------------------------------------------------------
# plain-JAX reference (mirrors the PyTorch module) for a numerics check
# ----------------------------------------------------------------------------
def _ref_rotate_half(t):
    shape = t.shape
    t = t.reshape(shape[:-1] + (shape[-1] // 2, 2))
    t = jnp.stack([-t[..., 1], t[..., 0]], axis=-1)
    return t.reshape(shape)


def _ref_split_heads(t, num_heads):
    n, d = t.shape
    return jnp.transpose(t.reshape(n, num_heads, d // num_heads), (1, 0, 2))


def _ref_merge_heads(t):
    h, n, c = t.shape
    return jnp.transpose(t, (1, 0, 2)).reshape(n, h * c)


def _ref_sdpa(q, k, v):
    s = jnp.einsum('hqc,hkc->hqk', q, k) * (1.0 / math.sqrt(q.shape[-1]))
    return jnp.einsum('hqk,hkc->hqc', jax.nn.softmax(s, axis=-1), v)


def _ref_ffn(x, m, tp):
    h = jnp.concatenate([x, m], axis=-1) @ tp["W1"].T + tp["b1"]
    mu = h.mean(-1, keepdims=True)
    var = ((h - mu) ** 2).mean(-1, keepdims=True)
    h = (h - mu) / jnp.sqrt(var + 1e-5) * tp["ln_g"] + tp["ln_b"]
    h = 0.5 * h * (1.0 + jax.lax.erf(h / math.sqrt(2.0)))
    return h @ tp["W2"].T + tp["b2"]


def _ref_self_block(x, enc, tp, num_heads):
    n, d = x.shape
    hd = d // num_heads
    qkv = (x @ tp["Wqkv"].T + tp["bqkv"]).reshape(n, num_heads, hd, 3)
    q = jnp.transpose(qkv[..., 0], (1, 0, 2))
    k = jnp.transpose(qkv[..., 1], (1, 0, 2))
    v = jnp.transpose(qkv[..., 2], (1, 0, 2))
    cos, sin = enc[0, 0, 0][None], enc[1, 0, 0][None]
    q = q * cos + _ref_rotate_half(q) * sin
    k = k * cos + _ref_rotate_half(k) * sin
    msg = _ref_merge_heads(_ref_sdpa(q, k, v)) @ tp["Wout"].T + tp["bout"]
    return x + _ref_ffn(x, msg, tp)


def _ref_cross_block(x0, x1, tp, num_heads):
    qk0 = _ref_split_heads(x0 @ tp["Wqk"].T + tp["bqk"], num_heads)
    qk1 = _ref_split_heads(x1 @ tp["Wqk"].T + tp["bqk"], num_heads)
    v0 = _ref_split_heads(x0 @ tp["Wv"].T + tp["bv"], num_heads)
    v1 = _ref_split_heads(x1 @ tp["Wv"].T + tp["bv"], num_heads)
    m0 = _ref_merge_heads(_ref_sdpa(qk0, qk1, v1)) @ tp["Wout"].T + tp["bout"]
    m1 = _ref_merge_heads(_ref_sdpa(qk1, qk0, v0)) @ tp["Wout"].T + tp["bout"]
    return x0 + _ref_ffn(x0, m0, tp), x1 + _ref_ffn(x1, m1, tp)


def reference_transformer_layer(desc0, desc1, enc0, enc1, self_tp, cross_tp, num_heads):
    x0 = _ref_self_block(desc0[0], enc0, self_tp, num_heads)
    x1 = _ref_self_block(desc1[0], enc1, self_tp, num_heads)
    y0, y1 = _ref_cross_block(x0, x1, cross_tp, num_heads)
    return y0[None], y1[None]


# ----------------------------------------------------------------------------
if __name__ == "__main__":
    embed_dim, num_heads, seq = 64, 4, 8
    head_dim = embed_dim // num_heads

    key = jax.random.PRNGKey(0)
    keys = jax.random.split(key, 6)
    desc0 = jax.random.normal(keys[0], (1, seq, embed_dim), jnp.float32)
    desc1 = jax.random.normal(keys[1], (1, seq, embed_dim), jnp.float32)
    # rotary encodings in the PyTorch broadcast shape (2, B, 1, N, head_dim)
    encoding0 = jax.random.normal(keys[2], (2, 1, 1, seq, head_dim), jnp.float32)
    encoding1 = jax.random.normal(keys[3], (2, 1, 1, seq, head_dim), jnp.float32)

    self_tp = init_torch_self_params(keys[4], embed_dim)
    cross_tp = init_torch_cross_params(keys[5], embed_dim)
    self_p = prepare_self_params(self_tp, num_heads)
    cross_p = prepare_cross_params(cross_tp)

    out0, out1 = transformer_layer(desc0, desc1, encoding0, encoding1,
                                   self_p, cross_p, num_heads)
    jax.block_until_ready((out0, out1))
    assert out0.shape == (1, seq, embed_dim) and out1.shape == (1, seq, embed_dim)

    with jax.default_matmul_precision("float32"):
        ref0, ref1 = reference_transformer_layer(desc0, desc1, encoding0, encoding1,
                                                 self_tp, cross_tp, num_heads)
    assert jnp.allclose(out0, ref0, rtol=1e-2, atol=1e-2)
    assert jnp.allclose(out1, ref1, rtol=1e-2, atol=1e-2)
    print("KERNEL_OK")
</pallas_src>

<mosaic_0001>
module attributes {stable_mosaic.version = 11 : i64} {
  func.func @self_block_kernel(%arg0: i32, %arg1: i32, %arg2: memref<1x8x64xf32, #tpu.memory_space<vmem>>, %arg3: memref<1x8x64xf32, #tpu.memory_space<vmem>>, %arg4: memref<1x8x16xf32, #tpu.memory_space<vmem>>, %arg5: memref<1x8x16xf32, #tpu.memory_space<vmem>>, %arg6: memref<1x8x16xf32, #tpu.memory_space<vmem>>, %arg7: memref<1x8x16xf32, #tpu.memory_space<vmem>>, %arg8: memref<64x64xf32, #tpu.memory_space<vmem>>, %arg9: memref<1x64xf32, #tpu.memory_space<vmem>>, %arg10: memref<64x64xf32, #tpu.memory_space<vmem>>, %arg11: memref<1x64xf32, #tpu.memory_space<vmem>>, %arg12: memref<64x64xf32, #tpu.memory_space<vmem>>, %arg13: memref<1x64xf32, #tpu.memory_space<vmem>>, %arg14: memref<64x64xf32, #tpu.memory_space<vmem>>, %arg15: memref<1x64xf32, #tpu.memory_space<vmem>>, %arg16: memref<64x128xf32, #tpu.memory_space<vmem>>, %arg17: memref<64x128xf32, #tpu.memory_space<vmem>>, %arg18: memref<1x128xf32, #tpu.memory_space<vmem>>, %arg19: memref<1x128xf32, #tpu.memory_space<vmem>>, %arg20: memref<1x128xf32, #tpu.memory_space<vmem>>, %arg21: memref<128x64xf32, #tpu.memory_space<vmem>>, %arg22: memref<1x64xf32, #tpu.memory_space<vmem>>, %arg23: memref<1x8x64xf32, #tpu.memory_space<vmem>>) attributes {dimension_semantics = [#tpu.dimension_semantics<parallel>, #tpu.dimension_semantics<parallel>], iteration_bounds = array<i64: 2, 1>, scalar_prefetch = 0 : i64, scratch_operands = 0 : i64, tpu.core_type = #tpu.core_type<tc>, window_params = [{transform_indices = @transform_0, window_bounds = array<i64: 1, 8, 64>}, {transform_indices = @transform_1, window_bounds = array<i64: 1, 8, 64>}, {transform_indices = @transform_2, window_bounds = array<i64: 1, 8, 16>}, {transform_indices = @transform_3, window_bounds = array<i64: 1, 8, 16>}, {transform_indices = @transform_4, window_bounds = array<i64: 1, 8, 16>}, {transform_indices = @transform_5, window_bounds = array<i64: 1, 8, 16>}, {pipeline_mode = #tpu.pipeline_mode<synchronous>, transform_indices = @transform_6, window_bounds = array<i64: 64, 64>}, {pipeline_mode = #tpu.pipeline_mode<synchronous>, transform_indices = @transform_7, window_bounds = array<i64: 1, 64>}, {pipeline_mode = #tpu.pipeline_mode<synchronous>, transform_indices = @transform_8, window_bounds = array<i64: 64, 64>}, {pipeline_mode = #tpu.pipeline_mode<synchronous>, transform_indices = @transform_9, window_bounds = array<i64: 1, 64>}, {pipeline_mode = #tpu.pipeline_mode<synchronous>, transform_indices = @transform_10, window_bounds = array<i64: 64, 64>}, {pipeline_mode = #tpu.pipeline_mode<synchronous>, transform_indices = @transform_11, window_bounds = array<i64: 1, 64>}, {pipeline_mode = #tpu.pipeline_mode<synchronous>, transform_indices = @transform_12, window_bounds = array<i64: 64, 64>}, {pipeline_mode = #tpu.pipeline_mode<synchronous>, transform_indices = @transform_13, window_bounds = array<i64: 1, 64>}, {pipeline_mode = #tpu.pipeline_mode<synchronous>, transform_indices = @transform_14, window_bounds = array<i64: 64, 128>}, {pipeline_mode = #tpu.pipeline_mode<synchronous>, transform_indices = @transform_15, window_bounds = array<i64: 64, 128>}, {pipeline_mode = #tpu.pipeline_mode<synchronous>, transform_indices = @transform_16, window_bounds = array<i64: 1, 128>}, {pipeline_mode = #tpu.pipeline_mode<synchronous>, transform_indices = @transform_17, window_bounds = array<i64: 1, 128>}, {pipeline_mode = #tpu.pipeline_mode<synchronous>, transform_indices = @transform_18, window_bounds = array<i64: 1, 128>}, {pipeline_mode = #tpu.pipeline_mode<synchronous>, transform_indices = @transform_19, window_bounds = array<i64: 128, 64>}, {pipeline_mode = #tpu.pipeline_mode<synchronous>, transform_indices = @transform_20, window_bounds = array<i64: 1, 64>}, {transform_indices = @transform_21, window_bounds = array<i64: 1, 8, 64>}]} {
    %c0 = arith.constant 0 : index
    %c0_0 = arith.constant 0 : index
    %c0_1 = arith.constant 0 : index
    %0 = vector.load %arg2[%c0, %c0_0, %c0_1] : memref<1x8x64xf32, #tpu.memory_space<vmem>>, vector<1x8x64xf32>
    %1 = vector.shape_cast %0 : vector<1x8x64xf32> to vector<8x64xf32>
    %c0_2 = arith.constant 0 : index
    %c0_3 = arith.constant 0 : index
    %c0_4 = arith.constant 0 : index
    %2 = vector.load %arg3[%c0_2, %c0_3, %c0_4] : memref<1x8x64xf32, #tpu.memory_space<vmem>>, vector<1x8x64xf32>
    %3 = vector.shape_cast %2 : vector<1x8x64xf32> to vector<8x64xf32>
    %c0_5 = arith.constant 0 : index
    %c0_6 = arith.constant 0 : index
    %4 = vector.load %arg8[%c0_5, %c0_6] : memref<64x64xf32, #tpu.memory_space<vmem>>, vector<64x64xf32>
    %cst = arith.constant dense<0.000000e+00> : vector<8x64xf32>
    %5 = tpu.matmul %1, %4, %cst {dimension_numbers = #tpu.dot_dimension_numbers<[1], [0], [0], [1], [0, 0, 1, 1], [], []>} : vector<8x64xf32>, vector<64x64xf32>, vector<8x64xf32> -> vector<8x64xf32>
    %c0_7 = arith.constant 0 : index
    %c0_8 = arith.constant 0 : index
    %6 = vector.load %arg9[%c0_7, %c0_8] : memref<1x64xf32, #tpu.memory_space<vmem>>, vector<1x64xf32>
    %7 = vector.broadcast %6 : vector<1x64xf32> to vector<8x64xf32>
    %8 = arith.addf %5, %7 : vector<8x64xf32>
    %c0_9 = arith.constant 0 : index
    %c0_10 = arith.constant 0 : index
    %9 = vector.load %arg10[%c0_9, %c0_10] : memref<64x64xf32, #tpu.memory_space<vmem>>, vector<64x64xf32>
    %cst_11 = arith.constant dense<0.000000e+00> : vector<8x64xf32>
    %10 = tpu.matmul %3, %9, %cst_11 {dimension_numbers = #tpu.dot_dimension_numbers<[1], [0], [0], [1], [0, 0, 1, 1], [], []>} : vector<8x64xf32>, vector<64x64xf32>, vector<8x64xf32> -> vector<8x64xf32>
    %c0_12 = arith.constant 0 : index
    %c0_13 = arith.constant 0 : index
    %11 = vector.load %arg11[%c0_12, %c0_13] : memref<1x64xf32, #tpu.memory_space<vmem>>, vector<1x64xf32>
    %12 = vector.broadcast %11 : vector<1x64xf32> to vector<8x64xf32>
    %13 = arith.addf %10, %12 : vector<8x64xf32>
    %c0_14 = arith.constant 0 : index
    %c0_15 = arith.constant 0 : index
    %14 = vector.load %arg12[%c0_14, %c0_15] : memref<64x64xf32, #tpu.memory_space<vmem>>, vector<64x64xf32>
    %cst_16 = arith.constant dense<0.000000e+00> : vector<8x64xf32>
    %15 = tpu.matmul %3, %14, %cst_16 {dimension_numbers = #tpu.dot_dimension_numbers<[1], [0], [0], [1], [0, 0, 1, 1], [], []>} : vector<8x64xf32>, vector<64x64xf32>, vector<8x64xf32> -> vector<8x64xf32>
    %c0_17 = arith.constant 0 : index
    %c0_18 = arith.constant 0 : index
    %16 = vector.load %arg13[%c0_17, %c0_18] : memref<1x64xf32, #tpu.memory_space<vmem>>, vector<1x64xf32>
    %17 = vector.broadcast %16 : vector<1x64xf32> to vector<8x64xf32>
    %18 = arith.addf %15, %17 : vector<8x64xf32>
    %19 = vector.extract_strided_slice %8 {offsets = [0, 0], sizes = [8, 16], strides = [1, 1]} : vector<8x64xf32> to vector<8x16xf32>
    %20 = vector.extract_strided_slice %8 {offsets = [0, 16], sizes = [8, 16], strides = [1, 1]} : vector<8x64xf32> to vector<8x16xf32>
    %21 = vector.extract_strided_slice %8 {offsets = [0, 32], sizes = [8, 16], strides = [1, 1]} : vector<8x64xf32> to vector<8x16xf32>
    %22 = vector.extract_strided_slice %8 {offsets = [0, 48], sizes = [8, 16], strides = [1, 1]} : vector<8x64xf32> to vector<8x16xf32>
    %23 = vector.shape_cast %19 : vector<8x16xf32> to vector<1x8x16xf32>
    %24 = vector.shape_cast %20 : vector<8x16xf32> to vector<1x8x16xf32>
    %25 = vector.shape_cast %21 : vector<8x16xf32> to vector<1x8x16xf32>
    %26 = vector.shape_cast %22 : vector<8x16xf32> to vector<1x8x16xf32>
    %27 = tpu.concatenate %23, %24, %25, %26 in 0 : vector<1x8x16xf32>, vector<1x8x16xf32>, vector<1x8x16xf32>, vector<1x8x16xf32> -> vector<4x8x16xf32>
    %c0_19 = arith.constant 0 : index
    %c0_20 = arith.constant 0 : index
    %c0_21 = arith.constant 0 : index
    %28 = vector.load %arg4[%c0_19, %c0_20, %c0_21] : memref<1x8x16xf32, #tpu.memory_space<vmem>>, vector<1x8x16xf32>
    %29 = vector.shape_cast %28 : vector<1x8x16xf32> to vector<8x16xf32>
    %c0_22 = arith.constant 0 : index
    %c0_23 = arith.constant 0 : index
    %c0_24 = arith.constant 0 : index
    %30 = vector.load %arg5[%c0_22, %c0_23, %c0_24] : memref<1x8x16xf32, #tpu.memory_space<vmem>>, vector<1x8x16xf32>
    %31 = vector.shape_cast %30 : vector<1x8x16xf32> to vector<8x16xf32>
    %32 = vector.extract_strided_slice %27 {offsets = [0, 0, 0], sizes = [4, 8, 8], strides = [1, 1, 1]} : vector<4x8x16xf32> to vector<4x8x8xf32>
    %33 = vector.extract_strided_slice %27 {offsets = [0, 0, 8], sizes = [4, 8, 8], strides = [1, 1, 1]} : vector<4x8x16xf32> to vector<4x8x8xf32>
    %34 = vector.extract_strided_slice %29 {offsets = [0, 0], sizes = [8, 8], strides = [1, 1]} : vector<8x16xf32> to vector<8x8xf32>
    %35 = vector.shape_cast %34 : vector<8x8xf32> to vector<1x8x8xf32>
    %36 = vector.extract_strided_slice %29 {offsets = [0, 8], sizes = [8, 8], strides = [1, 1]} : vector<8x16xf32> to vector<8x8xf32>
    %37 = vector.shape_cast %36 : vector<8x8xf32> to vector<1x8x8xf32>
    %38 = vector.extract_strided_slice %31 {offsets = [0, 0], sizes = [8, 8], strides = [1, 1]} : vector<8x16xf32> to vector<8x8xf32>
    %39 = vector.shape_cast %38 : vector<8x8xf32> to vector<1x8x8xf32>
    %40 = vector.extract_strided_slice %31 {offsets = [0, 8], sizes = [8, 8], strides = [1, 1]} : vector<8x16xf32> to vector<8x8xf32>
    %41 = vector.shape_cast %40 : vector<8x8xf32> to vector<1x8x8xf32>
    %42 = vector.broadcast %35 : vector<1x8x8xf32> to vector<4x8x8xf32>
    %43 = arith.mulf %32, %42 : vector<4x8x8xf32>
    %44 = vector.broadcast %39 : vector<1x8x8xf32> to vector<4x8x8xf32>
    %45 = arith.mulf %33, %44 : vector<4x8x8xf32>
    %46 = arith.subf %43, %45 : vector<4x8x8xf32>
    %47 = vector.broadcast %37 : vector<1x8x8xf32> to vector<4x8x8xf32>
    %48 = arith.mulf %33, %47 : vector<4x8x8xf32>
    %49 = vector.broadcast %41 : vector<1x8x8xf32> to vector<4x8x8xf32>
    %50 = arith.mulf %32, %49 : vector<4x8x8xf32>
    %51 = arith.addf %48, %50 : vector<4x8x8xf32>
    %52 = tpu.concatenate %46, %51 in 2 : vector<4x8x8xf32>, vector<4x8x8xf32> -> vector<4x8x16xf32>
    %53 = vector.extract_strided_slice %13 {offsets = [0, 0], sizes = [8, 16], strides = [1, 1]} : vector<8x64xf32> to vector<8x16xf32>
    %54 = vector.extract_strided_slice %13 {offsets = [0, 16], sizes = [8, 16], strides = [1, 1]} : vector<8x64xf32> to vector<8x16xf32>
    %55 = vector.extract_strided_slice %13 {offsets = [0, 32], sizes = [8, 16], strides = [1, 1]} : vector<8x64xf32> to vector<8x16xf32>
    %56 = vector.extract_strided_slice %13 {offsets = [0, 48], sizes = [8, 16], strides = [1, 1]} : vector<8x64xf32> to vector<8x16xf32>
    %57 = vector.shape_cast %53 : vector<8x16xf32> to vector<1x8x16xf32>
    %58 = vector.shape_cast %54 : vector<8x16xf32> to vector<1x8x16xf32>
    %59 = vector.shape_cast %55 : vector<8x16xf32> to vector<1x8x16xf32>
    %60 = vector.shape_cast %56 : vector<8x16xf32> to vector<1x8x16xf32>
    %61 = tpu.concatenate %57, %58, %59, %60 in 0 : vector<1x8x16xf32>, vector<1x8x16xf32>, vector<1x8x16xf32>, vector<1x8x16xf32> -> vector<4x8x16xf32>
    %c0_25 = arith.constant 0 : index
    %c0_26 = arith.constant 0 : index
    %c0_27 = arith.constant 0 : index
    %62 = vector.load %arg6[%c0_25, %c0_26, %c0_27] : memref<1x8x16xf32, #tpu.memory_space<vmem>>, vector<1x8x16xf32>
    %63 = vector.shape_cast %62 : vector<1x8x16xf32> to vector<8x16xf32>
    %c0_28 = arith.constant 0 : index
    %c0_29 = arith.constant 0 : index
    %c0_30 = arith.constant 0 : index
    %64 = vector.load %arg7[%c0_28, %c0_29, %c0_30] : memref<1x8x16xf32, #tpu.memory_space<vmem>>, vector<1x8x16xf32>
    %65 = vector.shape_cast %64 : vector<1x8x16xf32> to vector<8x16xf32>
    %66 = vector.extract_strided_slice %61 {offsets = [0, 0, 0], sizes = [4, 8, 8], strides = [1, 1, 1]} : vector<4x8x16xf32> to vector<4x8x8xf32>
    %67 = vector.extract_strided_slice %61 {offsets = [0, 0, 8], sizes = [4, 8, 8], strides = [1, 1, 1]} : vector<4x8x16xf32> to vector<4x8x8xf32>
    %68 = vector.extract_strided_slice %63 {offsets = [0, 0], sizes = [8, 8], strides = [1, 1]} : vector<8x16xf32> to vector<8x8xf32>
    %69 = vector.shape_cast %68 : vector<8x8xf32> to vector<1x8x8xf32>
    %70 = vector.extract_strided_slice %63 {offsets = [0, 8], sizes = [8, 8], strides = [1, 1]} : vector<8x16xf32> to vector<8x8xf32>
    %71 = vector.shape_cast %70 : vector<8x8xf32> to vector<1x8x8xf32>
    %72 = vector.extract_strided_slice %65 {offsets = [0, 0], sizes = [8, 8], strides = [1, 1]} : vector<8x16xf32> to vector<8x8xf32>
    %73 = vector.shape_cast %72 : vector<8x8xf32> to vector<1x8x8xf32>
    %74 = vector.extract_strided_slice %65 {offsets = [0, 8], sizes = [8, 8], strides = [1, 1]} : vector<8x16xf32> to vector<8x8xf32>
    %75 = vector.shape_cast %74 : vector<8x8xf32> to vector<1x8x8xf32>
    %76 = vector.broadcast %69 : vector<1x8x8xf32> to vector<4x8x8xf32>
    %77 = arith.mulf %66, %76 : vector<4x8x8xf32>
    %78 = vector.broadcast %73 : vector<1x8x8xf32> to vector<4x8x8xf32>
    %79 = arith.mulf %67, %78 : vector<4x8x8xf32>
    %80 = arith.subf %77, %79 : vector<4x8x8xf32>
    %81 = vector.broadcast %71 : vector<1x8x8xf32> to vector<4x8x8xf32>
    %82 = arith.mulf %67, %81 : vector<4x8x8xf32>
    %83 = vector.broadcast %75 : vector<1x8x8xf32> to vector<4x8x8xf32>
    %84 = arith.mulf %66, %83 : vector<4x8x8xf32>
    %85 = arith.addf %82, %84 : vector<4x8x8xf32>
    %86 = tpu.concatenate %80, %85 in 2 : vector<4x8x8xf32>, vector<4x8x8xf32> -> vector<4x8x16xf32>
    %87 = vector.extract_strided_slice %18 {offsets = [0, 0], sizes = [8, 16], strides = [1, 1]} : vector<8x64xf32> to vector<8x16xf32>
    %88 = vector.extract_strided_slice %18 {offsets = [0, 16], sizes = [8, 16], strides = [1, 1]} : vector<8x64xf32> to vector<8x16xf32>
    %89 = vector.extract_strided_slice %18 {offsets = [0, 32], sizes = [8, 16], strides = [1, 1]} : vector<8x64xf32> to vector<8x16xf32>
    %90 = vector.extract_strided_slice %18 {offsets = [0, 48], sizes = [8, 16], strides = [1, 1]} : vector<8x64xf32> to vector<8x16xf32>
    %91 = vector.shape_cast %87 : vector<8x16xf32> to vector<1x8x16xf32>
    %92 = vector.shape_cast %88 : vector<8x16xf32> to vector<1x8x16xf32>
    %93 = vector.shape_cast %89 : vector<8x16xf32> to vector<1x8x16xf32>
    %94 = vector.shape_cast %90 : vector<8x16xf32> to vector<1x8x16xf32>
    %95 = tpu.concatenate %91, %92, %93, %94 in 0 : vector<1x8x16xf32>, vector<1x8x16xf32>, vector<1x8x16xf32>, vector<1x8x16xf32> -> vector<4x8x16xf32>
    "tpu.trace_start"() <{level = 10 : i32, message = "hqc,hkc->hqk"}> : () -> ()
    %cst_31 = arith.constant dense<0.000000e+00> : vector<4x8x8xf32>
    %96 = tpu.matmul %52, %86, %cst_31 {dimension_numbers = #tpu.dot_dimension_numbers<[2], [2], [1], [1], [0, 0, 0, 1, 1, 1], [0], [0]>} : vector<4x8x16xf32>, vector<4x8x16xf32>, vector<4x8x8xf32> -> vector<4x8x8xf32>
    "tpu.trace_stop"() : () -> ()
    %cst_32 = arith.constant 2.500000e-01 : f32
    %97 = vector.broadcast %cst_32 : f32 to vector<4x8x8xf32>
    %98 = arith.mulf %96, %97 : vector<4x8x8xf32>
    %cst_33 = arith.constant dense<0xFF800000> : vector<4x8xf32>
    %99 = vector.multi_reduction <maximumf>, %98, %cst_33 [2] : vector<4x8x8xf32> to vector<4x8xf32>
    %100 = vector.shape_cast %99 : vector<4x8xf32> to vector<4x8x1xf32>
    %101 = vector.broadcast %100 : vector<4x8x1xf32> to vector<4x8x8xf32>
    %102 = arith.subf %98, %101 : vector<4x8x8xf32>
    %103 = math.exp %102 : vector<4x8x8xf32>
    %cst_34 = arith.constant dense<0.000000e+00> : vector<4x8xf32>
    %104 = vector.multi_reduction <add>, %103, %cst_34 [2] : vector<4x8x8xf32> to vector<4x8xf32>
    %105 = vector.shape_cast %104 : vector<4x8xf32> to vector<4x8x1xf32>
    %106 = vector.broadcast %105 : vector<4x8x1xf32> to vector<4x8x8xf32>
    %107 = arith.divf %103, %106 : vector<4x8x8xf32>
    "tpu.trace_start"() <{level = 10 : i32, message = "hqk,hkc->hqc"}> : () -> ()
    %cst_35 = arith.constant dense<0.000000e+00> : vector<4x8x16xf32>
    %108 = tpu.matmul %107, %95, %cst_35 {dimension_numbers = #tpu.dot_dimension_numbers<[2], [1], [1], [2], [0, 0, 0, 1, 1, 2], [0], [0]>} : vector<4x8x8xf32>, vector<4x8x16xf32>, vector<4x8x16xf32> -> vector<4x8x16xf32>
    "tpu.trace_stop"() : () -> ()
    %109 = vector.extract_strided_slice %108 {offsets = [0, 0, 0], sizes = [1, 8, 16], strides = [1, 1, 1]} : vector<4x8x16xf32> to vector<1x8x16xf32>
    %110 = vector.shape_cast %109 : vector<1x8x16xf32> to vector<8x16xf32>
    %111 = vector.extract_strided_slice %108 {offsets = [1, 0, 0], sizes = [1, 8, 16], strides = [1, 1, 1]} : vector<4x8x16xf32> to vector<1x8x16xf32>
    %112 = vector.shape_cast %111 : vector<1x8x16xf32> to vector<8x16xf32>
    %113 = vector.extract_strided_slice %108 {offsets = [2, 0, 0], sizes = [1, 8, 16], strides = [1, 1, 1]} : vector<4x8x16xf32> to vector<1x8x16xf32>
    %114 = vector.shape_cast %113 : vector<1x8x16xf32> to vector<8x16xf32>
    %115 = vector.extract_strided_slice %108 {offsets = [3, 0, 0], sizes = [1, 8, 16], strides = [1, 1, 1]} : vector<4x8x16xf32> to vector<1x8x16xf32>
    %116 = vector.shape_cast %115 : vector<1x8x16xf32> to vector<8x16xf32>
    %117 = tpu.concatenate %110, %112, %114, %116 in 1 : vector<8x16xf32>, vector<8x16xf32>, vector<8x16xf32>, vector<8x16xf32> -> vector<8x64xf32>
    %c0_36 = arith.constant 0 : index
    %c0_37 = arith.constant 0 : index
    %118 = vector.load %arg14[%c0_36, %c0_37] : memref<64x64xf32, #tpu.memory_space<vmem>>, vector<64x64xf32>
    %cst_38 = arith.constant dense<0.000000e+00> : vector<8x64xf32>
    %119 = tpu.matmul %117, %118, %cst_38 {dimension_numbers = #tpu.dot_dimension_numbers<[1], [0], [0], [1], [0, 0, 1, 1], [], []>} : vector<8x64xf32>, vector<64x64xf32>, vector<8x64xf32> -> vector<8x64xf32>
    %c0_39 = arith.constant 0 : index
    %c0_40 = arith.constant 0 : index
    %120 = vector.load %arg15[%c0_39, %c0_40] : memref<1x64xf32, #tpu.memory_space<vmem>>, vector<1x64xf32>
    %121 = vector.broadcast %120 : vector<1x64xf32> to vector<8x64xf32>
    %122 = arith.addf %119, %121 : vector<8x64xf32>
    %c0_41 = arith.constant 0 : index
    %c0_42 = arith.constant 0 : index
    %123 = vector.load %arg16[%c0_41, %c0_42] : memref<64x128xf32, #tpu.memory_space<vmem>>, vector<64x128xf32>
    %c0_43 = arith.constant 0 : index
    %c0_44 = arith.constant 0 : index
    %124 = vector.load %arg17[%c0_43, %c0_44] : memref<64x128xf32, #tpu.memory_space<vmem>>, vector<64x128xf32>
    %c0_45 = arith.constant 0 : index
    %c0_46 = arith.constant 0 : index
    %125 = vector.load %arg18[%c0_45, %c0_46] : memref<1x128xf32, #tpu.memory_space<vmem>>, vector<1x128xf32>
    %c0_47 = arith.constant 0 : index
    %c0_48 = arith.constant 0 : index
    %126 = vector.load %arg19[%c0_47, %c0_48] : memref<1x128xf32, #tpu.memory_space<vmem>>, vector<1x128xf32>
    %c0_49 = arith.constant 0 : index
    %c0_50 = arith.constant 0 : index
    %127 = vector.load %arg20[%c0_49, %c0_50] : memref<1x128xf32, #tpu.memory_space<vmem>>, vector<1x128xf32>
    %c0_51 = arith.constant 0 : index
    %c0_52 = arith.constant 0 : index
    %128 = vector.load %arg21[%c0_51, %c0_52] : memref<128x64xf32, #tpu.memory_space<vmem>>, vector<128x64xf32>
    %c0_53 = arith.constant 0 : index
    %c0_54 = arith.constant 0 : index
    %129 = vector.load %arg22[%c0_53, %c0_54] : memref<1x64xf32, #tpu.memory_space<vmem>>, vector<1x64xf32>
    %cst_55 = arith.constant dense<0.000000e+00> : vector<8x128xf32>
    %130 = tpu.matmul %1, %123, %cst_55 {dimension_numbers = #tpu.dot_dimension_numbers<[1], [0], [0], [1], [0, 0, 1, 1], [], []>} : vector<8x64xf32>, vector<64x128xf32>, vector<8x128xf32> -> vector<8x128xf32>
    %cst_56 = arith.constant dense<0.000000e+00> : vector<8x128xf32>
    %131 = tpu.matmul %122, %124, %cst_56 {dimension_numbers = #tpu.dot_dimension_numbers<[1], [0], [0], [1], [0, 0, 1, 1], [], []>} : vector<8x64xf32>, vector<64x128xf32>, vector<8x128xf32> -> vector<8x128xf32>
    %132 = arith.addf %130, %131 : vector<8x128xf32>
    %133 = vector.broadcast %125 : vector<1x128xf32> to vector<8x128xf32>
    %134 = arith.addf %132, %133 : vector<8x128xf32>
    %cst_57 = arith.constant dense<0.000000e+00> : vector<8xf32>
    %135 = vector.multi_reduction <add>, %134, %cst_57 [1] : vector<8x128xf32> to vector<8xf32>
    %136 = vector.shape_cast %135 : vector<8xf32> to vector<8x1xf32>
    %cst_58 = arith.constant 1.280000e+02 : f32
    %137 = vector.broadcast %cst_58 : f32 to vector<8x1xf32>
    %138 = arith.divf %136, %137 : vector<8x1xf32>
    %139 = vector.broadcast %138 : vector<8x1xf32> to vector<8x128xf32>
    %140 = arith.subf %134, %139 : vector<8x128xf32>
    %141 = arith.mulf %140, %140 : vector<8x128xf32>
    %cst_59 = arith.constant dense<0.000000e+00> : vector<8xf32>
    %142 = vector.multi_reduction <add>, %141, %cst_59 [1] : vector<8x128xf32> to vector<8xf32>
    %143 = vector.shape_cast %142 : vector<8xf32> to vector<8x1xf32>
    %cst_60 = arith.constant 1.280000e+02 : f32
    %144 = vector.broadcast %cst_60 : f32 to vector<8x1xf32>
    %145 = arith.divf %143, %144 : vector<8x1xf32>
    %146 = vector.broadcast %138 : vector<8x1xf32> to vector<8x128xf32>
    %147 = arith.subf %134, %146 : vector<8x128xf32>
    %cst_61 = arith.constant 9.99999974E-6 : f32
    %148 = vector.broadcast %cst_61 : f32 to vector<8x1xf32>
    %149 = arith.addf %145, %148 : vector<8x1xf32>
    %150 = math.rsqrt %149 : vector<8x1xf32>
    %151 = vector.broadcast %150 : vector<8x1xf32> to vector<8x128xf32>
    %152 = arith.mulf %147, %151 : vector<8x128xf32>
    %153 = vector.broadcast %126 : vector<1x128xf32> to vector<8x128xf32>
    %154 = arith.mulf %152, %153 : vector<8x128xf32>
    %155 = vector.broadcast %127 : vector<1x128xf32> to vector<8x128xf32>
    %156 = arith.addf %154, %155 : vector<8x128xf32>
    %cst_62 = arith.constant 5.000000e-01 : f32
    %157 = vector.broadcast %cst_62 : f32 to vector<8x128xf32>
    %158 = arith.mulf %157, %156 : vector<8x128xf32>
    %cst_63 = arith.constant 0.707106769 : f32
    %159 = vector.broadcast %cst_63 : f32 to vector<8x128xf32>
    %160 = arith.mulf %156, %159 : vector<8x128xf32>
    %cst_64 = arith.constant 0.000000e+00 : f32
    %161 = vector.broadcast %cst_64 : f32 to vector<8x128xf32>
    %162 = arith.cmpf olt, %160, %161 : vector<8x128xf32>
    %cst_65 = arith.constant -1.000000e+00 : f32
    %cst_66 = arith.constant 1.000000e+00 : f32
    %163 = vector.broadcast %cst_65 : f32 to vector<8x128xf32>
    %164 = vector.broadcast %cst_66 : f32 to vector<8x128xf32>
    %165 = arith.select %162, %163, %164 : vector<8x128xi1>, vector<8x128xf32>
    %166 = math.absf %160 : vector<8x128xf32>
    %cst_67 = arith.constant 0.327591091 : f32
    %167 = vector.broadcast %cst_67 : f32 to vector<8x128xf32>
    %168 = arith.mulf %167, %166 : vector<8x128xf32>
    %cst_68 = arith.constant 1.000000e+00 : f32
    %169 = vector.broadcast %cst_68 : f32 to vector<8x128xf32>
    %170 = arith.addf %169, %168 : vector<8x128xf32>
    %cst_69 = arith.constant 1.000000e+00 : f32
    %171 = vector.broadcast %cst_69 : f32 to vector<8x128xf32>
    %172 = arith.divf %171, %170 : vector<8x128xf32>
    %cst_70 = arith.constant 1.06140542 : f32
    %173 = vector.broadcast %cst_70 : f32 to vector<8x128xf32>
    %174 = arith.mulf %173, %172 : vector<8x128xf32>
    %cst_71 = arith.constant -1.45315206 : f32
    %175 = vector.broadcast %cst_71 : f32 to vector<8x128xf32>
    %176 = arith.addf %174, %175 : vector<8x128xf32>
    %177 = arith.mulf %176, %172 : vector<8x128xf32>
    %cst_72 = arith.constant 1.42141378 : f32
    %178 = vector.broadcast %cst_72 : f32 to vector<8x128xf32>
    %179 = arith.addf %177, %178 : vector<8x128xf32>
    %180 = arith.mulf %179, %172 : vector<8x128xf32>
    %cst_73 = arith.constant -0.284496725 : f32
    %181 = vector.broadcast %cst_73 : f32 to vector<8x128xf32>
    %182 = arith.addf %180, %181 : vector<8x128xf32>
    %183 = arith.mulf %182, %172 : vector<8x128xf32>
    %cst_74 = arith.constant 0.254829586 : f32
    %184 = vector.broadcast %cst_74 : f32 to vector<8x128xf32>
    %185 = arith.addf %183, %184 : vector<8x128xf32>
    %186 = arith.mulf %185, %172 : vector<8x128xf32>
    %cst_75 = arith.constant 0.000000e+00 : f32
    %187 = vector.broadcast %cst_75 : f32 to vector<8x128xf32>
    %188 = arith.subf %187, %166 : vector<8x128xf32>
    %189 = arith.mulf %188, %166 : vector<8x128xf32>
    %190 = math.exp %189 : vector<8x128xf32>
    %191 = arith.mulf %186, %190 : vector<8x128xf32>
    %cst_76 = arith.constant 1.000000e+00 : f32
    %192 = vector.broadcast %cst_76 : f32 to vector<8x128xf32>
    %193 = arith.subf %192, %191 : vector<8x128xf32>
    %194 = arith.mulf %165, %193 : vector<8x128xf32>
    %cst_77 = arith.constant 1.000000e+00 : f32
    %195 = vector.broadcast %cst_77 : f32 to vector<8x128xf32>
    %196 = arith.addf %195, %194 : vector<8x128xf32>
    %197 = arith.mulf %158, %196 : vector<8x128xf32>
    %cst_78 = arith.constant dense<0.000000e+00> : vector<8x64xf32>
    %198 = tpu.matmul %197, %128, %cst_78 {dimension_numbers = #tpu.dot_dimension_numbers<[1], [0], [0], [1], [0, 0, 1, 1], [], []>} : vector<8x128xf32>, vector<128x64xf32>, vector<8x64xf32> -> vector<8x64xf32>
    %199 = vector.broadcast %129 : vector<1x64xf32> to vector<8x64xf32>
    %200 = arith.addf %198, %199 : vector<8x64xf32>
    %201 = arith.addf %1, %200 : vector<8x64xf32>
    %c0_79 = arith.constant 0 : index
    %c0_80 = arith.constant 0 : index
    %c0_81 = arith.constant 0 : index
    %202 = vector.load %arg23[%c0_79, %c0_80, %c0_81] : memref<1x8x64xf32, #tpu.memory_space<vmem>>, vector<1x8x64xf32>
    %203 = vector.shape_cast %202 : vector<1x8x64xf32> to vector<8x64xf32>
    %204 = vector.shape_cast %201 : vector<8x64xf32> to vector<1x8x64xf32>
    tpu.vector_store %arg23[%c0_79, %c0_80, %c0_81], %204 {strides = array<i32>} : memref<1x8x64xf32, #tpu.memory_space<vmem>>, vector<1x8x64xf32>,
    return
  }
  func.func @transform_0(%arg0: i32, %arg1: i32) -> (i32, i32, i32) {
    %c0_i32 = arith.constant 0 : i32
    %c0_i32_0 = arith.constant 0 : i32
    return %arg0, %arg1, %c0_i32 : i32, i32, i32
  }
  func.func @transform_1(%arg0: i32, %arg1: i32) -> (i32, i32, i32) {
    %c0_i32 = arith.constant 0 : i32
    %c0_i32_0 = arith.constant 0 : i32
    %c0_i32_1 = arith.constant 0 : i32
    return %arg0, %c0_i32, %c0_i32_0 : i32, i32, i32
  }
  func.func @transform_2(%arg0: i32, %arg1: i32) -> (i32, i32, i32) {
    %c0_i32 = arith.constant 0 : i32
    %c0_i32_0 = arith.constant 0 : i32
    return %arg0, %arg1, %c0_i32 : i32, i32, i32
  }
  func.func @transform_3(%arg0: i32, %arg1: i32) -> (i32, i32, i32) {
    %c0_i32 = arith.constant 0 : i32
    %c0_i32_0 = arith.constant 0 : i32
    return %arg0, %arg1, %c0_i32 : i32, i32, i32
  }
  func.func @transform_4(%arg0: i32, %arg1: i32) -> (i32, i32, i32) {
    %c0_i32 = arith.constant 0 : i32
    %c0_i32_0 = arith.constant 0 : i32
    %c0_i32_1 = arith.constant 0 : i32
    return %arg0, %c0_i32, %c0_i32_0 : i32, i32, i32
  }
  func.func @transform_5(%arg0: i32, %arg1: i32) -> (i32, i32, i32) {
    %c0_i32 = arith.constant 0 : i32
    %c0_i32_0 = arith.constant 0 : i32
    %c0_i32_1 = arith.constant 0 : i32
    return %arg0, %c0_i32, %c0_i32_0 : i32, i32, i32
  }
  func.func @transform_6(%arg0: i32, %arg1: i32) -> (i32, i32) {
    %c0_i32 = arith.constant 0 : i32
    %c0_i32_0 = arith.constant 0 : i32
    %c0_i32_1 = arith.constant 0 : i32
    return %c0_i32, %c0_i32_0 : i32, i32
  }
  func.func @transform_7(%arg0: i32, %arg1: i32) -> (i32, i32) {
    %c0_i32 = arith.constant 0 : i32
    %c0_i32_0 = arith.constant 0 : i32
    %c0_i32_1 = arith.constant 0 : i32
    return %c0_i32, %c0_i32_0 : i32, i32
  }
  func.func @transform_8(%arg0: i32, %arg1: i32) -> (i32, i32) {
    %c0_i32 = arith.constant 0 : i32
    %c0_i32_0 = arith.constant 0 : i32
    %c0_i32_1 = arith.constant 0 : i32
    return %c0_i32, %c0_i32_0 : i32, i32
  }
  func.func @transform_9(%arg0: i32, %arg1: i32) -> (i32, i32) {
    %c0_i32 = arith.constant 0 : i32
    %c0_i32_0 = arith.constant 0 : i32
    %c0_i32_1 = arith.constant 0 : i32
    return %c0_i32, %c0_i32_0 : i32, i32
  }
  func.func @transform_10(%arg0: i32, %arg1: i32) -> (i32, i32) {
    %c0_i32 = arith.constant 0 : i32
    %c0_i32_0 = arith.constant 0 : i32
    %c0_i32_1 = arith.constant 0 : i32
    return %c0_i32, %c0_i32_0 : i32, i32
  }
  func.func @transform_11(%arg0: i32, %arg1: i32) -> (i32, i32) {
    %c0_i32 = arith.constant 0 : i32
    %c0_i32_0 = arith.constant 0 : i32
    %c0_i32_1 = arith.constant 0 : i32
    return %c0_i32, %c0_i32_0 : i32, i32
  }
  func.func @transform_12(%arg0: i32, %arg1: i32) -> (i32, i32) {
    %c0_i32 = arith.constant 0 : i32
    %c0_i32_0 = arith.constant 0 : i32
    %c0_i32_1 = arith.constant 0 : i32
    return %c0_i32, %c0_i32_0 : i32, i32
  }
  func.func @transform_13(%arg0: i32, %arg1: i32) -> (i32, i32) {
    %c0_i32 = arith.constant 0 : i32
    %c0_i32_0 = arith.constant 0 : i32
    %c0_i32_1 = arith.constant 0 : i32
    return %c0_i32, %c0_i32_0 : i32, i32
  }
  func.func @transform_14(%arg0: i32, %arg1: i32) -> (i32, i32) {
    %c0_i32 = arith.constant 0 : i32
    %c0_i32_0 = arith.constant 0 : i32
    %c0_i32_1 = arith.constant 0 : i32
    return %c0_i32, %c0_i32_0 : i32, i32
  }
  func.func @transform_15(%arg0: i32, %arg1: i32) -> (i32, i32) {
    %c0_i32 = arith.constant 0 : i32
    %c0_i32_0 = arith.constant 0 : i32
    %c0_i32_1 = arith.constant 0 : i32
    return %c0_i32, %c0_i32_0 : i32, i32
  }
  func.func @transform_16(%arg0: i32, %arg1: i32) -> (i32, i32) {
    %c0_i32 = arith.constant 0 : i32
    %c0_i32_0 = arith.constant 0 : i32
    %c0_i32_1 = arith.constant 0 : i32
    return %c0_i32, %c0_i32_0 : i32, i32
  }
  func.func @transform_17(%arg0: i32, %arg1: i32) -> (i32, i32) {
    %c0_i32 = arith.constant 0 : i32
    %c0_i32_0 = arith.constant 0 : i32
    %c0_i32_1 = arith.constant 0 : i32
    return %c0_i32, %c0_i32_0 : i32, i32
  }
  func.func @transform_18(%arg0: i32, %arg1: i32) -> (i32, i32) {
    %c0_i32 = arith.constant 0 : i32
    %c0_i32_0 = arith.constant 0 : i32
    %c0_i32_1 = arith.constant 0 : i32
    return %c0_i32, %c0_i32_0 : i32, i32
  }
  func.func @transform_19(%arg0: i32, %arg1: i32) -> (i32, i32) {
    %c0_i32 = arith.constant 0 : i32
    %c0_i32_0 = arith.constant 0 : i32
    %c0_i32_1 = arith.constant 0 : i32
    return %c0_i32, %c0_i32_0 : i32, i32
  }
  func.func @transform_20(%arg0: i32, %arg1: i32) -> (i32, i32) {
    %c0_i32 = arith.constant 0 : i32
    %c0_i32_0 = arith.constant 0 : i32
    %c0_i32_1 = arith.constant 0 : i32
    return %c0_i32, %c0_i32_0 : i32, i32
  }
  func.func @transform_21(%arg0: i32, %arg1: i32) -> (i32, i32, i32) {
    %c0_i32 = arith.constant 0 : i32
    %c0_i32_0 = arith.constant 0 : i32
    return %arg0, %arg1, %c0_i32 : i32, i32, i32
  }
}

</mosaic_0001>

<llo_original>
// kernel: tpu_custom_call.1
$region0: #{tpu_custom_call.1}
  #allocation0 [shape = 'u32[]', space=smem, size = 0x4, offset = 0x4, fixed_abs, tag = 'smem constant byte address 0x4 - core index']
  #allocation1 [shape = 'u32[144,128]{1,0:T(1,128)}', space=vmem, size = 0x12000, scoped, tag = 'internal scratch']
  %s0 = inlined_call_operand.hbm [shape: f32[2,8,64], index: 0, kind: input, shape index: {}]
  %s1 = inlined_call_operand.hbm [shape: f32[2,8,64], index: 1, kind: input, shape index: {}]
  %s2 = inlined_call_operand.hbm [shape: f32[2,8,16], index: 2, kind: input, shape index: {}]
  %s3 = inlined_call_operand.hbm [shape: f32[2,8,16], index: 3, kind: input, shape index: {}]
  %s4 = inlined_call_operand.hbm [shape: f32[2,8,16], index: 4, kind: input, shape index: {}]
  %s5 = inlined_call_operand.hbm [shape: f32[2,8,16], index: 5, kind: input, shape index: {}]
  %s6 = inlined_call_operand.hbm [shape: f32[64,64], index: 6, kind: input, shape index: {}]
  %s7 = inlined_call_operand.hbm [shape: f32[1,64], index: 7, kind: input, shape index: {}]
  %s8 = inlined_call_operand.hbm [shape: f32[64,64], index: 8, kind: input, shape index: {}]
  %s9 = inlined_call_operand.hbm [shape: f32[1,64], index: 9, kind: input, shape index: {}]
  %s10 = inlined_call_operand.hbm [shape: f32[64,64], index: 10, kind: input, shape index: {}]
  %s11 = inlined_call_operand.hbm [shape: f32[1,64], index: 11, kind: input, shape index: {}]
  %s12 = inlined_call_operand.hbm [shape: f32[64,64], index: 12, kind: input, shape index: {}]
  %s13 = inlined_call_operand.hbm [shape: f32[1,64], index: 13, kind: input, shape index: {}]
  %s14 = inlined_call_operand.hbm [shape: f32[64,128], index: 14, kind: input, shape index: {}]
  %s15 = inlined_call_operand.hbm [shape: f32[64,128], index: 15, kind: input, shape index: {}]
  %s16 = inlined_call_operand.hbm [shape: f32[1,128], index: 16, kind: input, shape index: {}]
  %s17 = inlined_call_operand.hbm [shape: f32[1,128], index: 17, kind: input, shape index: {}]
  %s18 = inlined_call_operand.hbm [shape: f32[1,128], index: 18, kind: input, shape index: {}]
  %s19 = inlined_call_operand.hbm [shape: f32[128,64], index: 19, kind: input, shape index: {}]
  %s20 = inlined_call_operand.hbm [shape: f32[1,64], index: 20, kind: input, shape index: {}]
  %s21 = inlined_call_operand.hbm [shape: f32[2,8,64], index: 21, kind: output, shape index: {}]
  %s22 = sld [smem:[#allocation0]]
  $region201: #{tpu_custom_call.1} parent=0
    _
  %s24 = ssub.s32 1, %s22
  %s25 = scalar_select 0, %s24, %s22
  $region1: #{tpu_custom_call.1} parent=0
    #allocation2 [shape = 'u8[8192]{0}', space=vmem, size = 0x2000, scoped, tag = 'input window, operand 0']
    #allocation3 [shape = 's32[2]{0}', space=sflag, size = 0x8, scoped, tag = 'scoped memory for tpu_custom_call.1']
    #allocation4 [shape = 's32[2]{0}', space=sflag, size = 0x8, scoped, tag = 'scoped memory for tpu_custom_call.1']
    #allocation5 [shape = 'u8[8192]{0}', space=vmem, size = 0x2000, scoped, tag = 'input window, operand 1']
    #allocation6 [shape = 's32[2]{0}', space=sflag, size = 0x8, scoped, tag = 'scoped memory for tpu_custom_call.1']
    #allocation7 [shape = 'u8[8192]{0}', space=vmem, size = 0x2000, scoped, tag = 'input window, operand 2']
    #allocation8 [shape = 'u8[8192]{0}', space=vmem, size = 0x2000, scoped, tag = 'input window, operand 3']
    #allocation9 [shape = 's32[2]{0}', space=sflag, size = 0x8, scoped, tag = 'scoped memory for tpu_custom_call.1']
    #allocation10 [shape = 'u8[8192]{0}', space=vmem, size = 0x2000, scoped, tag = 'input window, operand 4']
    #allocation11 [shape = 'u8[8192]{0}', space=vmem, size = 0x2000, scoped, tag = 'input window, operand 5']
    #allocation12 [shape = 's32[2]{0}', space=sflag, size = 0x8, scoped, tag = 'scoped memory for tpu_custom_call.1']
    #allocation13 [shape = 'u8[32768]{0}', space=vmem, size = 0x8000, scoped, tag = 'input window, operand 6, single buffered']
    #allocation14 [shape = 'u8[512]{0}', space=vmem, size = 0x400, scoped, tag = 'input window, operand 7, single buffered']
    #allocation15 [shape = 's32[1]{0}', space=sflag, size = 0x4, scoped, tag = 'scoped memory for tpu_custom_call.1']
    #allocation16 [shape = 'u8[32768]{0}', space=vmem, size = 0x8000, scoped, tag = 'input window, operand 8, single buffered']
    #allocation17 [shape = 'u8[512]{0}', space=vmem, size = 0x400, scoped, tag = 'input window, operand 9, single buffered']
    #allocation18 [shape = 's32[1]{0}', space=sflag, size = 0x4, scoped, tag = 'scoped memory for tpu_custom_call.1']
    #allocation19 [shape = 'u8[32768]{0}', space=vmem, size = 0x8000, scoped, tag = 'input window, operand 10, single buffered']
    #allocation20 [shape = 'u8[512]{0}', space=vmem, size = 0x400, scoped, tag = 'input window, operand 11, single buffered']
    #allocation21 [shape = 's32[1]{0}', space=sflag, size = 0x4, scoped, tag = 'scoped memory for tpu_custom_call.1']
    #allocation22 [shape = 'u8[32768]{0}', space=vmem, size = 0x8000, scoped, tag = 'input window, operand 12, single buffered']
    #allocation23 [shape = 'u8[512]{0}', space=vmem, size = 0x400, scoped, tag = 'input window, operand 13, single buffered']
    #allocation24 [shape = 's32[1]{0}', space=sflag, size = 0x4, scoped, tag = 'scoped memory for tpu_custom_call.1']
    #allocation25 [shape = 'u8[32768]{0}', space=vmem, size = 0x8000, scoped, tag = 'input window, operand 14, single buffered']
    #allocation26 [shape = 'u8[32768]{0}', space=vmem, size = 0x8000, scoped, tag = 'input window, operand 15, single buffered']
    #allocation27 [shape = 's32[1]{0}', space=sflag, size = 0x4, scoped, tag = 'scoped memory for tpu_custom_call.1']
    #allocation28 [shape = 'u8[512]{0}', space=vmem, size = 0x400, scoped, tag = 'input window, operand 16, single buffered']
    #allocation29 [shape = 'u8[512]{0}', space=vmem, size = 0x400, scoped, tag = 'input window, operand 17, single buffered']
    #allocation30 [shape = 's32[1]{0}', space=sflag, size = 0x4, scoped, tag = 'scoped memory for tpu_custom_call.1']
    #allocation31 [shape = 'u8[512]{0}', space=vmem, size = 0x400, scoped, tag = 'input window, operand 18, single buffered']
    #allocation32 [shape = 'u8[65536]{0}', space=vmem, size = 0x10000, scoped, tag = 'input window, operand 19, single buffered']
    #allocation33 [shape = 's32[1]{0}', space=sflag, size = 0x4, scoped, tag = 'scoped memory for tpu_custom_call.1']
    #allocation34 [shape = 'u8[512]{0}', space=vmem, size = 0x400, scoped, tag = 'input window, operand 20, single buffered']
    #allocation35 [shape = 'u8[8192]{0}', space=vmem, size = 0x2000, scoped, tag = 'output window, operand 0']
    %26 = vsyncpa [#allocation3], 0
    %s27 = scalar_lea.sflag [#allocation3], 1
    %28 = vsyncpa %s27, 0
    %29 = vsyncpa [#allocation6], 0
    %s30 = scalar_lea.sflag [#allocation6], 1
    %31 = vsyncpa %s30, 0
    %32 = vsyncpa [#allocation9], 0
    %s33 = scalar_lea.sflag [#allocation9], 1
    %34 = vsyncpa %s33, 0
    %35 = vsyncpa [#allocation12], 0
    %s36 = scalar_lea.sflag [#allocation12], 1
    %37 = vsyncpa %s36, 0
    %38 = vsyncpa [#allocation15], 0
    %39 = vsyncpa [#allocation18], 0
    %40 = vsyncpa [#allocation21], 0
    %41 = vsyncpa [#allocation24], 0
    %42 = vsyncpa [#allocation27], 0
    %43 = vsyncpa [#allocation30], 0
    %44 = vsyncpa [#allocation33], 0
    %45 = vsyncpa [#allocation4], 0
    %s46 = scalar_lea.sflag [#allocation4], 1
    %47 = vsyncpa %s46, 0
    loop: start=0, step=1, limit=4
    $region2: #{tpu_custom_call.1} parent=1 // loop_pre_header
      _
    $region3: #{tpu_custom_call.1} parent=1 // loop_header
      %s49 = sphi 0, %s53
      %p50 = scmp.ge.s32.totalorder %s49, 4
      %s56 = sphi 0, %s68
      %s57 = sphi 0, %s64
      %s58 = sphi 0, %s56
      %s59 = sphi 0, %s57
      %s60 = sphi 0, %s58
      %s61 = sphi 0, %s59
      %s73 = sphi 0, %s75
      %s76 = sphi 0, %s73
      %s77 = sphi 0, %s76
      %s93 = sphi 0, %s77
      %s99 = sphi 0, %s101
      %s102 = sphi 0, %s99
      %s103 = sphi 0, %s102
      %s119 = sphi 0, %s103
      %s127 = sphi 0, %s129
      %s130 = sphi 0, %s127
      %s131 = sphi 0, %s130
      %s147 = sphi 0, %s131
      %s155 = sphi 0, %s157
      %s158 = sphi 0, %s155
      %s159 = sphi 0, %s158
      %s175 = sphi 0, %s159
      %s181 = sphi 0, %s183
      %s184 = sphi 0, %s181
      %s185 = sphi 0, %s184
      %s201 = sphi 0, %s185
      %s207 = sphi 0, %s209
      %s210 = sphi 0, %s207
      %s211 = sphi 0, %s210
      %s227 = sphi 0, %s211
      %s231 = sphi 0, %s231
      %s233 = sphi 0, %s231
      %s234 = sphi 0, %s233
      %s248 = sphi 0, %s234
      %s252 = sphi 0, %s252
      %s254 = sphi 0, %s252
      %s255 = sphi 0, %s254
      %s269 = sphi 0, %s255
      %s273 = sphi 0, %s273
      %s275 = sphi 0, %s273
      %s276 = sphi 0, %s275
      %s290 = sphi 0, %s276
      %s294 = sphi 0, %s294
      %s296 = sphi 0, %s294
      %s297 = sphi 0, %s296
      %s311 = sphi 0, %s297
      %s315 = sphi 0, %s315
      %s317 = sphi 0, %s315
      %s318 = sphi 0, %s317
      %s332 = sphi 0, %s318
      %s336 = sphi 0, %s336
      %s338 = sphi 0, %s336
      %s339 = sphi 0, %s338
      %s353 = sphi 0, %s339
      %s357 = sphi 0, %s357
      %s359 = sphi 0, %s357
      %s360 = sphi 0, %s359
      %s374 = sphi 0, %s360
      %s378 = sphi 0, %s378
      %s380 = sphi 0, %s378
      %s381 = sphi 0, %s380
      %s395 = sphi 0, %s381
      %s399 = sphi 0, %s399
      %s401 = sphi 0, %s399
      %s402 = sphi 0, %s401
      %s416 = sphi 0, %s402
      %s420 = sphi 0, %s420
      %s422 = sphi 0, %s420
      %s423 = sphi 0, %s422
      %s437 = sphi 0, %s423
      %s441 = sphi 0, %s441
      %s443 = sphi 0, %s441
      %s444 = sphi 0, %s443
      %s458 = sphi 0, %s444
      %s462 = sphi 0, %s462
      %s464 = sphi 0, %s462
      %s465 = sphi 0, %s464
      %s479 = sphi 0, %s465
      %s483 = sphi 0, %s483
      %s485 = sphi 0, %s483
      %s486 = sphi 0, %s485
      %s500 = sphi 0, %s486
      %s504 = sphi 0, %s504
      %s506 = sphi 0, %s504
      %s507 = sphi 0, %s506
      %s521 = sphi 0, %s507
      %s525 = sphi 0, %s525
      %s527 = sphi 0, %s525
      %s528 = sphi 0, %s527
      %s542 = sphi 0, %s528
      %s550 = sphi 0, %s552
      %s553 = sphi 0, %s550
      %s554 = sphi 0, %s553
      %s570 = sphi 0, %s554
    $region4: #{tpu_custom_call.1} parent=1 // loop_header_branch
      %52 = sbr.rel (%p50) target = $region8
    $region5: #{tpu_custom_call.1} parent=1 // loop_body
      %s54 = ssub.s32 %s49, 1
      %s55 = ssub.s32 %s49, 2
      %s62 = sadd.s32 1, %s57
      %p63 = scmp.ge.s32.totalorder %s62, 1
      %s64 = scalar_select %p63, 0, %s62
      %s65 = sadd.s32 1, %s56
      %s66 = scalar_select %p63, %s65, %s56
      %p67 = scmp.ge.s32.totalorder %s66, 2
      %s68 = scalar_select %p67, 0, %s66
      %s69 = ssub.s32 %s56, %s68
      %s70 = ssub.s32 %s57, %s64
      %s71 = sor.u32 %s69, %s70
      %p72 = scmp.eq.s32.totalorder %s71, 0
      %s74 = sadd.s32 %s73, 1
      %s75 = scalar_select %p72, %s73, %s74
      %p78 = pneg %p72
      %p79 = scmp.eq.s32.totalorder %s49, 1
      %p80 = por %p78, %p79
      %p81 = scmp.ne.s32.totalorder %s73, %s76
      %p82 = scmp.eq.s32.totalorder %s49, 0
      %p83 = por %p81, %p82
      %p84 = scmp.ne.s32.totalorder %s73, %s76
      %p85 = scmp.eq.s32.totalorder %s54, 1
      %p86 = por %p84, %p85
      %p87 = scmp.ne.s32.totalorder %s76, %s77
      %p88 = scmp.eq.s32.totalorder %s54, 0
      %p89 = por %p87, %p88
      %p90 = scmp.ne.s32.totalorder %s76, %s77
      %p91 = scmp.eq.s32.totalorder %s55, 1
      %p92 = por %p90, %p91
      %p94 = scmp.ne.s32.totalorder %s77, %s93
      %p95 = scmp.eq.s32.totalorder %s55, 0
      %p96 = por %p94, %p95
      %s97 = ssub.s32 %s56, %s68
      %p98 = scmp.eq.s32.totalorder %s97, 0
      %s100 = sadd.s32 %s99, 1
      %s101 = scalar_select %p98, %s99, %s100
      %p104 = pneg %p98
      %p105 = scmp.eq.s32.totalorder %s49, 1
      %p106 = por %p104, %p105
      %p107 = scmp.ne.s32.totalorder %s99, %s102
      %p108 = scmp.eq.s32.totalorder %s49, 0
      %p109 = por %p107, %p108
      %p110 = scmp.ne.s32.totalorder %s99, %s102
      %p111 = scmp.eq.s32.totalorder %s54, 1
      %p112 = por %p110, %p111
      %p113 = scmp.ne.s32.totalorder %s102, %s103
      %p114 = scmp.eq.s32.totalorder %s54, 0
      %p115 = por %p113, %p114
      %p116 = scmp.ne.s32.totalorder %s102, %s103
      %p117 = scmp.eq.s32.totalorder %s55, 1
      %p118 = por %p116, %p117
      %p120 = scmp.ne.s32.totalorder %s103, %s119
      %p121 = scmp.eq.s32.totalorder %s55, 0
      %p122 = por %p120, %p121
      %s123 = ssub.s32 %s56, %s68
      %s124 = ssub.s32 %s57, %s64
      %s125 = sor.u32 %s123, %s124
      %p126 = scmp.eq.s32.totalorder %s125, 0
      %s128 = sadd.s32 %s127, 1
      %s129 = scalar_select %p126, %s127, %s128
      %p132 = pneg %p126
      %p133 = scmp.eq.s32.totalorder %s49, 1
      %p134 = por %p132, %p133
      %p135 = scmp.ne.s32.totalorder %s127, %s130
      %p136 = scmp.eq.s32.totalorder %s49, 0
      %p137 = por %p135, %p136
      %p138 = scmp.ne.s32.totalorder %s127, %s130
      %p139 = scmp.eq.s32.totalorder %s54, 1
      %p140 = por %p138, %p139
      %p141 = scmp.ne.s32.totalorder %s130, %s131
      %p142 = scmp.eq.s32.totalorder %s54, 0
      %p143 = por %p141, %p142
      %p144 = scmp.ne.s32.totalorder %s130, %s131
      %p145 = scmp.eq.s32.totalorder %s55, 1
      %p146 = por %p144, %p145
      %p148 = scmp.ne.s32.totalorder %s131, %s147
      %p149 = scmp.eq.s32.totalorder %s55, 0
      %p150 = por %p148, %p149
      %s151 = ssub.s32 %s56, %s68
      %s152 = ssub.s32 %s57, %s64
      %s153 = sor.u32 %s151, %s152
      %p154 = scmp.eq.s32.totalorder %s153, 0
      %s156 = sadd.s32 %s155, 1
      %s157 = scalar_select %p154, %s155, %s156
      %p160 = pneg %p154
      %p161 = scmp.eq.s32.totalorder %s49, 1
      %p162 = por %p160, %p161
      %p163 = scmp.ne.s32.totalorder %s155, %s158
      %p164 = scmp.eq.s32.totalorder %s49, 0
      %p165 = por %p163, %p164
      %p166 = scmp.ne.s32.totalorder %s155, %s158
      %p167 = scmp.eq.s32.totalorder %s54, 1
      %p168 = por %p166, %p167
      %p169 = scmp.ne.s32.totalorder %s158, %s159
      %p170 = scmp.eq.s32.totalorder %s54, 0
      %p171 = por %p169, %p170
      %p172 = scmp.ne.s32.totalorder %s158, %s159
      %p173 = scmp.eq.s32.totalorder %s55, 1
      %p174 = por %p172, %p173
      %p176 = scmp.ne.s32.totalorder %s159, %s175
      %p177 = scmp.eq.s32.totalorder %s55, 0
      %p178 = por %p176, %p177
      %s179 = ssub.s32 %s56, %s68
      %p180 = scmp.eq.s32.totalorder %s179, 0
      %s182 = sadd.s32 %s181, 1
      %s183 = scalar_select %p180, %s181, %s182
      %p186 = pneg %p180
      %p187 = scmp.eq.s32.totalorder %s49, 1
      %p188 = por %p186, %p187
      %p189 = scmp.ne.s32.totalorder %s181, %s184
      %p190 = scmp.eq.s32.totalorder %s49, 0
      %p191 = por %p189, %p190
      %p192 = scmp.ne.s32.totalorder %s181, %s184
      %p193 = scmp.eq.s32.totalorder %s54, 1
      %p194 = por %p192, %p193
      %p195 = scmp.ne.s32.totalorder %s184, %s185
      %p196 = scmp.eq.s32.totalorder %s54, 0
      %p197 = por %p195, %p196
      %p198 = scmp.ne.s32.totalorder %s184, %s185
      %p199 = scmp.eq.s32.totalorder %s55, 1
      %p200 = por %p198, %p199
      %p202 = scmp.ne.s32.totalorder %s185, %s201
      %p203 = scmp.eq.s32.totalorder %s55, 0
      %p204 = por %p202, %p203
      %s205 = ssub.s32 %s56, %s68
      %p206 = scmp.eq.s32.totalorder %s205, 0
      %s208 = sadd.s32 %s207, 1
      %s209 = scalar_select %p206, %s207, %s208
      %p212 = pneg %p206
      %p213 = scmp.eq.s32.totalorder %s49, 1
      %p214 = por %p212, %p213
      %p215 = scmp.ne.s32.totalorder %s207, %s210
      %p216 = scmp.eq.s32.totalorder %s49, 0
      %p217 = por %p215, %p216
      %p218 = scmp.ne.s32.totalorder %s207, %s210
      %p219 = scmp.eq.s32.totalorder %s54, 1
      %p220 = por %p218, %p219
      %p221 = scmp.ne.s32.totalorder %s210, %s211
      %p222 = scmp.eq.s32.totalorder %s54, 0
      %p223 = por %p221, %p222
      %p224 = scmp.ne.s32.totalorder %s210, %s211
      %p225 = scmp.eq.s32.totalorder %s55, 1
      %p226 = por %p224, %p225
      %p228 = scmp.ne.s32.totalorder %s211, %s227
      %p229 = scmp.eq.s32.totalorder %s55, 0
      %p230 = por %p228, %p229
      %s232 = sadd.s32 %s231, 1
      %p235 = scmp.eq.s32.totalorder %s49, 1
      %p236 = scmp.ne.s32.totalorder %s231, %s233
      %p237 = scmp.eq.s32.totalorder %s49, 0
      %p238 = por %p236, %p237
      %p239 = scmp.ne.s32.totalorder %s231, %s233
      %p240 = scmp.eq.s32.totalorder %s54, 1
      %p241 = por %p239, %p240
      %p242 = scmp.ne.s32.totalorder %s233, %s234
      %p243 = scmp.eq.s32.totalorder %s54, 0
      %p244 = por %p242, %p243
      %p245 = scmp.ne.s32.totalorder %s233, %s234
      %p246 = scmp.eq.s32.totalorder %s55, 1
      %p247 = por %p245, %p246
      %p249 = scmp.ne.s32.totalorder %s234, %s248
      %p250 = scmp.eq.s32.totalorder %s55, 0
      %p251 = por %p249, %p250
      %s253 = sadd.s32 %s252, 1
      %p256 = scmp.eq.s32.totalorder %s49, 1
      %p257 = scmp.ne.s32.totalorder %s252, %s254
      %p258 = scmp.eq.s32.totalorder %s49, 0
      %p259 = por %p257, %p258
      %p260 = scmp.ne.s32.totalorder %s252, %s254
      %p261 = scmp.eq.s32.totalorder %s54, 1
      %p262 = por %p260, %p261
      %p263 = scmp.ne.s32.totalorder %s254, %s255
      %p264 = scmp.eq.s32.totalorder %s54, 0
      %p265 = por %p263, %p264
      %p266 = scmp.ne.s32.totalorder %s254, %s255
      %p267 = scmp.eq.s32.totalorder %s55, 1
      %p268 = por %p266, %p267
      %p270 = scmp.ne.s32.totalorder %s255, %s269
      %p271 = scmp.eq.s32.totalorder %s55, 0
      %p272 = por %p270, %p271
      %s274 = sadd.s32 %s273, 1
      %p277 = scmp.eq.s32.totalorder %s49, 1
      %p278 = scmp.ne.s32.totalorder %s273, %s275
      %p279 = scmp.eq.s32.totalorder %s49, 0
      %p280 = por %p278, %p279
      %p281 = scmp.ne.s32.totalorder %s273, %s275
      %p282 = scmp.eq.s32.totalorder %s54, 1
      %p283 = por %p281, %p282
      %p284 = scmp.ne.s32.totalorder %s275, %s276
      %p285 = scmp.eq.s32.totalorder %s54, 0
      %p286 = por %p284, %p285
      %p287 = scmp.ne.s32.totalorder %s275, %s276
      %p288 = scmp.eq.s32.totalorder %s55, 1
      %p289 = por %p287, %p288
      %p291 = scmp.ne.s32.totalorder %s276, %s290
      %p292 = scmp.eq.s32.totalorder %s55, 0
      %p293 = por %p291, %p292
      %s295 = sadd.s32 %s294, 1
      %p298 = scmp.eq.s32.totalorder %s49, 1
      %p299 = scmp.ne.s32.totalorder %s294, %s296
      %p300 = scmp.eq.s32.totalorder %s49, 0
      %p301 = por %p299, %p300
      %p302 = scmp.ne.s32.totalorder %s294, %s296
      %p303 = scmp.eq.s32.totalorder %s54, 1
      %p304 = por %p302, %p303
      %p305 = scmp.ne.s32.totalorder %s296, %s297
      %p306 = scmp.eq.s32.totalorder %s54, 0
      %p307 = por %p305, %p306
      %p308 = scmp.ne.s32.totalorder %s296, %s297
      %p309 = scmp.eq.s32.totalorder %s55, 1
      %p310 = por %p308, %p309
      %p312 = scmp.ne.s32.totalorder %s297, %s311
      %p313 = scmp.eq.s32.totalorder %s55, 0
      %p314 = por %p312, %p313
      %s316 = sadd.s32 %s315, 1
      %p319 = scmp.eq.s32.totalorder %s49, 1
      %p320 = scmp.ne.s32.totalorder %s315, %s317
      %p321 = scmp.eq.s32.totalorder %s49, 0
      %p322 = por %p320, %p321
      %p323 = scmp.ne.s32.totalorder %s315, %s317
      %p324 = scmp.eq.s32.totalorder %s54, 1
      %p325 = por %p323, %p324
      %p326 = scmp.ne.s32.totalorder %s317, %s318
      %p327 = scmp.eq.s32.totalorder %s54, 0
      %p328 = por %p326, %p327
      %p329 = scmp.ne.s32.totalorder %s317, %s318
      %p330 = scmp.eq.s32.totalorder %s55, 1
      %p331 = por %p329, %p330
      %p333 = scmp.ne.s32.totalorder %s318, %s332
      %p334 = scmp.eq.s32.totalorder %s55, 0
      %p335 = por %p333, %p334
      %s337 = sadd.s32 %s336, 1
      %p340 = scmp.eq.s32.totalorder %s49, 1
      %p341 = scmp.ne.s32.totalorder %s336, %s338
      %p342 = scmp.eq.s32.totalorder %s49, 0
      %p343 = por %p341, %p342
      %p344 = scmp.ne.s32.totalorder %s336, %s338
      %p345 = scmp.eq.s32.totalorder %s54, 1
      %p346 = por %p344, %p345
      %p347 = scmp.ne.s32.totalorder %s338, %s339
      %p348 = scmp.eq.s32.totalorder %s54, 0
      %p349 = por %p347, %p348
      %p350 = scmp.ne.s32.totalorder %s338, %s339
      %p351 = scmp.eq.s32.totalorder %s55, 1
      %p352 = por %p350, %p351
      %p354 = scmp.ne.s32.totalorder %s339, %s353
      %p355 = scmp.eq.s32.totalorder %s55, 0
      %p356 = por %p354, %p355
      %s358 = sadd.s32 %s357, 1
      %p361 = scmp.eq.s32.totalorder %s49, 1
      %p362 = scmp.ne.s32.totalorder %s357, %s359
      %p363 = scmp.eq.s32.totalorder %s49, 0
      %p364 = por %p362, %p363
      %p365 = scmp.ne.s32.totalorder %s357, %s359
      %p366 = scmp.eq.s32.totalorder %s54, 1
      %p367 = por %p365, %p366
      %p368 = scmp.ne.s32.totalorder %s359, %s360
      %p369 = scmp.eq.s32.totalorder %s54, 0
      %p370 = por %p368, %p369
      %p371 = scmp.ne.s32.totalorder %s359, %s360
      %p372 = scmp.eq.s32.totalorder %s55, 1
      %p373 = por %p371, %p372
      %p375 = scmp.ne.s32.totalorder %s360, %s374
      %p376 = scmp.eq.s32.totalorder %s55, 0
      %p377 = por %p375, %p376
      %s379 = sadd.s32 %s378, 1
      %p382 = scmp.eq.s32.totalorder %s49, 1
      %p383 = scmp.ne.s32.totalorder %s378, %s380
      %p384 = scmp.eq.s32.totalorder %s49, 0
      %p385 = por %p383, %p384
      %p386 = scmp.ne.s32.totalorder %s378, %s380
      %p387 = scmp.eq.s32.totalorder %s54, 1
      %p388 = por %p386, %p387
      %p389 = scmp.ne.s32.totalorder %s380, %s381
      %p390 = scmp.eq.s32.totalorder %s54, 0
      %p391 = por %p389, %p390
      %p392 = scmp.ne.s32.totalorder %s380, %s381
      %p393 = scmp.eq.s32.totalorder %s55, 1
      %p394 = por %p392, %p393
      %p396 = scmp.ne.s32.totalorder %s381, %s395
      %p397 = scmp.eq.s32.totalorder %s55, 0
      %p398 = por %p396, %p397
      %s400 = sadd.s32 %s399, 1
      %p403 = scmp.eq.s32.totalorder %s49, 1
      %p404 = scmp.ne.s32.totalorder %s399, %s401
      %p405 = scmp.eq.s32.totalorder %s49, 0
      %p406 = por %p404, %p405
      %p407 = scmp.ne.s32.totalorder %s399, %s401
      %p408 = scmp.eq.s32.totalorder %s54, 1
      %p409 = por %p407, %p408
      %p410 = scmp.ne.s32.totalorder %s401, %s402
      %p411 = scmp.eq.s32.totalorder %s54, 0
      %p412 = por %p410, %p411
      %p413 = scmp.ne.s32.totalorder %s401, %s402
      %p414 = scmp.eq.s32.totalorder %s55, 1
      %p415 = por %p413, %p414
      %p417 = scmp.ne.s32.totalorder %s402, %s416
      %p418 = scmp.eq.s32.totalorder %s55, 0
      %p419 = por %p417, %p418
      %s421 = sadd.s32 %s420, 1
      %p424 = scmp.eq.s32.totalorder %s49, 1
      %p425 = scmp.ne.s32.totalorder %s420, %s422
      %p426 = scmp.eq.s32.totalorder %s49, 0
      %p427 = por %p425, %p426
      %p428 = scmp.ne.s32.totalorder %s420, %s422
      %p429 = scmp.eq.s32.totalorder %s54, 1
      %p430 = por %p428, %p429
      %p431 = scmp.ne.s32.totalorder %s422, %s423
      %p432 = scmp.eq.s32.totalorder %s54, 0
      %p433 = por %p431, %p432
      %p434 = scmp.ne.s32.totalorder %s422, %s423
      %p435 = scmp.eq.s32.totalorder %s55, 1
      %p436 = por %p434, %p435
      %p438 = scmp.ne.s32.totalorder %s423, %s437
      %p439 = scmp.eq.s32.totalorder %s55, 0
      %p440 = por %p438, %p439
      %s442 = sadd.s32 %s441, 1
      %p445 = scmp.eq.s32.totalorder %s49, 1
      %p446 = scmp.ne.s32.totalorder %s441, %s443
      %p447 = scmp.eq.s32.totalorder %s49, 0
      %p448 = por %p446, %p447
      %p449 = scmp.ne.s32.totalorder %s441, %s443
      %p450 = scmp.eq.s32.totalorder %s54, 1
      %p451 = por %p449, %p450
      %p452 = scmp.ne.s32.totalorder %s443, %s444
      %p453 = scmp.eq.s32.totalorder %s54, 0
      %p454 = por %p452, %p453
      %p455 = scmp.ne.s32.totalorder %s443, %s444
      %p456 = scmp.eq.s32.totalorder %s55, 1
      %p457 = por %p455, %p456
      %p459 = scmp.ne.s32.totalorder %s444, %s458
      %p460 = scmp.eq.s32.totalorder %s55, 0
      %p461 = por %p459, %p460
      %s463 = sadd.s32 %s462, 1
      %p466 = scmp.eq.s32.totalorder %s49, 1
      %p467 = scmp.ne.s32.totalorder %s462, %s464
      %p468 = scmp.eq.s32.totalorder %s49, 0
      %p469 = por %p467, %p468
      %p470 = scmp.ne.s32.totalorder %s462, %s464
      %p471 = scmp.eq.s32.totalorder %s54, 1
      %p472 = por %p470, %p471
      %p473 = scmp.ne.s32.totalorder %s464, %s465
      %p474 = scmp.eq.s32.totalorder %s54, 0
      %p475 = por %p473, %p474
      %p476 = scmp.ne.s32.totalorder %s464, %s465
      %p477 = scmp.eq.s32.totalorder %s55, 1
      %p478 = por %p476, %p477
      %p480 = scmp.ne.s32.totalorder %s465, %s479
      %p481 = scmp.eq.s32.totalorder %s55, 0
      %p482 = por %p480, %p481
      %s484 = sadd.s32 %s483, 1
      %p487 = scmp.eq.s32.totalorder %s49, 1
      %p488 = scmp.ne.s32.totalorder %s483, %s485
      %p489 = scmp.eq.s32.totalorder %s49, 0
      %p490 = por %p488, %p489
      %p491 = scmp.ne.s32.totalorder %s483, %s485
      %p492 = scmp.eq.s32.totalorder %s54, 1
      %p493 = por %p491, %p492
      %p494 = scmp.ne.s32.totalorder %s485, %s486
      %p495 = scmp.eq.s32.totalorder %s54, 0
      %p496 = por %p494, %p495
      %p497 = scmp.ne.s32.totalorder %s485, %s486
      %p498 = scmp.eq.s32.totalorder %s55, 1
      %p499 = por %p497, %p498
      %p501 = scmp.ne.s32.totalorder %s486, %s500
      %p502 = scmp.eq.s32.totalorder %s55, 0
      %p503 = por %p501, %p502
      %s505 = sadd.s32 %s504, 1
      %p508 = scmp.eq.s32.totalorder %s49, 1
      %p509 = scmp.ne.s32.totalorder %s504, %s506
      %p510 = scmp.eq.s32.totalorder %s49, 0
      %p511 = por %p509, %p510
      %p512 = scmp.ne.s32.totalorder %s504, %s506
      %p513 = scmp.eq.s32.totalorder %s54, 1
      %p514 = por %p512, %p513
      %p515 = scmp.ne.s32.totalorder %s506, %s507
      %p516 = scmp.eq.s32.totalorder %s54, 0
      %p517 = por %p515, %p516
      %p518 = scmp.ne.s32.totalorder %s506, %s507
      %p519 = scmp.eq.s32.totalorder %s55, 1
      %p520 = por %p518, %p519
      %p522 = scmp.ne.s32.totalorder %s507, %s521
      %p523 = scmp.eq.s32.totalorder %s55, 0
      %p524 = por %p522, %p523
      %s526 = sadd.s32 %s525, 1
      %p529 = scmp.eq.s32.totalorder %s49, 1
      %p530 = scmp.ne.s32.totalorder %s525, %s527
      %p531 = scmp.eq.s32.totalorder %s49, 0
      %p532 = por %p530, %p531
      %p533 = scmp.ne.s32.totalorder %s525, %s527
      %p534 = scmp.eq.s32.totalorder %s54, 1
      %p535 = por %p533, %p534
      %p536 = scmp.ne.s32.totalorder %s527, %s528
      %p537 = scmp.eq.s32.totalorder %s54, 0
      %p538 = por %p536, %p537
      %p539 = scmp.ne.s32.totalorder %s527, %s528
      %p540 = scmp.eq.s32.totalorder %s55, 1
      %p541 = por %p539, %p540
      %p543 = scmp.ne.s32.totalorder %s528, %s542
      %p544 = scmp.eq.s32.totalorder %s55, 0
      %p545 = por %p543, %p544
      %s546 = ssub.s32 %s56, %s68
      %s547 = ssub.s32 %s57, %s64
      %s548 = sor.u32 %s546, %s547
      %p549 = scmp.eq.s32.totalorder %s548, 0
      %s551 = sadd.s32 %s550, 1
      %s552 = scalar_select %p549, %s550, %s551
      %p555 = pneg %p549
      %p556 = scmp.eq.s32.totalorder %s49, 1
      %p557 = por %p555, %p556
      %p558 = scmp.ne.s32.totalorder %s550, %s553
      %p559 = scmp.eq.s32.totalorder %s49, 0
      %p560 = por %p558, %p559
      %p561 = scmp.ne.s32.totalorder %s550, %s553
      %p562 = scmp.eq.s32.totalorder %s54, 1
      %p563 = por %p561, %p562
      %p564 = scmp.ne.s32.totalorder %s553, %s554
      %p565 = scmp.eq.s32.totalorder %s54, 0
      %p566 = por %p564, %p565
      %p567 = scmp.ne.s32.totalorder %s553, %s554
      %p568 = scmp.eq.s32.totalorder %s55, 1
      %p569 = por %p567, %p568
      %p571 = scmp.ne.s32.totalorder %s554, %s570
      %p572 = scmp.eq.s32.totalorder %s55, 0
      %p573 = por %p571, %p572
      %p574 = scmp.le.s32.totalorder 1, %s49
      %p575 = scmp.lt.s32.totalorder %s49, 3
      %p576 = pnand %p574, %p575
      %p577 = pneg %p576
      // Predicated region
      $region9: #{tpu_custom_call.1} parent=5 // pred_check
        _
      $region10: #{tpu_custom_call.1} parent=5 // pred_check_branch
        %579 = sbr.rel (%p576) target = $region12
      $region11: #{tpu_custom_call.1} parent=5 // pred_region
        %s580 = ssub.s32 %s49, 1
        // Predicated region
        $region13: #{tpu_custom_call.1} parent=11 // pred_check
          %p581 = pneg %p244
        $region14: #{tpu_custom_call.1} parent=11 // pred_check_branch
          %583 = sbr.rel (%p581) target = $region16
        $region15: #{tpu_custom_call.1} parent=11 // pred_region
          %s585 = ssub.s32 1024, 1024
          %586 = vsyncadd [#allocation12], %s585
          %s587 = sshll.u32 [#allocation13], 4
          %s588 = int_to_ptr.vmem [resolvable:$true] %s587
          %593 = dma.hbm_to_vmem [thread:$0]  %s6, 1024, %s588, [#allocation12], 128, 128, 8
        $region16: #{tpu_custom_call.1} parent=11 // pred_fallthru
          _
        // Predicated region
        $region17: #{tpu_custom_call.1} parent=11 // pred_check
          %p594 = pneg %p265
        $region18: #{tpu_custom_call.1} parent=11 // pred_check_branch
          %596 = sbr.rel (%p594) target = $region20
        $region19: #{tpu_custom_call.1} parent=11 // pred_region
          %s598 = ssub.s32 16, 16
          %599 = vsyncadd [#allocation15], %s598
          %s601 = sshll.u32 [#allocation14], 4
          %s602 = int_to_ptr.vmem [resolvable:$true] %s601
          %604 = dma.hbm_to_vmem [thread:$0]  %s7, 16, %s602, [#allocation15]
        $region20: #{tpu_custom_call.1} parent=11 // pred_fallthru
          _
        // Predicated region
        $region21: #{tpu_custom_call.1} parent=11 // pred_check
          %p605 = pneg %p286
        $region22: #{tpu_custom_call.1} parent=11 // pred_check_branch
          %607 = sbr.rel (%p605) target = $region24
        $region23: #{tpu_custom_call.1} parent=11 // pred_region
          %s609 = ssub.s32 1024, 1024
          %610 = vsyncadd [#allocation15], %s609
          %s611 = sshll.u32 [#allocation16], 4
          %s612 = int_to_ptr.vmem [resolvable:$true] %s611
          %617 = dma.hbm_to_vmem [thread:$0]  %s8, 1024, %s612, [#allocation15], 128, 128, 8
        $region24: #{tpu_custom_call.1} parent=11 // pred_fallthru
          _
        // Predicated region
        $region25: #{tpu_custom_call.1} parent=11 // pred_check
          %p618 = pneg %p307
        $region26: #{tpu_custom_call.1} parent=11 // pred_check_branch
          %620 = sbr.rel (%p618) target = $region28
        $region27: #{tpu_custom_call.1} parent=11 // pred_region
          %s622 = ssub.s32 16, 16
          %623 = vsyncadd [#allocation18], %s622
          %s625 = sshll.u32 [#allocation17], 4
          %s626 = int_to_ptr.vmem [resolvable:$true] %s625
          %628 = dma.hbm_to_vmem [thread:$0]  %s9, 16, %s626, [#allocation18]
        $region28: #{tpu_custom_call.1} parent=11 // pred_fallthru
          _
        // Predicated region
        $region29: #{tpu_custom_call.1} parent=11 // pred_check
          %p629 = pneg %p328
        $region30: #{tpu_custom_call.1} parent=11 // pred_check_branch
          %631 = sbr.rel (%p629) target = $region32
        $region31: #{tpu_custom_call.1} parent=11 // pred_region
          %s633 = ssub.s32 1024, 1024
          %634 = vsyncadd [#allocation18], %s633
          %s635 = sshll.u32 [#allocation19], 4
          %s636 = int_to_ptr.vmem [resolvable:$true] %s635
          %641 = dma.hbm_to_vmem [thread:$0]  %s10, 1024, %s636, [#allocation18], 128, 128, 8
        $region32: #{tpu_custom_call.1} parent=11 // pred_fallthru
          _
        // Predicated region
        $region33: #{tpu_custom_call.1} parent=11 // pred_check
          %p642 = pneg %p349
        $region34: #{tpu_custom_call.1} parent=11 // pred_check_branch
          %644 = sbr.rel (%p642) target = $region36
        $region35: #{tpu_custom_call.1} parent=11 // pred_region
          %s646 = ssub.s32 16, 16
          %647 = vsyncadd [#allocation21], %s646
          %s649 = sshll.u32 [#allocation20], 4
          %s650 = int_to_ptr.vmem [resolvable:$true] %s649
          %652 = dma.hbm_to_vmem [thread:$0]  %s11, 16, %s650, [#allocation21]
        $region36: #{tpu_custom_call.1} parent=11 // pred_fallthru
          _
        // Predicated region
        $region37: #{tpu_custom_call.1} parent=11 // pred_check
          %p653 = pneg %p370
        $region38: #{tpu_custom_call.1} parent=11 // pred_check_branch
          %655 = sbr.rel (%p653) target = $region40
        $region39: #{tpu_custom_call.1} parent=11 // pred_region
          %s657 = ssub.s32 1024, 1024
          %658 = vsyncadd [#allocation21], %s657
          %s659 = sshll.u32 [#allocation22], 4
          %s660 = int_to_ptr.vmem [resolvable:$true] %s659
          %665 = dma.hbm_to_vmem [thread:$0]  %s12, 1024, %s660, [#allocation21], 128, 128, 8
        $region40: #{tpu_custom_call.1} parent=11 // pred_fallthru
          _
        // Predicated region
        $region41: #{tpu_custom_call.1} parent=11 // pred_check
          %p666 = pneg %p391
        $region42: #{tpu_custom_call.1} parent=11 // pred_check_branch
          %668 = sbr.rel (%p666) target = $region44
        $region43: #{tpu_custom_call.1} parent=11 // pred_region
          %s670 = ssub.s32 16, 16
          %671 = vsyncadd [#allocation24], %s670
          %s673 = sshll.u32 [#allocation23], 4
          %s674 = int_to_ptr.vmem [resolvable:$true] %s673
          %676 = dma.hbm_to_vmem [thread:$0]  %s13, 16, %s674, [#allocation24]
        $region44: #{tpu_custom_call.1} parent=11 // pred_fallthru
          _
        // Predicated region
        $region45: #{tpu_custom_call.1} parent=11 // pred_check
          %p677 = pneg %p412
        $region46: #{tpu_custom_call.1} parent=11 // pred_check_branch
          %679 = sbr.rel (%p677) target = $region48
        $region47: #{tpu_custom_call.1} parent=11 // pred_region
          %s681 = ssub.s32 1024, 1024
          %682 = vsyncadd [#allocation24], %s681
          %s683 = sshll.u32 [#allocation25], 4
          %s684 = int_to_ptr.vmem [resolvable:$true] %s683
          %689 = dma.hbm_to_vmem [thread:$0]  %s14, 1024, %s684, [#allocation24], 128, 128, 8
        $region48: #{tpu_custom_call.1} parent=11 // pred_fallthru
          _
        // Predicated region
        $region49: #{tpu_custom_call.1} parent=11 // pred_check
          %p690 = pneg %p433
        $region50: #{tpu_custom_call.1} parent=11 // pred_check_branch
          %692 = sbr.rel (%p690) target = $region52
        $region51: #{tpu_custom_call.1} parent=11 // pred_region
          %s694 = ssub.s32 1024, 1024
          %695 = vsyncadd [#allocation27], %s694
          %s696 = sshll.u32 [#allocation26], 4
          %s697 = int_to_ptr.vmem [resolvable:$true] %s696
          %702 = dma.hbm_to_vmem [thread:$0]  %s15, 1024, %s697, [#allocation27], 128, 128, 8
        $region52: #{tpu_custom_call.1} parent=11 // pred_fallthru
          _
        // Predicated region
        $region53: #{tpu_custom_call.1} parent=11 // pred_check
          %p703 = pneg %p454
        $region54: #{tpu_custom_call.1} parent=11 // pred_check_branch
          %705 = sbr.rel (%p703) target = $region56
        $region55: #{tpu_custom_call.1} parent=11 // pred_region
          %s707 = ssub.s32 16, 16
          %708 = vsyncadd [#allocation27], %s707
          %s710 = sshll.u32 [#allocation28], 4
          %s711 = int_to_ptr.vmem [resolvable:$true] %s710
          %713 = dma.hbm_to_vmem [thread:$0]  %s16, 16, %s711, [#allocation27]
        $region56: #{tpu_custom_call.1} parent=11 // pred_fallthru
          _
        // Predicated region
        $region57: #{tpu_custom_call.1} parent=11 // pred_check
          %p714 = pneg %p475
        $region58: #{tpu_custom_call.1} parent=11 // pred_check_branch
          %716 = sbr.rel (%p714) target = $region60
        $region59: #{tpu_custom_call.1} parent=11 // pred_region
          %s718 = ssub.s32 16, 16
          %719 = vsyncadd [#allocation30], %s718
          %s721 = sshll.u32 [#allocation29], 4
          %s722 = int_to_ptr.vmem [resolvable:$true] %s721
          %724 = dma.hbm_to_vmem [thread:$0]  %s17, 16, %s722, [#allocation30]
        $region60: #{tpu_custom_call.1} parent=11 // pred_fallthru
          _
        // Predicated region
        $region61: #{tpu_custom_call.1} parent=11 // pred_check
          %p725 = pneg %p496
        $region62: #{tpu_custom_call.1} parent=11 // pred_check_branch
          %727 = sbr.rel (%p725) target = $region64
        $region63: #{tpu_custom_call.1} parent=11 // pred_region
          %s729 = ssub.s32 16, 16
          %730 = vsyncadd [#allocation30], %s729
          %s732 = sshll.u32 [#allocation31], 4
          %s733 = int_to_ptr.vmem [resolvable:$true] %s732
          %735 = dma.hbm_to_vmem [thread:$0]  %s18, 16, %s733, [#allocation30]
        $region64: #{tpu_custom_call.1} parent=11 // pred_fallthru
          _
        // Predicated region
        $region65: #{tpu_custom_call.1} parent=11 // pred_check
          %p736 = pneg %p517
        $region66: #{tpu_custom_call.1} parent=11 // pred_check_branch
          %738 = sbr.rel (%p736) target = $region68
        $region67: #{tpu_custom_call.1} parent=11 // pred_region
          %s740 = ssub.s32 2048, 2048
          %741 = vsyncadd [#allocation33], %s740
          %s742 = sshll.u32 [#allocation32], 4
          %s743 = int_to_ptr.vmem [resolvable:$true] %s742
          %748 = dma.hbm_to_vmem [thread:$0]  %s19, 2048, %s743, [#allocation33], 128, 128, 8
        $region68: #{tpu_custom_call.1} parent=11 // pred_fallthru
          _
        // Predicated region
        $region69: #{tpu_custom_call.1} parent=11 // pred_check
          %p749 = pneg %p538
        $region70: #{tpu_custom_call.1} parent=11 // pred_check_branch
          %751 = sbr.rel (%p749) target = $region72
        $region71: #{tpu_custom_call.1} parent=11 // pred_region
          %s753 = ssub.s32 16, 16
          %754 = vsyncadd [#allocation33], %s753
          %s756 = sshll.u32 [#allocation34], 4
          %s757 = int_to_ptr.vmem [resolvable:$true] %s756
          %759 = dma.hbm_to_vmem [thread:$0]  %s20, 16, %s757, [#allocation33]
        $region72: #{tpu_custom_call.1} parent=11 // pred_fallthru
          _
      $region12: #{tpu_custom_call.1} parent=5 // pred_fallthru
        _
      %p760 = scmp.lt.s32.totalorder %s49, 2
      // Predicated region
      $region73: #{tpu_custom_call.1} parent=5 // pred_check
        %p761 = pneg %p760
      $region74: #{tpu_custom_call.1} parent=5 // pred_check_branch
        %763 = sbr.rel (%p761) target = $region76
      $region75: #{tpu_custom_call.1} parent=5 // pred_region
        // Predicated region
        $region77: #{tpu_custom_call.1} parent=75 // pred_check
          %p764 = pneg %p83
        $region78: #{tpu_custom_call.1} parent=75 // pred_check_branch
          %766 = sbr.rel (%p764) target = $region80
        $region79: #{tpu_custom_call.1} parent=75 // pred_region
          %s767 = sand.u32 %s73, 1
          %s768 = scalar_lea.sflag [#allocation3], %s767
          %s769 = sand.u32 %s73, 1
          %s770 = smul.addr %s769, 8
          %s771 = scalar_lea.vmem [#allocation2], %s770
          %s773 = ssub.s32 128, 128
          %774 = vsyncadd %s768, %s773
          %s775 = sadd.s32 %s57, %s56
          %s776 = smul.addr %s775, 128
          %s777 = scalar_lea.hbm %s0, %s776
          %s779 = sshll.u32 %s771, 4
          %s780 = int_to_ptr.vmem [resolvable:$true] %s779
          %782 = dma.hbm_to_vmem [thread:$0]  %s777, 128, %s780, %s768
        $region80: #{tpu_custom_call.1} parent=75 // pred_fallthru
          _
        // Predicated region
        $region81: #{tpu_custom_call.1} parent=75 // pred_check
          %p783 = pneg %p109
        $region82: #{tpu_custom_call.1} parent=75 // pred_check_branch
          %785 = sbr.rel (%p783) target = $region84
        $region83: #{tpu_custom_call.1} parent=75 // pred_region
          %s786 = sand.u32 %s49, 1
          %s787 = scalar_lea.sflag [#allocation6], %s786
          %s788 = sand.u32 %s99, 1
          %s789 = smul.addr %s788, 8
          %s790 = scalar_lea.vmem [#allocation5], %s789
          %s792 = ssub.s32 128, 128
          %793 = vsyncadd %s787, %s792
          %s794 = smul.addr %s56, 128
          %s795 = scalar_lea.hbm %s1, %s794
          %s797 = sshll.u32 %s790, 4
          %s798 = int_to_ptr.vmem [resolvable:$true] %s797
          %800 = dma.hbm_to_vmem [thread:$0]  %s795, 128, %s798, %s787
        $region84: #{tpu_custom_call.1} parent=75 // pred_fallthru
          _
        // Predicated region
        $region85: #{tpu_custom_call.1} parent=75 // pred_check
          %p801 = pneg %p137
        $region86: #{tpu_custom_call.1} parent=75 // pred_check_branch
          %803 = sbr.rel (%p801) target = $region88
        $region87: #{tpu_custom_call.1} parent=75 // pred_region
          %s804 = sand.u32 %s49, 1
          %s805 = scalar_lea.sflag [#allocation6], %s804
          %s806 = sand.u32 %s127, 1
          %s807 = smul.addr %s806, 8
          %s808 = scalar_lea.vmem [#allocation7], %s807
          %s810 = ssub.s32 128, 128
          %811 = vsyncadd %s805, %s810
          %s812 = sadd.s32 %s57, %s56
          %s813 = smul.addr %s812, 128
          %s814 = scalar_lea.hbm %s2, %s813
          %s816 = sshll.u32 %s808, 4
          %s817 = int_to_ptr.vmem [resolvable:$true] %s816
          %819 = dma.hbm_to_vmem [thread:$0]  %s814, 128, %s817, %s805
        $region88: #{tpu_custom_call.1} parent=75 // pred_fallthru
          _
        // Predicated region
        $region89: #{tpu_custom_call.1} parent=75 // pred_check
          %p820 = pneg %p165
        $region90: #{tpu_custom_call.1} parent=75 // pred_check_branch
          %822 = sbr.rel (%p820) target = $region92
        $region91: #{tpu_custom_call.1} parent=75 // pred_region
          %s823 = sand.u32 %s49, 1
          %s824 = scalar_lea.sflag [#allocation9], %s823
          %s825 = sand.u32 %s155, 1
          %s826 = smul.addr %s825, 8
          %s827 = scalar_lea.vmem [#allocation8], %s826
          %s829 = ssub.s32 128, 128
          %830 = vsyncadd %s824, %s829
          %s831 = sadd.s32 %s57, %s56
          %s832 = smul.addr %s831, 128
          %s833 = scalar_lea.hbm %s3, %s832
          %s835 = sshll.u32 %s827, 4
          %s836 = int_to_ptr.vmem [resolvable:$true] %s835
          %838 = dma.hbm_to_vmem [thread:$0]  %s833, 128, %s836, %s824
        $region92: #{tpu_custom_call.1} parent=75 // pred_fallthru
          _
        // Predicated region
        $region93: #{tpu_custom_call.1} parent=75 // pred_check
          %p839 = pneg %p191
        $region94: #{tpu_custom_call.1} parent=75 // pred_check_branch
          %841 = sbr.rel (%p839) target = $region96
        $region95: #{tpu_custom_call.1} parent=75 // pred_region
          %s842 = sand.u32 %s49, 1
          %s843 = scalar_lea.sflag [#allocation9], %s842
          %s844 = sand.u32 %s181, 1
          %s845 = smul.addr %s844, 8
          %s846 = scalar_lea.vmem [#allocation10], %s845
          %s848 = ssub.s32 128, 128
          %849 = vsyncadd %s843, %s848
          %s850 = smul.addr %s56, 128
          %s851 = scalar_lea.hbm %s4, %s850
          %s853 = sshll.u32 %s846, 4
          %s854 = int_to_ptr.vmem [resolvable:$true] %s853
          %856 = dma.hbm_to_vmem [thread:$0]  %s851, 128, %s854, %s843
        $region96: #{tpu_custom_call.1} parent=75 // pred_fallthru
          _
        // Predicated region
        $region97: #{tpu_custom_call.1} parent=75 // pred_check
          %p857 = pneg %p217
        $region98: #{tpu_custom_call.1} parent=75 // pred_check_branch
          %859 = sbr.rel (%p857) target = $region100
        $region99: #{tpu_custom_call.1} parent=75 // pred_region
          %s860 = sand.u32 %s49, 1
          %s861 = scalar_lea.sflag [#allocation12], %s860
          %s862 = sand.u32 %s207, 1
          %s863 = smul.addr %s862, 8
          %s864 = scalar_lea.vmem [#allocation11], %s863
          %s866 = ssub.s32 128, 128
          %867 = vsyncadd %s861, %s866
          %s868 = smul.addr %s56, 128
          %s869 = scalar_lea.hbm %s5, %s868
          %s871 = sshll.u32 %s864, 4
          %s872 = int_to_ptr.vmem [resolvable:$true] %s871
          %874 = dma.hbm_to_vmem [thread:$0]  %s869, 128, %s872, %s861
        $region100: #{tpu_custom_call.1} parent=75 // pred_fallthru
          _
      $region76: #{tpu_custom_call.1} parent=5 // pred_fallthru
        _
      %p875 = scmp.le.s32.totalorder 1, %s49
      %p876 = scmp.lt.s32.totalorder %s49, 3
      %p877 = pnand %p875, %p876
      %p878 = pneg %p877
      // Predicated region
      $region101: #{tpu_custom_call.1} parent=5 // pred_check
        _
      $region102: #{tpu_custom_call.1} parent=5 // pred_check_branch
        %880 = sbr.rel (%p877) target = $region104
      $region103: #{tpu_custom_call.1} parent=5 // pred_region
        %s881 = ssub.s32 %s49, 1
        %s882 = sand.u32 %s76, 1
        %s883 = scalar_lea.sflag [#allocation3], %s882
        %s884 = sand.u32 %s76, 1
        %s885 = smul.addr %s884, 8
        %s886 = scalar_lea.vmem [#allocation2], %s885
        // Predicated region
        $region105: #{tpu_custom_call.1} parent=103 // pred_check
          %p887 = pneg %p89
        $region106: #{tpu_custom_call.1} parent=103 // pred_check_branch
          %889 = sbr.rel (%p887) target = $region108
        $region107: #{tpu_custom_call.1} parent=103 // pred_region
          %890 = dma.done %s883, 128
        $region108: #{tpu_custom_call.1} parent=103 // pred_fallthru
          _
        %s891 = sand.u32 %s54, 1
        %s892 = scalar_lea.sflag [#allocation6], %s891
        %s893 = sand.u32 %s102, 1
        %s894 = smul.addr %s893, 8
        %s895 = scalar_lea.vmem [#allocation5], %s894
        // Predicated region
        $region109: #{tpu_custom_call.1} parent=103 // pred_check
          %p896 = pneg %p115
        $region110: #{tpu_custom_call.1} parent=103 // pred_check_branch
          %898 = sbr.rel (%p896) target = $region112
        $region111: #{tpu_custom_call.1} parent=103 // pred_region
          %899 = dma.done %s892, 128
        $region112: #{tpu_custom_call.1} parent=103 // pred_fallthru
          _
        %s900 = sand.u32 %s54, 1
        %s901 = scalar_lea.sflag [#allocation6], %s900
        %s902 = sand.u32 %s130, 1
        %s903 = smul.addr %s902, 8
        %s904 = scalar_lea.vmem [#allocation7], %s903
        // Predicated region
        $region113: #{tpu_custom_call.1} parent=103 // pred_check
          %p905 = pneg %p143
        $region114: #{tpu_custom_call.1} parent=103 // pred_check_branch
          %907 = sbr.rel (%p905) target = $region116
        $region115: #{tpu_custom_call.1} parent=103 // pred_region
          %908 = dma.done %s901, 128
        $region116: #{tpu_custom_call.1} parent=103 // pred_fallthru
          _
        %s909 = sand.u32 %s54, 1
        %s910 = scalar_lea.sflag [#allocation9], %s909
        %s911 = sand.u32 %s158, 1
        %s912 = smul.addr %s911, 8
        %s913 = scalar_lea.vmem [#allocation8], %s912
        // Predicated region
        $region117: #{tpu_custom_call.1} parent=103 // pred_check
          %p914 = pneg %p171
        $region118: #{tpu_custom_call.1} parent=103 // pred_check_branch
          %916 = sbr.rel (%p914) target = $region120
        $region119: #{tpu_custom_call.1} parent=103 // pred_region
          %917 = dma.done %s910, 128
        $region120: #{tpu_custom_call.1} parent=103 // pred_fallthru
          _
        %s918 = sand.u32 %s54, 1
        %s919 = scalar_lea.sflag [#allocation9], %s918
        %s920 = sand.u32 %s184, 1
        %s921 = smul.addr %s920, 8
        %s922 = scalar_lea.vmem [#allocation10], %s921
        // Predicated region
        $region121: #{tpu_custom_call.1} parent=103 // pred_check
          %p923 = pneg %p197
        $region122: #{tpu_custom_call.1} parent=103 // pred_check_branch
          %925 = sbr.rel (%p923) target = $region124
        $region123: #{tpu_custom_call.1} parent=103 // pred_region
          %926 = dma.done %s919, 128
        $region124: #{tpu_custom_call.1} parent=103 // pred_fallthru
          _
        %s927 = sand.u32 %s54, 1
        %s928 = scalar_lea.sflag [#allocation12], %s927
        %s929 = sand.u32 %s210, 1
        %s930 = smul.addr %s929, 8
        %s931 = scalar_lea.vmem [#allocation11], %s930
        // Predicated region
        $region125: #{tpu_custom_call.1} parent=103 // pred_check
          %p932 = pneg %p223
        $region126: #{tpu_custom_call.1} parent=103 // pred_check_branch
          %934 = sbr.rel (%p932) target = $region128
        $region127: #{tpu_custom_call.1} parent=103 // pred_region
          %935 = dma.done %s928, 128
        $region128: #{tpu_custom_call.1} parent=103 // pred_fallthru
          _
        // Predicated region
        $region129: #{tpu_custom_call.1} parent=103 // pred_check
          %p936 = pneg %p244
        $region130: #{tpu_custom_call.1} parent=103 // pred_check_branch
          %938 = sbr.rel (%p936) target = $region132
        $region131: #{tpu_custom_call.1} parent=103 // pred_region
          %939 = dma.done [#allocation12], 1024
        $region132: #{tpu_custom_call.1} parent=103 // pred_fallthru
          _
        // Predicated region
        $region133: #{tpu_custom_call.1} parent=103 // pred_check
          %p940 = pneg %p265
        $region134: #{tpu_custom_call.1} parent=103 // pred_check_branch
          %942 = sbr.rel (%p940) target = $region136
        $region135: #{tpu_custom_call.1} parent=103 // pred_region
          %943 = dma.done [#allocation15], 16
        $region136: #{tpu_custom_call.1} parent=103 // pred_fallthru
          _
        // Predicated region
        $region137: #{tpu_custom_call.1} parent=103 // pred_check
          %p944 = pneg %p286
        $region138: #{tpu_custom_call.1} parent=103 // pred_check_branch
          %946 = sbr.rel (%p944) target = $region140
        $region139: #{tpu_custom_call.1} parent=103 // pred_region
          %947 = dma.done [#allocation15], 1024
        $region140: #{tpu_custom_call.1} parent=103 // pred_fallthru
          _
        // Predicated region
        $region141: #{tpu_custom_call.1} parent=103 // pred_check
          %p948 = pneg %p307
        $region142: #{tpu_custom_call.1} parent=103 // pred_check_branch
          %950 = sbr.rel (%p948) target = $region144
        $region143: #{tpu_custom_call.1} parent=103 // pred_region
          %951 = dma.done [#allocation18], 16
        $region144: #{tpu_custom_call.1} parent=103 // pred_fallthru
          _
        // Predicated region
        $region145: #{tpu_custom_call.1} parent=103 // pred_check
          %p952 = pneg %p328
        $region146: #{tpu_custom_call.1} parent=103 // pred_check_branch
          %954 = sbr.rel (%p952) target = $region148
        $region147: #{tpu_custom_call.1} parent=103 // pred_region
          %955 = dma.done [#allocation18], 1024
        $region148: #{tpu_custom_call.1} parent=103 // pred_fallthru
          _
        // Predicated region
        $region149: #{tpu_custom_call.1} parent=103 // pred_check
          %p956 = pneg %p349
        $region150: #{tpu_custom_call.1} parent=103 // pred_check_branch
          %958 = sbr.rel (%p956) target = $region152
        $region151: #{tpu_custom_call.1} parent=103 // pred_region
          %959 = dma.done [#allocation21], 16
        $region152: #{tpu_custom_call.1} parent=103 // pred_fallthru
          _
        // Predicated region
        $region153: #{tpu_custom_call.1} parent=103 // pred_check
          %p960 = pneg %p370
        $region154: #{tpu_custom_call.1} parent=103 // pred_check_branch
          %962 = sbr.rel (%p960) target = $region156
        $region155: #{tpu_custom_call.1} parent=103 // pred_region
          %963 = dma.done [#allocation21], 1024
        $region156: #{tpu_custom_call.1} parent=103 // pred_fallthru
          _
        // Predicated region
        $region157: #{tpu_custom_call.1} parent=103 // pred_check
          %p964 = pneg %p391
        $region158: #{tpu_custom_call.1} parent=103 // pred_check_branch
          %966 = sbr.rel (%p964) target = $region160
        $region159: #{tpu_custom_call.1} parent=103 // pred_region
          %967 = dma.done [#allocation24], 16
        $region160: #{tpu_custom_call.1} parent=103 // pred_fallthru
          _
        // Predicated region
        $region161: #{tpu_custom_call.1} parent=103 // pred_check
          %p968 = pneg %p412
        $region162: #{tpu_custom_call.1} parent=103 // pred_check_branch
          %970 = sbr.rel (%p968) target = $region164
        $region163: #{tpu_custom_call.1} parent=103 // pred_region
          %971 = dma.done [#allocation24], 1024
        $region164: #{tpu_custom_call.1} parent=103 // pred_fallthru
          _
        // Predicated region
        $region165: #{tpu_custom_call.1} parent=103 // pred_check
          %p972 = pneg %p433
        $region166: #{tpu_custom_call.1} parent=103 // pred_check_branch
          %974 = sbr.rel (%p972) target = $region168
        $region167: #{tpu_custom_call.1} parent=103 // pred_region
          %975 = dma.done [#allocation27], 1024
        $region168: #{tpu_custom_call.1} parent=103 // pred_fallthru
          _
        // Predicated region
        $region169: #{tpu_custom_call.1} parent=103 // pred_check
          %p976 = pneg %p454
        $region170: #{tpu_custom_call.1} parent=103 // pred_check_branch
          %978 = sbr.rel (%p976) target = $region172
        $region171: #{tpu_custom_call.1} parent=103 // pred_region
          %979 = dma.done [#allocation27], 16
        $region172: #{tpu_custom_call.1} parent=103 // pred_fallthru
          _
        // Predicated region
        $region173: #{tpu_custom_call.1} parent=103 // pred_check
          %p980 = pneg %p475
        $region174: #{tpu_custom_call.1} parent=103 // pred_check_branch
          %982 = sbr.rel (%p980) target = $region176
        $region175: #{tpu_custom_call.1} parent=103 // pred_region
          %983 = dma.done [#allocation30], 16
        $region176: #{tpu_custom_call.1} parent=103 // pred_fallthru
          _
        // Predicated region
        $region177: #{tpu_custom_call.1} parent=103 // pred_check
          %p984 = pneg %p496
        $region178: #{tpu_custom_call.1} parent=103 // pred_check_branch
          %986 = sbr.rel (%p984) target = $region180
        $region179: #{tpu_custom_call.1} parent=103 // pred_region
          %987 = dma.done [#allocation30], 16
        $region180: #{tpu_custom_call.1} parent=103 // pred_fallthru
          _
        // Predicated region
        $region181: #{tpu_custom_call.1} parent=103 // pred_check
          %p988 = pneg %p517
        $region182: #{tpu_custom_call.1} parent=103 // pred_check_branch
          %990 = sbr.rel (%p988) target = $region184
        $region183: #{tpu_custom_call.1} parent=103 // pred_region
          %991 = dma.done [#allocation33], 2048
        $region184: #{tpu_custom_call.1} parent=103 // pred_fallthru
          _
        // Predicated region
        $region185: #{tpu_custom_call.1} parent=103 // pred_check
          %p992 = pneg %p538
        $region186: #{tpu_custom_call.1} parent=103 // pred_check_branch
          %994 = sbr.rel (%p992) target = $region188
        $region187: #{tpu_custom_call.1} parent=103 // pred_region
          %995 = dma.done [#allocation33], 16
        $region188: #{tpu_custom_call.1} parent=103 // pred_fallthru
          _
        %s996 = sand.u32 %s76, 1
        %s997 = scalar_lea.sflag [#allocation3], %s996
        %s998 = sand.u32 %s76, 1
        %s999 = smul.addr %s998, 8
        %s1000 = scalar_lea.vmem [#allocation2], %s999
        %p1001 = pneg %p89
        %p1002 = pneg %p86
        %s1003 = sand.u32 %s54, 1
        %s1004 = scalar_lea.sflag [#allocation6], %s1003
        %s1005 = sand.u32 %s102, 1
        %s1006 = smul.addr %s1005, 8
        %s1007 = scalar_lea.vmem [#allocation5], %s1006
        %p1008 = pneg %p115
        %p1009 = pneg %p112
        %s1010 = sand.u32 %s54, 1
        %s1011 = scalar_lea.sflag [#allocation6], %s1010
        %s1012 = sand.u32 %s130, 1
        %s1013 = smul.addr %s1012, 8
        %s1014 = scalar_lea.vmem [#allocation7], %s1013
        %p1015 = pneg %p143
        %p1016 = pneg %p140
        %s1017 = sand.u32 %s54, 1
        %s1018 = scalar_lea.sflag [#allocation9], %s1017
        %s1019 = sand.u32 %s158, 1
        %s1020 = smul.addr %s1019, 8
        %s1021 = scalar_lea.vmem [#allocation8], %s1020
        %p1022 = pneg %p171
        %p1023 = pneg %p168
        %s1024 = sand.u32 %s54, 1
        %s1025 = scalar_lea.sflag [#allocation9], %s1024
        %s1026 = sand.u32 %s184, 1
        %s1027 = smul.addr %s1026, 8
        %s1028 = scalar_lea.vmem [#allocation10], %s1027
        %p1029 = pneg %p197
        %p1030 = pneg %p194
        %s1031 = sand.u32 %s54, 1
        %s1032 = scalar_lea.sflag [#allocation12], %s1031
        %s1033 = sand.u32 %s210, 1
        %s1034 = smul.addr %s1033, 8
        %s1035 = scalar_lea.vmem [#allocation11], %s1034
        %p1036 = pneg %p223
        %p1037 = pneg %p220
        %p1038 = pneg %p244
        %p1039 = pneg %p241
        %p1040 = pneg %p265
        %p1041 = pneg %p262
        %p1042 = pneg %p286
        %p1043 = pneg %p283
        %p1044 = pneg %p307
        %p1045 = pneg %p304
        %p1046 = pneg %p328
        %p1047 = pneg %p325
        %p1048 = pneg %p349
        %p1049 = pneg %p346
        %p1050 = pneg %p370
        %p1051 = pneg %p367
        %p1052 = pneg %p391
        %p1053 = pneg %p388
        %p1054 = pneg %p412
        %p1055 = pneg %p409
        %p1056 = pneg %p433
        %p1057 = pneg %p430
        %p1058 = pneg %p454
        %p1059 = pneg %p451
        %p1060 = pneg %p475
        %p1061 = pneg %p472
        %p1062 = pneg %p496
        %p1063 = pneg %p493
        %p1064 = pneg %p517
        %p1065 = pneg %p514
        %p1066 = pneg %p538
        %p1067 = pneg %p535
        %p1068 = pneg %p566
        %p1069 = pneg %p563
        %s1070 = sand.u32 %s553, 1
        %s1071 = scalar_lea.sflag [#allocation4], %s1070
        %s1072 = sand.u32 %s553, 1
        %s1073 = smul.addr %s1072, 8
        %s1074 = scalar_lea.vmem [#allocation35], %s1073
        %v1075 = vld [vmem:[%s886] sm:$0xff]
        %v1076 = vld [vmem:[%s895] sm:$0xff]
        %v1077 = vld [vmem:[#allocation13] sm:$0xff]
        %v1078 = vld [vmem:[#allocation13 + $0x8] sm:$0xff]
        %v1079 = vld [vmem:[#allocation13 + $0x10] sm:$0xff]
        %v1080 = vld [vmem:[#allocation13 + $0x18] sm:$0xff]
        %v1081 = vld [vmem:[#allocation13 + $0x20] sm:$0xff]
        %v1082 = vld [vmem:[#allocation13 + $0x28] sm:$0xff]
        %v1083 = vld [vmem:[#allocation13 + $0x30] sm:$0xff]
        %v1084 = vld [vmem:[#allocation13 + $0x38] sm:$0xff]
        %v1085 = vld [vmem:[#allocation14] sm:$0x1]
        %v1087 = vlaneseq
        %v1088 = vshrl.u32 %v1087, 7
        %v1089 = vsub.s32 0, %v1088
        %v1090 = vrot.slane %v1085, %v1089
        %vm1092 = vcmask 523264
        %v1094 = vsel %vm1092, %v1075, 0
        %1096 = vmatprep.subr.mxu0 0.0
        %1097 = vmatpush1.msra.mxu0 %v1077
        %1098 = vmatprep.subr.mxu0 0.0
        %1099 = vmatpush1.msra.mxu0 %v1078
        %1100 = vmatprep.subr.mxu0 0.0
        %1101 = vmatpush1.msra.mxu0 %v1079
        %1102 = vmatprep.subr.mxu0 0.0
        %1103 = vmatpush1.msra.mxu0 %v1080
        %1104 = vmatprep.subr.mxu0 0.0
        %1105 = vmatpush1.msra.mxu0 %v1081
        %1106 = vmatprep.subr.mxu0 0.0
        %1107 = vmatpush1.msra.mxu0 %v1082
        %1108 = vmatprep.subr.mxu0 0.0
        %1109 = vmatpush1.msra.mxu0 %v1083
        %1110 = vmatprep.subr.mxu0 0.0
        %1111 = vmatpush1.msra.mxu0 %v1084
        %1112 = vmatprep.subr.mxu0 0.0
        %1113 = vmatpush1.msra.mxu0 0.0
        %1114 = vmatprep.subr.mxu0 0.0
        %1115 = vmatpush1.msra.mxu0 0.0
        %1116 = vmatprep.subr.mxu0 0.0
        %1117 = vmatpush1.msra.mxu0 0.0
        %1118 = vmatprep.subr.mxu0 0.0
        %1119 = vmatpush1.msra.mxu0 0.0
        %1120 = vmatprep.subr.mxu0 0.0
        %1121 = vmatpush1.msra.mxu0 0.0
        %1122 = vmatprep.subr.mxu0 0.0
        %1123 = vmatpush1.msra.mxu0 0.0
        %1124 = vmatprep.subr.mxu0 0.0
        %1125 = vmatpush1.msra.mxu0 0.0
        %1126 = vmatprep.subr.mxu0 0.0
        %1127 = vmatpush1.msra.mxu0 0.0
        %1128 = vmatprep.subr.mxu0 0.0
        %1129 = vmatpush1.msra.mxu0 0.0
        %1130 = vmatprep.subr.mxu0 0.0
        %1131 = vmatpush1.msra.mxu0 0.0
        %1132 = vmatprep.subr.mxu0 0.0
        %1133 = vmatpush1.msra.mxu0 0.0
        %1134 = vmatprep.subr.mxu0 0.0
        %1135 = vmatpush1.msra.mxu0 0.0
        %1136 = vmatprep.subr.mxu0 0.0
        %1137 = vmatpush1.msra.mxu0 0.0
        %1138 = vmatprep.subr.mxu0 0.0
        %1139 = vmatpush1.msra.mxu0 0.0
        %1140 = vmatprep.subr.mxu0 0.0
        %1141 = vmatpush1.msra.mxu0 0.0
        %1142 = vmatprep.subr.mxu0 0.0
        %1143 = vmatpush1.msra.mxu0 0.0
        %1144 = vmatprep.subr.mxu0 0.0
        %1145 = vmatpush1.msra.mxu0 0.0
        %1146 = vmatprep.subr.mxu0 0.0
        %1147 = vmatpush1.msra.mxu0 0.0
        %1148 = vmatprep.subr.mxu0 0.0
        %1149 = vmatpush1.msra.mxu0 0.0
        %1150 = vmatprep.subr.mxu0 0.0
        %1151 = vmatpush1.msra.mxu0 0.0
        %1152 = vmatprep.subr.mxu0 0.0
        %1153 = vmatpush1.msra.mxu0 0.0
        %1154 = vmatprep.subr.mxu0 0.0
        %1155 = vmatpush1.msra.mxu0 0.0
        %1156 = vmatprep.subr.mxu0 0.0
        %1157 = vmatpush1.msra.mxu0 0.0
        %1158 = vmatprep.subr.mxu0 0.0
        %1159 = vmatpush1.msra.mxu0 0.0
        %1160 = vmatprep.mubr.f32.mxu0 0.0
        %1161 = vmatmul.mubr.f32.gmra.mrb[0].mxu0 %v1094
        %v1162 = vpop.f32.mrb[0].mxu0
        %v1163 = vadd.f32 %v1090, %v1162
        %v1164 = vpop.f32.mrb[0].mxu0
        %1165 = vdwg.mxu0
        %v1166 = vld [vmem:[#allocation16] sm:$0xff]
        %v1167 = vld [vmem:[#allocation16 + $0x8] sm:$0xff]
        %v1168 = vld [vmem:[#allocation16 + $0x10] sm:$0xff]
        %v1169 = vld [vmem:[#allocation16 + $0x18] sm:$0xff]
        %v1170 = vld [vmem:[#allocation16 + $0x20] sm:$0xff]
        %v1171 = vld [vmem:[#allocation16 + $0x28] sm:$0xff]
        %v1172 = vld [vmem:[#allocation16 + $0x30] sm:$0xff]
        %v1173 = vld [vmem:[#allocation16 + $0x38] sm:$0xff]
        %v1174 = vld [vmem:[#allocation17] sm:$0x1]
        %v1176 = vlaneseq
        %v1177 = vshrl.u32 %v1176, 7
        %v1178 = vsub.s32 0, %v1177
        %v1179 = vrot.slane %v1174, %v1178
        %v1182 = vsel %vm1092, %v1076, 0
        %1184 = vmatprep.subr.mxu0 0.0
        %1185 = vmatpush1.msra.mxu0 %v1166
        %1186 = vmatprep.subr.mxu0 0.0
        %1187 = vmatpush1.msra.mxu0 %v1167
        %1188 = vmatprep.subr.mxu0 0.0
        %1189 = vmatpush1.msra.mxu0 %v1168
        %1190 = vmatprep.subr.mxu0 0.0
        %1191 = vmatpush1.msra.mxu0 %v1169
        %1192 = vmatprep.subr.mxu0 0.0
        %1193 = vmatpush1.msra.mxu0 %v1170
        %1194 = vmatprep.subr.mxu0 0.0
        %1195 = vmatpush1.msra.mxu0 %v1171
        %1196 = vmatprep.subr.mxu0 0.0
        %1197 = vmatpush1.msra.mxu0 %v1172
        %1198 = vmatprep.subr.mxu0 0.0
        %1199 = vmatpush1.msra.mxu0 %v1173
        %1200 = vmatprep.subr.mxu0 0.0
        %1201 = vmatpush1.msra.mxu0 0.0
        %1202 = vmatprep.subr.mxu0 0.0
        %1203 = vmatpush1.msra.mxu0 0.0
        %1204 = vmatprep.subr.mxu0 0.0
        %1205 = vmatpush1.msra.mxu0 0.0
        %1206 = vmatprep.subr.mxu0 0.0
        %1207 = vmatpush1.msra.mxu0 0.0
        %1208 = vmatprep.subr.mxu0 0.0
        %1209 = vmatpush1.msra.mxu0 0.0
        %1210 = vmatprep.subr.mxu0 0.0
        %1211 = vmatpush1.msra.mxu0 0.0
        %1212 = vmatprep.subr.mxu0 0.0
        %1213 = vmatpush1.msra.mxu0 0.0
        %1214 = vmatprep.subr.mxu0 0.0
        %1215 = vmatpush1.msra.mxu0 0.0
        %1216 = vmatprep.subr.mxu0 0.0
        %1217 = vmatpush1.msra.mxu0 0.0
        %1218 = vmatprep.subr.mxu0 0.0
        %1219 = vmatpush1.msra.mxu0 0.0
        %1220 = vmatprep.subr.mxu0 0.0
        %1221 = vmatpush1.msra.mxu0 0.0
        %1222 = vmatprep.subr.mxu0 0.0
        %1223 = vmatpush1.msra.mxu0 0.0
        %1224 = vmatprep.subr.mxu0 0.0
        %1225 = vmatpush1.msra.mxu0 0.0
        %1226 = vmatprep.subr.mxu0 0.0
        %1227 = vmatpush1.msra.mxu0 0.0
        %1228 = vmatprep.subr.mxu0 0.0
        %1229 = vmatpush1.msra.mxu0 0.0
        %1230 = vmatprep.subr.mxu0 0.0
        %1231 = vmatpush1.msra.mxu0 0.0
        %1232 = vmatprep.subr.mxu0 0.0
        %1233 = vmatpush1.msra.mxu0 0.0
        %1234 = vmatprep.subr.mxu0 0.0
        %1235 = vmatpush1.msra.mxu0 0.0
        %1236 = vmatprep.subr.mxu0 0.0
        %1237 = vmatpush1.msra.mxu0 0.0
        %1238 = vmatprep.subr.mxu0 0.0
        %1239 = vmatpush1.msra.mxu0 0.0
        %1240 = vmatprep.subr.mxu0 0.0
        %1241 = vmatpush1.msra.mxu0 0.0
        %1242 = vmatprep.subr.mxu0 0.0
        %1243 = vmatpush1.msra.mxu0 0.0
        %1244 = vmatprep.subr.mxu0 0.0
        %1245 = vmatpush1.msra.mxu0 0.0
        %1246 = vmatprep.subr.mxu0 0.0
        %1247 = vmatpush1.msra.mxu0 0.0
        %1248 = vmatprep.mubr.f32.mxu0 0.0
        %1249 = vmatmul.mubr.f32.gmra.mrb[0].mxu0 %v1182
        %v1250 = vpop.f32.mrb[0].mxu0
        %v1251 = vadd.f32 %v1179, %v1250
        %v1252 = vpop.f32.mrb[0].mxu0
        %1253 = vdwg.mxu0
        %v1254 = vld [vmem:[#allocation19] sm:$0xff]
        %v1255 = vld [vmem:[#allocation19 + $0x8] sm:$0xff]
        %v1256 = vld [vmem:[#allocation19 + $0x10] sm:$0xff]
        %v1257 = vld [vmem:[#allocation19 + $0x18] sm:$0xff]
        %v1258 = vld [vmem:[#allocation19 + $0x20] sm:$0xff]
        %v1259 = vld [vmem:[#allocation19 + $0x28] sm:$0xff]
        %v1260 = vld [vmem:[#allocation19 + $0x30] sm:$0xff]
        %v1261 = vld [vmem:[#allocation19 + $0x38] sm:$0xff]
        %v1262 = vld [vmem:[#allocation20] sm:$0x1]
        %v1264 = vlaneseq
        %v1265 = vshrl.u32 %v1264, 7
        %v1266 = vsub.s32 0, %v1265
        %v1267 = vrot.slane %v1262, %v1266
        %1269 = vmatprep.subr.mxu0 0.0
        %1270 = vmatpush1.msra.mxu0 %v1254
        %1271 = vmatprep.subr.mxu0 0.0
        %1272 = vmatpush1.msra.mxu0 %v1255
        %1273 = vmatprep.subr.mxu0 0.0
        %1274 = vmatpush1.msra.mxu0 %v1256
        %1275 = vmatprep.subr.mxu0 0.0
        %1276 = vmatpush1.msra.mxu0 %v1257
        %1277 = vmatprep.subr.mxu0 0.0
        %1278 = vmatpush1.msra.mxu0 %v1258
        %1279 = vmatprep.subr.mxu0 0.0
        %1280 = vmatpush1.msra.mxu0 %v1259
        %1281 = vmatprep.subr.mxu0 0.0
        %1282 = vmatpush1.msra.mxu0 %v1260
        %1283 = vmatprep.subr.mxu0 0.0
        %1284 = vmatpush1.msra.mxu0 %v1261
        %1285 = vmatprep.subr.mxu0 0.0
        %1286 = vmatpush1.msra.mxu0 0.0
        %1287 = vmatprep.subr.mxu0 0.0
        %1288 = vmatpush1.msra.mxu0 0.0
        %1289 = vmatprep.subr.mxu0 0.0
        %1290 = vmatpush1.msra.mxu0 0.0
        %1291 = vmatprep.subr.mxu0 0.0
        %1292 = vmatpush1.msra.mxu0 0.0
        %1293 = vmatprep.subr.mxu0 0.0
        %1294 = vmatpush1.msra.mxu0 0.0
        %1295 = vmatprep.subr.mxu0 0.0
        %1296 = vmatpush1.msra.mxu0 0.0
        %1297 = vmatprep.subr.mxu0 0.0
        %1298 = vmatpush1.msra.mxu0 0.0
        %1299 = vmatprep.subr.mxu0 0.0
        %1300 = vmatpush1.msra.mxu0 0.0
        %1301 = vmatprep.subr.mxu0 0.0
        %1302 = vmatpush1.msra.mxu0 0.0
        %1303 = vmatprep.subr.mxu0 0.0
        %1304 = vmatpush1.msra.mxu0 0.0
        %1305 = vmatprep.subr.mxu0 0.0
        %1306 = vmatpush1.msra.mxu0 0.0
        %1307 = vmatprep.subr.mxu0 0.0
        %1308 = vmatpush1.msra.mxu0 0.0
        %1309 = vmatprep.subr.mxu0 0.0
        %1310 = vmatpush1.msra.mxu0 0.0
        %1311 = vmatprep.subr.mxu0 0.0
        %1312 = vmatpush1.msra.mxu0 0.0
        %1313 = vmatprep.subr.mxu0 0.0
        %1314 = vmatpush1.msra.mxu0 0.0
        %1315 = vmatprep.subr.mxu0 0.0
        %1316 = vmatpush1.msra.mxu0 0.0
        %1317 = vmatprep.subr.mxu0 0.0
        %1318 = vmatpush1.msra.mxu0 0.0
        %1319 = vmatprep.subr.mxu0 0.0
        %1320 = vmatpush1.msra.mxu0 0.0
        %1321 = vmatprep.subr.mxu0 0.0
        %1322 = vmatpush1.msra.mxu0 0.0
        %1323 = vmatprep.subr.mxu0 0.0
        %1324 = vmatpush1.msra.mxu0 0.0
        %1325 = vmatprep.subr.mxu0 0.0
        %1326 = vmatpush1.msra.mxu0 0.0
        %1327 = vmatprep.subr.mxu0 0.0
        %1328 = vmatpush1.msra.mxu0 0.0
        %1329 = vmatprep.subr.mxu0 0.0
        %1330 = vmatpush1.msra.mxu0 0.0
        %1331 = vmatprep.subr.mxu0 0.0
        %1332 = vmatpush1.msra.mxu0 0.0
        %1333 = vmatprep.mubr.f32.mxu0 0.0
        %1334 = vmatmul.mubr.f32.gmra.mrb[0].mxu0 %v1182
        %v1335 = vpop.f32.mrb[0].mxu0
        %v1336 = vadd.f32 %v1267, %v1335
        %v1337 = vpop.f32.mrb[0].mxu0
        %1338 = vdwg.mxu0
        %1340 = vrot.lane.b32.xlu0 %v1163, 112
        %v1341 = vpop.permute.xlu0 %1340
        %1343 = vrot.lane.b32.xlu0 %v1163, 96
        %v1344 = vpop.permute.xlu0 %1343
        %1346 = vrot.lane.b32.xlu0 %v1163, 80
        %v1347 = vpop.permute.xlu0 %1346
        %v1349 = vld [vmem:[%s904] sm:$0xff]
        %v1350 = vld [vmem:[%s913] sm:$0xff]
        %v1351 = vmul.f32 %v1163, %v1349
        %v1352 = vmul.f32 %v1341, %v1349
        %v1353 = vmul.f32 %v1344, %v1349
        %v1354 = vmul.f32 %v1347, %v1349
        %1356 = vrot.lane.b32.xlu0 %v1350, 8
        %v1357 = vpop.permute.xlu0 %1356
        %v1359 = vmul.f32 %v1163, %v1357
        %v1360 = vmul.f32 %v1341, %v1357
        %v1361 = vmul.f32 %v1344, %v1357
        %v1362 = vmul.f32 %v1347, %v1357
        %1367 = vrot.lane.b32.xlu0 %v1359, 120
        %v1368 = vpop.permute.xlu0 %1367
        %1369 = vrot.lane.b32.xlu0 %v1360, 120
        %v1370 = vpop.permute.xlu0 %1369
        %1371 = vrot.lane.b32.xlu0 %v1361, 120
        %v1372 = vpop.permute.xlu0 %1371
        %1373 = vrot.lane.b32.xlu0 %v1362, 120
        %v1374 = vpop.permute.xlu0 %1373
        %v1379 = vsub.f32 %v1351, %v1368
        %v1380 = vsub.f32 %v1352, %v1370
        %v1381 = vsub.f32 %v1353, %v1372
        %v1382 = vsub.f32 %v1354, %v1374
        %1383 = vrot.lane.b32.xlu0 %v1350, 120
        %v1384 = vpop.permute.xlu0 %1383
        %v1386 = vmul.f32 %v1163, %v1384
        %v1387 = vmul.f32 %v1341, %v1384
        %v1388 = vmul.f32 %v1344, %v1384
        %v1389 = vmul.f32 %v1347, %v1384
        %1394 = vrot.lane.b32.xlu0 %v1386, 8
        %v1395 = vpop.permute.xlu0 %1394
        %1396 = vrot.lane.b32.xlu0 %v1387, 8
        %v1397 = vpop.permute.xlu0 %1396
        %1398 = vrot.lane.b32.xlu0 %v1388, 8
        %v1399 = vpop.permute.xlu0 %1398
        %1400 = vrot.lane.b32.xlu0 %v1389, 8
        %v1401 = vpop.permute.xlu0 %1400
        %v1406 = vadd.f32 %v1351, %v1395
        %v1407 = vadd.f32 %v1352, %v1397
        %v1408 = vadd.f32 %v1353, %v1399
        %v1409 = vadd.f32 %v1354, %v1401
        %vm1410 = vcmask 64512
        %v1411 = vsel %vm1410, %v1379, %v1406
        %v1412 = vsel %vm1410, %v1380, %v1407
        %v1413 = vsel %vm1410, %v1381, %v1408
        %v1414 = vsel %vm1410, %v1382, %v1409
        %1416 = vrot.lane.b32.xlu0 %v1251, 112
        %v1417 = vpop.permute.xlu0 %1416
        %1419 = vrot.lane.b32.xlu0 %v1251, 96
        %v1420 = vpop.permute.xlu0 %1419
        %1422 = vrot.lane.b32.xlu0 %v1251, 80
        %v1423 = vpop.permute.xlu0 %1422
        %v1425 = vld [vmem:[%s922] sm:$0xff]
        %v1426 = vld [vmem:[%s931] sm:$0xff]
        %v1427 = vmul.f32 %v1251, %v1425
        %v1428 = vmul.f32 %v1417, %v1425
        %v1429 = vmul.f32 %v1420, %v1425
        %v1430 = vmul.f32 %v1423, %v1425
        %1432 = vrot.lane.b32.xlu0 %v1426, 8
        %v1433 = vpop.permute.xlu0 %1432
        %v1435 = vmul.f32 %v1251, %v1433
        %v1436 = vmul.f32 %v1417, %v1433
        %v1437 = vmul.f32 %v1420, %v1433
        %v1438 = vmul.f32 %v1423, %v1433
        %1443 = vrot.lane.b32.xlu0 %v1435, 120
        %v1444 = vpop.permute.xlu0 %1443
        %1445 = vrot.lane.b32.xlu0 %v1436, 120
        %v1446 = vpop.permute.xlu0 %1445
        %1447 = vrot.lane.b32.xlu0 %v1437, 120
        %v1448 = vpop.permute.xlu0 %1447
        %1449 = vrot.lane.b32.xlu0 %v1438, 120
        %v1450 = vpop.permute.xlu0 %1449
        %v1455 = vsub.f32 %v1427, %v1444
        %v1456 = vsub.f32 %v1428, %v1446
        %v1457 = vsub.f32 %v1429, %v1448
        %v1458 = vsub.f32 %v1430, %v1450
        %1459 = vrot.lane.b32.xlu0 %v1426, 120
        %v1460 = vpop.permute.xlu0 %1459
        %v1462 = vmul.f32 %v1251, %v1460
        %v1463 = vmul.f32 %v1417, %v1460
        %v1464 = vmul.f32 %v1420, %v1460
        %v1465 = vmul.f32 %v1423, %v1460
        %1470 = vrot.lane.b32.xlu0 %v1462, 8
        %v1471 = vpop.permute.xlu0 %1470
        %1472 = vrot.lane.b32.xlu0 %v1463, 8
        %v1473 = vpop.permute.xlu0 %1472
        %1474 = vrot.lane.b32.xlu0 %v1464, 8
        %v1475 = vpop.permute.xlu0 %1474
        %1476 = vrot.lane.b32.xlu0 %v1465, 8
        %v1477 = vpop.permute.xlu0 %1476
        %v1482 = vadd.f32 %v1427, %v1471
        %v1483 = vadd.f32 %v1428, %v1473
        %v1484 = vadd.f32 %v1429, %v1475
        %v1485 = vadd.f32 %v1430, %v1477
        %v1486 = vsel %vm1410, %v1455, %v1482
        %v1487 = vsel %vm1410, %v1456, %v1483
        %v1488 = vsel %vm1410, %v1457, %v1484
        %v1489 = vsel %vm1410, %v1458, %v1485
        %1491 = vrot.lane.b32.xlu0 %v1336, 112
        %v1492 = vpop.permute.xlu0 %1491
        %1494 = vrot.lane.b32.xlu0 %v1336, 96
        %v1495 = vpop.permute.xlu0 %1494
        %1497 = vrot.lane.b32.xlu0 %v1336, 80
        %v1498 = vpop.permute.xlu0 %1497
        %vm1500 = vcmask 130048
        %v1502 = vsel %vm1500, %v1411, 0
        %v1505 = vsel %vm1500, %v1486, 0
        %1507 = vmatprep.subr.mxu0 0.0
        %1508 = vmatpush1.xpose.msra.mxu0 %v1505
        %1509 = vmatprep.subr.mxu0 0.0
        %1510 = vmatpush1.xpose.msra.mxu0 0.0
        %1511 = vmatprep.subr.mxu0 0.0
        %1512 = vmatpush1.xpose.msra.mxu0 0.0
        %1513 = vmatprep.subr.mxu0 0.0
        %1514 = vmatpush1.xpose.msra.mxu0 0.0
        %1515 = vmatprep.subr.mxu0 0.0
        %1516 = vmatpush1.xpose.msra.mxu0 0.0
        %1517 = vmatprep.subr.mxu0 0.0
        %1518 = vmatpush1.xpose.msra.mxu0 0.0
        %1519 = vmatprep.subr.mxu0 0.0
        %1520 = vmatpush1.xpose.msra.mxu0 0.0
        %1521 = vmatprep.subr.mxu0 0.0
        %1522 = vmatpush1.xpose.msra.mxu0 0.0
        %1523 = vmatprep.subr.mxu0 0.0
        %1524 = vmatpush1.xpose.msra.mxu0 0.0
        %1525 = vmatprep.subr.mxu0 0.0
        %1526 = vmatpush1.xpose.msra.mxu0 0.0
        %1527 = vmatprep.subr.mxu0 0.0
        %1528 = vmatpush1.xpose.msra.mxu0 0.0
        %1529 = vmatprep.subr.mxu0 0.0
        %1530 = vmatpush1.xpose.msra.mxu0 0.0
        %1531 = vmatprep.subr.mxu0 0.0
        %1532 = vmatpush1.xpose.msra.mxu0 0.0
        %1533 = vmatprep.subr.mxu0 0.0
        %1534 = vmatpush1.xpose.msra.mxu0 0.0
        %1535 = vmatprep.subr.mxu0 0.0
        %1536 = vmatpush1.xpose.msra.mxu0 0.0
        %1537 = vmatprep.subr.mxu0 0.0
        %1538 = vmatpush1.xpose.msra.mxu0 0.0
        %1539 = vmatprep.subr.mxu0 0.0
        %1540 = vmatpush1.xpose.msra.mxu0 0.0
        %1541 = vmatprep.subr.mxu0 0.0
        %1542 = vmatpush1.xpose.msra.mxu0 0.0
        %1543 = vmatprep.subr.mxu0 0.0
        %1544 = vmatpush1.xpose.msra.mxu0 0.0
        %1545 = vmatprep.subr.mxu0 0.0
        %1546 = vmatpush1.xpose.msra.mxu0 0.0
        %1547 = vmatprep.subr.mxu0 0.0
        %1548 = vmatpush1.xpose.msra.mxu0 0.0
        %1549 = vmatprep.subr.mxu0 0.0
        %1550 = vmatpush1.xpose.msra.mxu0 0.0
        %1551 = vmatprep.subr.mxu0 0.0
        %1552 = vmatpush1.xpose.msra.mxu0 0.0
        %1553 = vmatprep.subr.mxu0 0.0
        %1554 = vmatpush1.xpose.msra.mxu0 0.0
        %1555 = vmatprep.subr.mxu0 0.0
        %1556 = vmatpush1.xpose.msra.mxu0 0.0
        %1557 = vmatprep.subr.mxu0 0.0
        %1558 = vmatpush1.xpose.msra.mxu0 0.0
        %1559 = vmatprep.subr.mxu0 0.0
        %1560 = vmatpush1.xpose.msra.mxu0 0.0
        %1561 = vmatprep.subr.mxu0 0.0
        %1562 = vmatpush1.xpose.msra.mxu0 0.0
        %1563 = vmatprep.subr.mxu0 0.0
        %1564 = vmatpush1.xpose.msra.mxu0 0.0
        %1565 = vmatprep.subr.mxu0 0.0
        %1566 = vmatpush1.xpose.msra.mxu0 0.0
        %1567 = vmatprep.subr.mxu0 0.0
        %1568 = vmatpush1.xpose.msra.mxu0 0.0
        %1569 = vmatprep.subr.mxu0 0.0
        %1570 = vmatpush1.xpose.msra.mxu0 0.0
        %1571 = vmatprep.mubr.f32.mxu0 0.0
        %1572 = vmatmul.mubr.f32.gmra.mrb[0].mxu0 %v1502
        %v1573 = vpop.f32.mrb[0].mxu0
        %v1574 = vadd.f32 0.0, %v1573
        %v1575 = vpop.f32.mrb[0].mxu0
        %1576 = vdwg.mxu0
        %v1578 = vsel %vm1500, %v1412, 0
        %v1581 = vsel %vm1500, %v1487, 0
        %1583 = vmatprep.subr.mxu0 0.0
        %1584 = vmatpush1.xpose.msra.mxu0 %v1581
        %1585 = vmatprep.subr.mxu0 0.0
        %1586 = vmatpush1.xpose.msra.mxu0 0.0
        %1587 = vmatprep.subr.mxu0 0.0
        %1588 = vmatpush1.xpose.msra.mxu0 0.0
        %1589 = vmatprep.subr.mxu0 0.0
        %1590 = vmatpush1.xpose.msra.mxu0 0.0
        %1591 = vmatprep.subr.mxu0 0.0
        %1592 = vmatpush1.xpose.msra.mxu0 0.0
        %1593 = vmatprep.subr.mxu0 0.0
        %1594 = vmatpush1.xpose.msra.mxu0 0.0
        %1595 = vmatprep.subr.mxu0 0.0
        %1596 = vmatpush1.xpose.msra.mxu0 0.0
        %1597 = vmatprep.subr.mxu0 0.0
        %1598 = vmatpush1.xpose.msra.mxu0 0.0
        %1599 = vmatprep.subr.mxu0 0.0
        %1600 = vmatpush1.xpose.msra.mxu0 0.0
        %1601 = vmatprep.subr.mxu0 0.0
        %1602 = vmatpush1.xpose.msra.mxu0 0.0
        %1603 = vmatprep.subr.mxu0 0.0
        %1604 = vmatpush1.xpose.msra.mxu0 0.0
        %1605 = vmatprep.subr.mxu0 0.0
        %1606 = vmatpush1.xpose.msra.mxu0 0.0
        %1607 = vmatprep.subr.mxu0 0.0
        %1608 = vmatpush1.xpose.msra.mxu0 0.0
        %1609 = vmatprep.subr.mxu0 0.0
        %1610 = vmatpush1.xpose.msra.mxu0 0.0
        %1611 = vmatprep.subr.mxu0 0.0
        %1612 = vmatpush1.xpose.msra.mxu0 0.0
        %1613 = vmatprep.subr.mxu0 0.0
        %1614 = vmatpush1.xpose.msra.mxu0 0.0
        %1615 = vmatprep.subr.mxu0 0.0
        %1616 = vmatpush1.xpose.msra.mxu0 0.0
        %1617 = vmatprep.subr.mxu0 0.0
        %1618 = vmatpush1.xpose.msra.mxu0 0.0
        %1619 = vmatprep.subr.mxu0 0.0
        %1620 = vmatpush1.xpose.msra.mxu0 0.0
        %1621 = vmatprep.subr.mxu0 0.0
        %1622 = vmatpush1.xpose.msra.mxu0 0.0
        %1623 = vmatprep.subr.mxu0 0.0
        %1624 = vmatpush1.xpose.msra.mxu0 0.0
        %1625 = vmatprep.subr.mxu0 0.0
        %1626 = vmatpush1.xpose.msra.mxu0 0.0
        %1627 = vmatprep.subr.mxu0 0.0
        %1628 = vmatpush1.xpose.msra.mxu0 0.0
        %1629 = vmatprep.subr.mxu0 0.0
        %1630 = vmatpush1.xpose.msra.mxu0 0.0
        %1631 = vmatprep.subr.mxu0 0.0
        %1632 = vmatpush1.xpose.msra.mxu0 0.0
        %1633 = vmatprep.subr.mxu0 0.0
        %1634 = vmatpush1.xpose.msra.mxu0 0.0
        %1635 = vmatprep.subr.mxu0 0.0
        %1636 = vmatpush1.xpose.msra.mxu0 0.0
        %1637 = vmatprep.subr.mxu0 0.0
        %1638 = vmatpush1.xpose.msra.mxu0 0.0
        %1639 = vmatprep.subr.mxu0 0.0
        %1640 = vmatpush1.xpose.msra.mxu0 0.0
        %1641 = vmatprep.subr.mxu0 0.0
        %1642 = vmatpush1.xpose.msra.mxu0 0.0
        %1643 = vmatprep.subr.mxu0 0.0
        %1644 = vmatpush1.xpose.msra.mxu0 0.0
        %1645 = vmatprep.subr.mxu0 0.0
        %1646 = vmatpush1.xpose.msra.mxu0 0.0
        %1647 = vmatprep.mubr.f32.mxu0 0.0
        %1648 = vmatmul.mubr.f32.gmra.mrb[0].mxu0 %v1578
        %v1649 = vpop.f32.mrb[0].mxu0
        %v1650 = vadd.f32 0.0, %v1649
        %v1651 = vpop.f32.mrb[0].mxu0
        %1652 = vdwg.mxu0
        %v1654 = vsel %vm1500, %v1413, 0
        %v1657 = vsel %vm1500, %v1488, 0
        %1659 = vmatprep.subr.mxu0 0.0
        %1660 = vmatpush1.xpose.msra.mxu0 %v1657
        %1661 = vmatprep.subr.mxu0 0.0
        %1662 = vmatpush1.xpose.msra.mxu0 0.0
        %1663 = vmatprep.subr.mxu0 0.0
        %1664 = vmatpush1.xpose.msra.mxu0 0.0
        %1665 = vmatprep.subr.mxu0 0.0
        %1666 = vmatpush1.xpose.msra.mxu0 0.0
        %1667 = vmatprep.subr.mxu0 0.0
        %1668 = vmatpush1.xpose.msra.mxu0 0.0
        %1669 = vmatprep.subr.mxu0 0.0
        %1670 = vmatpush1.xpose.msra.mxu0 0.0
        %1671 = vmatprep.subr.mxu0 0.0
        %1672 = vmatpush1.xpose.msra.mxu0 0.0
        %1673 = vmatprep.subr.mxu0 0.0
        %1674 = vmatpush1.xpose.msra.mxu0 0.0
        %1675 = vmatprep.subr.mxu0 0.0
        %1676 = vmatpush1.xpose.msra.mxu0 0.0
        %1677 = vmatprep.subr.mxu0 0.0
        %1678 = vmatpush1.xpose.msra.mxu0 0.0
        %1679 = vmatprep.subr.mxu0 0.0
        %1680 = vmatpush1.xpose.msra.mxu0 0.0
        %1681 = vmatprep.subr.mxu0 0.0
        %1682 = vmatpush1.xpose.msra.mxu0 0.0
        %1683 = vmatprep.subr.mxu0 0.0
        %1684 = vmatpush1.xpose.msra.mxu0 0.0
        %1685 = vmatprep.subr.mxu0 0.0
        %1686 = vmatpush1.xpose.msra.mxu0 0.0
        %1687 = vmatprep.subr.mxu0 0.0
        %1688 = vmatpush1.xpose.msra.mxu0 0.0
        %1689 = vmatprep.subr.mxu0 0.0
        %1690 = vmatpush1.xpose.msra.mxu0 0.0
        %1691 = vmatprep.subr.mxu0 0.0
        %1692 = vmatpush1.xpose.msra.mxu0 0.0
        %1693 = vmatprep.subr.mxu0 0.0
        %1694 = vmatpush1.xpose.msra.mxu0 0.0
        %1695 = vmatprep.subr.mxu0 0.0
        %1696 = vmatpush1.xpose.msra.mxu0 0.0
        %1697 = vmatprep.subr.mxu0 0.0
        %1698 = vmatpush1.xpose.msra.mxu0 0.0
        %1699 = vmatprep.subr.mxu0 0.0
        %1700 = vmatpush1.xpose.msra.mxu0 0.0
        %1701 = vmatprep.subr.mxu0 0.0
        %1702 = vmatpush1.xpose.msra.mxu0 0.0
        %1703 = vmatprep.subr.mxu0 0.0
        %1704 = vmatpush1.xpose.msra.mxu0 0.0
        %1705 = vmatprep.subr.mxu0 0.0
        %1706 = vmatpush1.xpose.msra.mxu0 0.0
        %1707 = vmatprep.subr.mxu0 0.0
        %1708 = vmatpush1.xpose.msra.mxu0 0.0
        %1709 = vmatprep.subr.mxu0 0.0
        %1710 = vmatpush1.xpose.msra.mxu0 0.0
        %1711 = vmatprep.subr.mxu0 0.0
        %1712 = vmatpush1.xpose.msra.mxu0 0.0
        %1713 = vmatprep.subr.mxu0 0.0
        %1714 = vmatpush1.xpose.msra.mxu0 0.0
        %1715 = vmatprep.subr.mxu0 0.0
        %1716 = vmatpush1.xpose.msra.mxu0 0.0
        %1717 = vmatprep.subr.mxu0 0.0
        %1718 = vmatpush1.xpose.msra.mxu0 0.0
        %1719 = vmatprep.subr.mxu0 0.0
        %1720 = vmatpush1.xpose.msra.mxu0 0.0
        %1721 = vmatprep.subr.mxu0 0.0
        %1722 = vmatpush1.xpose.msra.mxu0 0.0
        %1723 = vmatprep.mubr.f32.mxu0 0.0
        %1724 = vmatmul.mubr.f32.gmra.mrb[0].mxu0 %v1654
        %v1725 = vpop.f32.mrb[0].mxu0
        %v1726 = vadd.f32 0.0, %v1725
        %v1727 = vpop.f32.mrb[0].mxu0
        %1728 = vdwg.mxu0
        %v1730 = vsel %vm1500, %v1414, 0
        %v1733 = vsel %vm1500, %v1489, 0
        %1735 = vmatprep.subr.mxu0 0.0
        %1736 = vmatpush1.xpose.msra.mxu0 %v1733
        %1737 = vmatprep.subr.mxu0 0.0
        %1738 = vmatpush1.xpose.msra.mxu0 0.0
        %1739 = vmatprep.subr.mxu0 0.0
        %1740 = vmatpush1.xpose.msra.mxu0 0.0
        %1741 = vmatprep.subr.mxu0 0.0
        %1742 = vmatpush1.xpose.msra.mxu0 0.0
        %1743 = vmatprep.subr.mxu0 0.0
        %1744 = vmatpush1.xpose.msra.mxu0 0.0
        %1745 = vmatprep.subr.mxu0 0.0
        %1746 = vmatpush1.xpose.msra.mxu0 0.0
        %1747 = vmatprep.subr.mxu0 0.0
        %1748 = vmatpush1.xpose.msra.mxu0 0.0
        %1749 = vmatprep.subr.mxu0 0.0
        %1750 = vmatpush1.xpose.msra.mxu0 0.0
        %1751 = vmatprep.subr.mxu0 0.0
        %1752 = vmatpush1.xpose.msra.mxu0 0.0
        %1753 = vmatprep.subr.mxu0 0.0
        %1754 = vmatpush1.xpose.msra.mxu0 0.0
        %1755 = vmatprep.subr.mxu0 0.0
        %1756 = vmatpush1.xpose.msra.mxu0 0.0
        %1757 = vmatprep.subr.mxu0 0.0
        %1758 = vmatpush1.xpose.msra.mxu0 0.0
        %1759 = vmatprep.subr.mxu0 0.0
        %1760 = vmatpush1.xpose.msra.mxu0 0.0
        %1761 = vmatprep.subr.mxu0 0.0
        %1762 = vmatpush1.xpose.msra.mxu0 0.0
        %1763 = vmatprep.subr.mxu0 0.0
        %1764 = vmatpush1.xpose.msra.mxu0 0.0
        %1765 = vmatprep.subr.mxu0 0.0
        %1766 = vmatpush1.xpose.msra.mxu0 0.0
        %1767 = vmatprep.subr.mxu0 0.0
        %1768 = vmatpush1.xpose.msra.mxu0 0.0
        %1769 = vmatprep.subr.mxu0 0.0
        %1770 = vmatpush1.xpose.msra.mxu0 0.0
        %1771 = vmatprep.subr.mxu0 0.0
        %1772 = vmatpush1.xpose.msra.mxu0 0.0
        %1773 = vmatprep.subr.mxu0 0.0
        %1774 = vmatpush1.xpose.msra.mxu0 0.0
        %1775 = vmatprep.subr.mxu0 0.0
        %1776 = vmatpush1.xpose.msra.mxu0 0.0
        %1777 = vmatprep.subr.mxu0 0.0
        %1778 = vmatpush1.xpose.msra.mxu0 0.0
        %1779 = vmatprep.subr.mxu0 0.0
        %1780 = vmatpush1.xpose.msra.mxu0 0.0
        %1781 = vmatprep.subr.mxu0 0.0
        %1782 = vmatpush1.xpose.msra.mxu0 0.0
        %1783 = vmatprep.subr.mxu0 0.0
        %1784 = vmatpush1.xpose.msra.mxu0 0.0
        %1785 = vmatprep.subr.mxu0 0.0
        %1786 = vmatpush1.xpose.msra.mxu0 0.0
        %1787 = vmatprep.subr.mxu0 0.0
        %1788 = vmatpush1.xpose.msra.mxu0 0.0
        %1789 = vmatprep.subr.mxu0 0.0
        %1790 = vmatpush1.xpose.msra.mxu0 0.0
        %1791 = vmatprep.subr.mxu0 0.0
        %1792 = vmatpush1.xpose.msra.mxu0 0.0
        %1793 = vmatprep.subr.mxu0 0.0
        %1794 = vmatpush1.xpose.msra.mxu0 0.0
        %1795 = vmatprep.subr.mxu0 0.0
        %1796 = vmatpush1.xpose.msra.mxu0 0.0
        %1797 = vmatprep.subr.mxu0 0.0
        %1798 = vmatpush1.xpose.msra.mxu0 0.0
        %1799 = vmatprep.mubr.f32.mxu0 0.0
        %1800 = vmatmul.mubr.f32.gmra.mrb[0].mxu0 %v1730
        %v1801 = vpop.f32.mrb[0].mxu0
        %v1802 = vadd.f32 0.0, %v1801
        %v1803 = vpop.f32.mrb[0].mxu0
        %1804 = vdwg.mxu0
        %v1805 = vmul.f32 %v1574, 0.25
        %v1806 = vmul.f32 %v1650, 0.25
        %v1807 = vmul.f32 %v1726, 0.25
        %v1808 = vmul.f32 %v1802, 0.25
        %v1809 = vsel %vm1410, %v1805, -inf
        %1810 = vmax.xlane.f32.xlu0 %v1809
        %v1811 = vpop.xlane.xlu0 %1810
        %v1812 = vsel %vm1410, %v1806, -inf
        %1813 = vmax.xlane.f32.xlu0 %v1812
        %v1814 = vpop.xlane.xlu0 %1813
        %v1815 = vsel %vm1410, %v1807, -inf
        %1816 = vmax.xlane.f32.xlu0 %v1815
        %v1817 = vpop.xlane.xlu0 %1816
        %v1818 = vsel %vm1410, %v1808, -inf
        %1819 = vmax.xlane.f32.xlu0 %v1818
        %v1820 = vpop.xlane.xlu0 %1819
        %v1821 = vsub.f32 %v1805, %v1811
        %v1822 = vsub.f32 %v1806, %v1814
        %v1823 = vsub.f32 %v1807, %v1817
        %v1824 = vsub.f32 %v1808, %v1820
        %v1825 = vmul.f32 %v1821, 1.442695
        %v1826 = vpow.pop %v1825
        %v1827 = vmul.f32 %v1822, 1.442695
        %v1828 = vpow.pop %v1827
        %v1829 = vmul.f32 %v1823, 1.442695
        %v1830 = vpow.pop %v1829
        %v1831 = vmul.f32 %v1824, 1.442695
        %v1832 = vpow.pop %v1831
        %v1833 = vsel %vm1410, %v1826, 0.0
        %1834 = vadd.xlane.f32.xlu0 %v1833
        %v1835 = vpop.xlane.xlu0 %1834
        %v1836 = vsel %vm1410, %v1828, 0.0
        %1837 = vadd.xlane.f32.xlu0 %v1836
        %v1838 = vpop.xlane.xlu0 %1837
        %v1839 = vsel %vm1410, %v1830, 0.0
        %1840 = vadd.xlane.f32.xlu0 %v1839
        %v1841 = vpop.xlane.xlu0 %1840
        %v1842 = vsel %vm1410, %v1832, 0.0
        %1843 = vadd.xlane.f32.xlu0 %v1842
        %v1844 = vpop.xlane.xlu0 %1843
        %v1845 = vrcp.pop %v1835
        %v1846 = vmul.f32 %v1826, %v1845
        %v1847 = vrcp.pop %v1838
        %v1848 = vmul.f32 %v1828, %v1847
        %v1849 = vrcp.pop %v1841
        %v1850 = vmul.f32 %v1830, %v1849
        %v1851 = vrcp.pop %v1844
        %v1852 = vmul.f32 %v1832, %v1851
        %v1854 = vsel %vm1410, %v1846, 0
        %1856 = vmatprep.subr.mxu0 0.0
        %1857 = vmatpush1.msra.mxu0 %v1336
        %1858 = vmatprep.subr.mxu0 0.0
        %1859 = vmatpush1.msra.mxu0 0.0
        %1860 = vmatprep.subr.mxu0 0.0
        %1861 = vmatpush1.msra.mxu0 0.0
        %1862 = vmatprep.subr.mxu0 0.0
        %1863 = vmatpush1.msra.mxu0 0.0
        %1864 = vmatprep.subr.mxu0 0.0
        %1865 = vmatpush1.msra.mxu0 0.0
        %1866 = vmatprep.subr.mxu0 0.0
        %1867 = vmatpush1.msra.mxu0 0.0
        %1868 = vmatprep.subr.mxu0 0.0
        %1869 = vmatpush1.msra.mxu0 0.0
        %1870 = vmatprep.subr.mxu0 0.0
        %1871 = vmatpush1.msra.mxu0 0.0
        %1872 = vmatprep.subr.mxu0 0.0
        %1873 = vmatpush1.msra.mxu0 0.0
        %1874 = vmatprep.subr.mxu0 0.0
        %1875 = vmatpush1.msra.mxu0 0.0
        %1876 = vmatprep.subr.mxu0 0.0
        %1877 = vmatpush1.msra.mxu0 0.0
        %1878 = vmatprep.subr.mxu0 0.0
        %1879 = vmatpush1.msra.mxu0 0.0
        %1880 = vmatprep.subr.mxu0 0.0
        %1881 = vmatpush1.msra.mxu0 0.0
        %1882 = vmatprep.subr.mxu0 0.0
        %1883 = vmatpush1.msra.mxu0 0.0
        %1884 = vmatprep.subr.mxu0 0.0
        %1885 = vmatpush1.msra.mxu0 0.0
        %1886 = vmatprep.subr.mxu0 0.0
        %1887 = vmatpush1.msra.mxu0 0.0
        %1888 = vmatprep.subr.mxu0 0.0
        %1889 = vmatpush1.msra.mxu0 0.0
        %1890 = vmatprep.subr.mxu0 0.0
        %1891 = vmatpush1.msra.mxu0 0.0
        %1892 = vmatprep.subr.mxu0 0.0
        %1893 = vmatpush1.msra.mxu0 0.0
        %1894 = vmatprep.subr.mxu0 0.0
        %1895 = vmatpush1.msra.mxu0 0.0
        %1896 = vmatprep.subr.mxu0 0.0
        %1897 = vmatpush1.msra.mxu0 0.0
        %1898 = vmatprep.subr.mxu0 0.0
        %1899 = vmatpush1.msra.mxu0 0.0
        %1900 = vmatprep.subr.mxu0 0.0
        %1901 = vmatpush1.msra.mxu0 0.0
        %1902 = vmatprep.subr.mxu0 0.0
        %1903 = vmatpush1.msra.mxu0 0.0
        %1904 = vmatprep.subr.mxu0 0.0
        %1905 = vmatpush1.msra.mxu0 0.0
        %1906 = vmatprep.subr.mxu0 0.0
        %1907 = vmatpush1.msra.mxu0 0.0
        %1908 = vmatprep.subr.mxu0 0.0
        %1909 = vmatpush1.msra.mxu0 0.0
        %1910 = vmatprep.subr.mxu0 0.0
        %1911 = vmatpush1.msra.mxu0 0.0
        %1912 = vmatprep.subr.mxu0 0.0
        %1913 = vmatpush1.msra.mxu0 0.0
        %1914 = vmatprep.subr.mxu0 0.0
        %1915 = vmatpush1.msra.mxu0 0.0
        %1916 = vmatprep.subr.mxu0 0.0
        %1917 = vmatpush1.msra.mxu0 0.0
        %1918 = vmatprep.subr.mxu0 0.0
        %1919 = vmatpush1.msra.mxu0 0.0
        %1920 = vmatprep.mubr.f32.mxu0 0.0
        %1921 = vmatmul.mubr.f32.gmra.mrb[0].mxu0 %v1854
        %v1922 = vpop.f32.mrb[0].mxu0
        %v1923 = vadd.f32 0.0, %v1922
        %v1924 = vpop.f32.mrb[0].mxu0
        %1925 = vdwg.mxu0
        %v1927 = vsel %vm1410, %v1848, 0
        %1929 = vmatprep.subr.mxu0 0.0
        %1930 = vmatpush1.msra.mxu0 %v1492
        %1931 = vmatprep.subr.mxu0 0.0
        %1932 = vmatpush1.msra.mxu0 0.0
        %1933 = vmatprep.subr.mxu0 0.0
        %1934 = vmatpush1.msra.mxu0 0.0
        %1935 = vmatprep.subr.mxu0 0.0
        %1936 = vmatpush1.msra.mxu0 0.0
        %1937 = vmatprep.subr.mxu0 0.0
        %1938 = vmatpush1.msra.mxu0 0.0
        %1939 = vmatprep.subr.mxu0 0.0
        %1940 = vmatpush1.msra.mxu0 0.0
        %1941 = vmatprep.subr.mxu0 0.0
        %1942 = vmatpush1.msra.mxu0 0.0
        %1943 = vmatprep.subr.mxu0 0.0
        %1944 = vmatpush1.msra.mxu0 0.0
        %1945 = vmatprep.subr.mxu0 0.0
        %1946 = vmatpush1.msra.mxu0 0.0
        %1947 = vmatprep.subr.mxu0 0.0
        %1948 = vmatpush1.msra.mxu0 0.0
        %1949 = vmatprep.subr.mxu0 0.0
        %1950 = vmatpush1.msra.mxu0 0.0
        %1951 = vmatprep.subr.mxu0 0.0
        %1952 = vmatpush1.msra.mxu0 0.0
        %1953 = vmatprep.subr.mxu0 0.0
        %1954 = vmatpush1.msra.mxu0 0.0
        %1955 = vmatprep.subr.mxu0 0.0
        %1956 = vmatpush1.msra.mxu0 0.0
        %1957 = vmatprep.subr.mxu0 0.0
        %1958 = vmatpush1.msra.mxu0 0.0
        %1959 = vmatprep.subr.mxu0 0.0
        %1960 = vmatpush1.msra.mxu0 0.0
        %1961 = vmatprep.subr.mxu0 0.0
        %1962 = vmatpush1.msra.mxu0 0.0
        %1963 = vmatprep.subr.mxu0 0.0
        %1964 = vmatpush1.msra.mxu0 0.0
        %1965 = vmatprep.subr.mxu0 0.0
        %1966 = vmatpush1.msra.mxu0 0.0
        %1967 = vmatprep.subr.mxu0 0.0
        %1968 = vmatpush1.msra.mxu0 0.0
        %1969 = vmatprep.subr.mxu0 0.0
        %1970 = vmatpush1.msra.mxu0 0.0
        %1971 = vmatprep.subr.mxu0 0.0
        %1972 = vmatpush1.msra.mxu0 0.0
        %1973 = vmatprep.subr.mxu0 0.0
        %1974 = vmatpush1.msra.mxu0 0.0
        %1975 = vmatprep.subr.mxu0 0.0
        %1976 = vmatpush1.msra.mxu0 0.0
        %1977 = vmatprep.subr.mxu0 0.0
        %1978 = vmatpush1.msra.mxu0 0.0
        %1979 = vmatprep.subr.mxu0 0.0
        %1980 = vmatpush1.msra.mxu0 0.0
        %1981 = vmatprep.subr.mxu0 0.0
        %1982 = vmatpush1.msra.mxu0 0.0
        %1983 = vmatprep.subr.mxu0 0.0
        %1984 = vmatpush1.msra.mxu0 0.0
        %1985 = vmatprep.subr.mxu0 0.0
        %1986 = vmatpush1.msra.mxu0 0.0
        %1987 = vmatprep.subr.mxu0 0.0
        %1988 = vmatpush1.msra.mxu0 0.0
        %1989 = vmatprep.subr.mxu0 0.0
        %1990 = vmatpush1.msra.mxu0 0.0
        %1991 = vmatprep.subr.mxu0 0.0
        %1992 = vmatpush1.msra.mxu0 0.0
        %1993 = vmatprep.mubr.f32.mxu0 0.0
        %1994 = vmatmul.mubr.f32.gmra.mrb[0].mxu0 %v1927
        %v1995 = vpop.f32.mrb[0].mxu0
        %v1996 = vadd.f32 0.0, %v1995
        %v1997 = vpop.f32.mrb[0].mxu0
        %1998 = vdwg.mxu0
        %v2000 = vsel %vm1410, %v1850, 0
        %2002 = vmatprep.subr.mxu0 0.0
        %2003 = vmatpush1.msra.mxu0 %v1495
        %2004 = vmatprep.subr.mxu0 0.0
        %2005 = vmatpush1.msra.mxu0 0.0
        %2006 = vmatprep.subr.mxu0 0.0
        %2007 = vmatpush1.msra.mxu0 0.0
        %2008 = vmatprep.subr.mxu0 0.0
        %2009 = vmatpush1.msra.mxu0 0.0
        %2010 = vmatprep.subr.mxu0 0.0
        %2011 = vmatpush1.msra.mxu0 0.0
        %2012 = vmatprep.subr.mxu0 0.0
        %2013 = vmatpush1.msra.mxu0 0.0
        %2014 = vmatprep.subr.mxu0 0.0
        %2015 = vmatpush1.msra.mxu0 0.0
        %2016 = vmatprep.subr.mxu0 0.0
        %2017 = vmatpush1.msra.mxu0 0.0
        %2018 = vmatprep.subr.mxu0 0.0
        %2019 = vmatpush1.msra.mxu0 0.0
        %2020 = vmatprep.subr.mxu0 0.0
        %2021 = vmatpush1.msra.mxu0 0.0
        %2022 = vmatprep.subr.mxu0 0.0
        %2023 = vmatpush1.msra.mxu0 0.0
        %2024 = vmatprep.subr.mxu0 0.0
        %2025 = vmatpush1.msra.mxu0 0.0
        %2026 = vmatprep.subr.mxu0 0.0
        %2027 = vmatpush1.msra.mxu0 0.0
        %2028 = vmatprep.subr.mxu0 0.0
        %2029 = vmatpush1.msra.mxu0 0.0
        %2030 = vmatprep.subr.mxu0 0.0
        %2031 = vmatpush1.msra.mxu0 0.0
        %2032 = vmatprep.subr.mxu0 0.0
        %2033 = vmatpush1.msra.mxu0 0.0
        %2034 = vmatprep.subr.mxu0 0.0
        %2035 = vmatpush1.msra.mxu0 0.0
        %2036 = vmatprep.subr.mxu0 0.0
        %2037 = vmatpush1.msra.mxu0 0.0
        %2038 = vmatprep.subr.mxu0 0.0
        %2039 = vmatpush1.msra.mxu0 0.0
        %2040 = vmatprep.subr.mxu0 0.0
        %2041 = vmatpush1.msra.mxu0 0.0
        %2042 = vmatprep.subr.mxu0 0.0
        %2043 = vmatpush1.msra.mxu0 0.0
        %2044 = vmatprep.subr.mxu0 0.0
        %2045 = vmatpush1.msra.mxu0 0.0
        %2046 = vmatprep.subr.mxu0 0.0
        %2047 = vmatpush1.msra.mxu0 0.0
        %2048 = vmatprep.subr.mxu0 0.0
        %2049 = vmatpush1.msra.mxu0 0.0
        %2050 = vmatprep.subr.mxu0 0.0
        %2051 = vmatpush1.msra.mxu0 0.0
        %2052 = vmatprep.subr.mxu0 0.0
        %2053 = vmatpush1.msra.mxu0 0.0
        %2054 = vmatprep.subr.mxu0 0.0
        %2055 = vmatpush1.msra.mxu0 0.0
        %2056 = vmatprep.subr.mxu0 0.0
        %2057 = vmatpush1.msra.mxu0 0.0
        %2058 = vmatprep.subr.mxu0 0.0
        %2059 = vmatpush1.msra.mxu0 0.0
        %2060 = vmatprep.subr.mxu0 0.0
        %2061 = vmatpush1.msra.mxu0 0.0
        %2062 = vmatprep.subr.mxu0 0.0
        %2063 = vmatpush1.msra.mxu0 0.0
        %2064 = vmatprep.subr.mxu0 0.0
        %2065 = vmatpush1.msra.mxu0 0.0
        %2066 = vmatprep.mubr.f32.mxu0 0.0
        %2067 = vmatmul.mubr.f32.gmra.mrb[0].mxu0 %v2000
        %v2068 = vpop.f32.mrb[0].mxu0
        %v2069 = vadd.f32 0.0, %v2068
        %v2070 = vpop.f32.mrb[0].mxu0
        %2071 = vdwg.mxu0
        %v2073 = vsel %vm1410, %v1852, 0
        %2075 = vmatprep.subr.mxu0 0.0
        %2076 = vmatpush1.msra.mxu0 %v1498
        %2077 = vmatprep.subr.mxu0 0.0
        %2078 = vmatpush1.msra.mxu0 0.0
        %2079 = vmatprep.subr.mxu0 0.0
        %2080 = vmatpush1.msra.mxu0 0.0
        %2081 = vmatprep.subr.mxu0 0.0
        %2082 = vmatpush1.msra.mxu0 0.0
        %2083 = vmatprep.subr.mxu0 0.0
        %2084 = vmatpush1.msra.mxu0 0.0
        %2085 = vmatprep.subr.mxu0 0.0
        %2086 = vmatpush1.msra.mxu0 0.0
        %2087 = vmatprep.subr.mxu0 0.0
        %2088 = vmatpush1.msra.mxu0 0.0
        %2089 = vmatprep.subr.mxu0 0.0
        %2090 = vmatpush1.msra.mxu0 0.0
        %2091 = vmatprep.subr.mxu0 0.0
        %2092 = vmatpush1.msra.mxu0 0.0
        %2093 = vmatprep.subr.mxu0 0.0
        %2094 = vmatpush1.msra.mxu0 0.0
        %2095 = vmatprep.subr.mxu0 0.0
        %2096 = vmatpush1.msra.mxu0 0.0
        %2097 = vmatprep.subr.mxu0 0.0
        %2098 = vmatpush1.msra.mxu0 0.0
        %2099 = vmatprep.subr.mxu0 0.0
        %2100 = vmatpush1.msra.mxu0 0.0
        %2101 = vmatprep.subr.mxu0 0.0
        %2102 = vmatpush1.msra.mxu0 0.0
        %2103 = vmatprep.subr.mxu0 0.0
        %2104 = vmatpush1.msra.mxu0 0.0
        %2105 = vmatprep.subr.mxu0 0.0
        %2106 = vmatpush1.msra.mxu0 0.0
        %2107 = vmatprep.subr.mxu0 0.0
        %2108 = vmatpush1.msra.mxu0 0.0
        %2109 = vmatprep.subr.mxu0 0.0
        %2110 = vmatpush1.msra.mxu0 0.0
        %2111 = vmatprep.subr.mxu0 0.0
        %2112 = vmatpush1.msra.mxu0 0.0
        %2113 = vmatprep.subr.mxu0 0.0
        %2114 = vmatpush1.msra.mxu0 0.0
        %2115 = vmatprep.subr.mxu0 0.0
        %2116 = vmatpush1.msra.mxu0 0.0
        %2117 = vmatprep.subr.mxu0 0.0
        %2118 = vmatpush1.msra.mxu0 0.0
        %2119 = vmatprep.subr.mxu0 0.0
        %2120 = vmatpush1.msra.mxu0 0.0
        %2121 = vmatprep.subr.mxu0 0.0
        %2122 = vmatpush1.msra.mxu0 0.0
        %2123 = vmatprep.subr.mxu0 0.0
        %2124 = vmatpush1.msra.mxu0 0.0
        %2125 = vmatprep.subr.mxu0 0.0
        %2126 = vmatpush1.msra.mxu0 0.0
        %2127 = vmatprep.subr.mxu0 0.0
        %2128 = vmatpush1.msra.mxu0 0.0
        %2129 = vmatprep.subr.mxu0 0.0
        %2130 = vmatpush1.msra.mxu0 0.0
        %2131 = vmatprep.subr.mxu0 0.0
        %2132 = vmatpush1.msra.mxu0 0.0
        %2133 = vmatprep.subr.mxu0 0.0
        %2134 = vmatpush1.msra.mxu0 0.0
        %2135 = vmatprep.subr.mxu0 0.0
        %2136 = vmatpush1.msra.mxu0 0.0
        %2137 = vmatprep.subr.mxu0 0.0
        %2138 = vmatpush1.msra.mxu0 0.0
        %2139 = vmatprep.mubr.f32.mxu0 0.0
        %2140 = vmatmul.mubr.f32.gmra.mrb[0].mxu0 %v2073
        %v2141 = vpop.f32.mrb[0].mxu0
        %v2142 = vadd.f32 0.0, %v2141
        %v2143 = vpop.f32.mrb[0].mxu0
        %2144 = vdwg.mxu0
        %2146 = vrot.lane.b32.xlu0 %v1996, 16
        %v2147 = vpop.permute.xlu0 %2146
        %2150 = vrot.lane.b32.xlu0 %v2069, 32
        %v2151 = vpop.permute.xlu0 %2150
        %2154 = vrot.lane.b32.xlu0 %v2142, 48
        %v2155 = vpop.permute.xlu0 %2154
        %v2157 = vsel %vm1500, %v1923, %v2147
        %vm2158 = vcmask 261120
        %v2159 = vsel %vm2158, %v2157, %v2151
        %vm2160 = vcmask 392192
        %v2161 = vsel %vm2160, %v2159, %v2155
        %v2162 = vld [vmem:[#allocation22] sm:$0xff]
        %v2163 = vld [vmem:[#allocation22 + $0x8] sm:$0xff]
        %v2164 = vld [vmem:[#allocation22 + $0x10] sm:$0xff]
        %v2165 = vld [vmem:[#allocation22 + $0x18] sm:$0xff]
        %v2166 = vld [vmem:[#allocation22 + $0x20] sm:$0xff]
        %v2167 = vld [vmem:[#allocation22 + $0x28] sm:$0xff]
        %v2168 = vld [vmem:[#allocation22 + $0x30] sm:$0xff]
        %v2169 = vld [vmem:[#allocation22 + $0x38] sm:$0xff]
        %v2170 = vld [vmem:[#allocation23] sm:$0x1]
        %v2172 = vlaneseq
        %v2173 = vshrl.u32 %v2172, 7
        %v2174 = vsub.s32 0, %v2173
        %v2175 = vrot.slane %v2170, %v2174
        %v2178 = vsel %vm1092, %v2161, 0
        %2180 = vmatprep.subr.mxu0 0.0
        %2181 = vmatpush1.msra.mxu0 %v2162
        %2182 = vmatprep.subr.mxu0 0.0
        %2183 = vmatpush1.msra.mxu0 %v2163
        %2184 = vmatprep.subr.mxu0 0.0
        %2185 = vmatpush1.msra.mxu0 %v2164
        %2186 = vmatprep.subr.mxu0 0.0
        %2187 = vmatpush1.msra.mxu0 %v2165
        %2188 = vmatprep.subr.mxu0 0.0
        %2189 = vmatpush1.msra.mxu0 %v2166
        %2190 = vmatprep.subr.mxu0 0.0
        %2191 = vmatpush1.msra.mxu0 %v2167
        %2192 = vmatprep.subr.mxu0 0.0
        %2193 = vmatpush1.msra.mxu0 %v2168
        %2194 = vmatprep.subr.mxu0 0.0
        %2195 = vmatpush1.msra.mxu0 %v2169
        %2196 = vmatprep.subr.mxu0 0.0
        %2197 = vmatpush1.msra.mxu0 0.0
        %2198 = vmatprep.subr.mxu0 0.0
        %2199 = vmatpush1.msra.mxu0 0.0
        %2200 = vmatprep.subr.mxu0 0.0
        %2201 = vmatpush1.msra.mxu0 0.0
        %2202 = vmatprep.subr.mxu0 0.0
        %2203 = vmatpush1.msra.mxu0 0.0
        %2204 = vmatprep.subr.mxu0 0.0
        %2205 = vmatpush1.msra.mxu0 0.0
        %2206 = vmatprep.subr.mxu0 0.0
        %2207 = vmatpush1.msra.mxu0 0.0
        %2208 = vmatprep.subr.mxu0 0.0
        %2209 = vmatpush1.msra.mxu0 0.0
        %2210 = vmatprep.subr.mxu0 0.0
        %2211 = vmatpush1.msra.mxu0 0.0
        %2212 = vmatprep.subr.mxu0 0.0
        %2213 = vmatpush1.msra.mxu0 0.0
        %2214 = vmatprep.subr.mxu0 0.0
        %2215 = vmatpush1.msra.mxu0 0.0
        %2216 = vmatprep.subr.mxu0 0.0
        %2217 = vmatpush1.msra.mxu0 0.0
        %2218 = vmatprep.subr.mxu0 0.0
        %2219 = vmatpush1.msra.mxu0 0.0
        %2220 = vmatprep.subr.mxu0 0.0
        %2221 = vmatpush1.msra.mxu0 0.0
        %2222 = vmatprep.subr.mxu0 0.0
        %2223 = vmatpush1.msra.mxu0 0.0
        %2224 = vmatprep.subr.mxu0 0.0
        %2225 = vmatpush1.msra.mxu0 0.0
        %2226 = vmatprep.subr.mxu0 0.0
        %2227 = vmatpush1.msra.mxu0 0.0
        %2228 = vmatprep.subr.mxu0 0.0
        %2229 = vmatpush1.msra.mxu0 0.0
        %2230 = vmatprep.subr.mxu0 0.0
        %2231 = vmatpush1.msra.mxu0 0.0
        %2232 = vmatprep.subr.mxu0 0.0
        %2233 = vmatpush1.msra.mxu0 0.0
        %2234 = vmatprep.subr.mxu0 0.0
        %2235 = vmatpush1.msra.mxu0 0.0
        %2236 = vmatprep.subr.mxu0 0.0
        %2237 = vmatpush1.msra.mxu0 0.0
        %2238 = vmatprep.subr.mxu0 0.0
        %2239 = vmatpush1.msra.mxu0 0.0
        %2240 = vmatprep.subr.mxu0 0.0
        %2241 = vmatpush1.msra.mxu0 0.0
        %2242 = vmatprep.subr.mxu0 0.0
        %2243 = vmatpush1.msra.mxu0 0.0
        %2244 = vmatprep.mubr.f32.mxu0 0.0
        %2245 = vmatmul.mubr.f32.gmra.mrb[0].mxu0 %v2178
        %v2246 = vpop.f32.mrb[0].mxu0
        %v2247 = vadd.f32 %v2175, %v2246
        %v2248 = vpop.f32.mrb[0].mxu0
        %2249 = vdwg.mxu0
        %v2250 = vld [vmem:[#allocation25] sm:$0xff]
        %v2251 = vld [vmem:[#allocation25 + $0x8] sm:$0xff]
        %v2252 = vld [vmem:[#allocation25 + $0x10] sm:$0xff]
        %v2253 = vld [vmem:[#allocation25 + $0x18] sm:$0xff]
        %v2254 = vld [vmem:[#allocation25 + $0x20] sm:$0xff]
        %v2255 = vld [vmem:[#allocation25 + $0x28] sm:$0xff]
        %v2256 = vld [vmem:[#allocation25 + $0x30] sm:$0xff]
        %v2257 = vld [vmem:[#allocation25 + $0x38] sm:$0xff]
        %v2258 = vld [vmem:[#allocation26] sm:$0xff]
        %v2259 = vld [vmem:[#allocation26 + $0x8] sm:$0xff]
        %v2260 = vld [vmem:[#allocation26 + $0x10] sm:$0xff]
        %v2261 = vld [vmem:[#allocation26 + $0x18] sm:$0xff]
        %v2262 = vld [vmem:[#allocation26 + $0x20] sm:$0xff]
        %v2263 = vld [vmem:[#allocation26 + $0x28] sm:$0xff]
        %v2264 = vld [vmem:[#allocation26 + $0x30] sm:$0xff]
        %v2265 = vld [vmem:[#allocation26 + $0x38] sm:$0xff]
        %v2266 = vld [vmem:[#allocation28] sm:$0x1]
        %v2267 = vld [vmem:[#allocation29] sm:$0x1]
        %v2268 = vld [vmem:[#allocation31] sm:$0x1]
        %v2269 = vld [vmem:[#allocation32] sm:$0xff]
        %v2270 = vld [vmem:[#allocation32 + $0x8] sm:$0xff]
        %v2271 = vld [vmem:[#allocation32 + $0x10] sm:$0xff]
        %v2272 = vld [vmem:[#allocation32 + $0x18] sm:$0xff]
        %v2273 = vld [vmem:[#allocation32 + $0x20] sm:$0xff]
        %v2274 = vld [vmem:[#allocation32 + $0x28] sm:$0xff]
        %v2275 = vld [vmem:[#allocation32 + $0x30] sm:$0xff]
        %v2276 = vld [vmem:[#allocation32 + $0x38] sm:$0xff]
        %v2277 = vld [vmem:[#allocation32 + $0x40] sm:$0xff]
        %v2278 = vld [vmem:[#allocation32 + $0x48] sm:$0xff]
        %v2279 = vld [vmem:[#allocation32 + $0x50] sm:$0xff]
        %v2280 = vld [vmem:[#allocation32 + $0x58] sm:$0xff]
        %v2281 = vld [vmem:[#allocation32 + $0x60] sm:$0xff]
        %v2282 = vld [vmem:[#allocation32 + $0x68] sm:$0xff]
        %v2283 = vld [vmem:[#allocation32 + $0x70] sm:$0xff]
        %v2284 = vld [vmem:[#allocation32 + $0x78] sm:$0xff]
        %v2285 = vld [vmem:[#allocation34] sm:$0x1]
        %v2287 = vsel %vm1092, %v2247, 0
        %2289 = vmatprep.subr.mxu0 0.0
        %2290 = vmatpush1.msra.mxu0 %v2258
        %2291 = vmatprep.subr.mxu0 0.0
        %2292 = vmatpush1.msra.mxu0 %v2259
        %2293 = vmatprep.subr.mxu0 0.0
        %2294 = vmatpush1.msra.mxu0 %v2260
        %2295 = vmatprep.subr.mxu0 0.0
        %2296 = vmatpush1.msra.mxu0 %v2261
        %2297 = vmatprep.subr.mxu0 0.0
        %2298 = vmatpush1.msra.mxu0 %v2262
        %2299 = vmatprep.subr.mxu0 0.0
        %2300 = vmatpush1.msra.mxu0 %v2263
        %2301 = vmatprep.subr.mxu0 0.0
        %2302 = vmatpush1.msra.mxu0 %v2264
        %2303 = vmatprep.subr.mxu0 0.0
        %2304 = vmatpush1.msra.mxu0 %v2265
        %2305 = vmatprep.subr.mxu0 0.0
        %2306 = vmatpush1.msra.mxu0 0.0
        %2307 = vmatprep.subr.mxu0 0.0
        %2308 = vmatpush1.msra.mxu0 0.0
        %2309 = vmatprep.subr.mxu0 0.0
        %2310 = vmatpush1.msra.mxu0 0.0
        %2311 = vmatprep.subr.mxu0 0.0
        %2312 = vmatpush1.msra.mxu0 0.0
        %2313 = vmatprep.subr.mxu0 0.0
        %2314 = vmatpush1.msra.mxu0 0.0
        %2315 = vmatprep.subr.mxu0 0.0
        %2316 = vmatpush1.msra.mxu0 0.0
        %2317 = vmatprep.subr.mxu0 0.0
        %2318 = vmatpush1.msra.mxu0 0.0
        %2319 = vmatprep.subr.mxu0 0.0
        %2320 = vmatpush1.msra.mxu0 0.0
        %2321 = vmatprep.subr.mxu0 0.0
        %2322 = vmatpush1.msra.mxu0 0.0
        %2323 = vmatprep.subr.mxu0 0.0
        %2324 = vmatpush1.msra.mxu0 0.0
        %2325 = vmatprep.subr.mxu0 0.0
        %2326 = vmatpush1.msra.mxu0 0.0
        %2327 = vmatprep.subr.mxu0 0.0
        %2328 = vmatpush1.msra.mxu0 0.0
        %2329 = vmatprep.subr.mxu0 0.0
        %2330 = vmatpush1.msra.mxu0 0.0
        %2331 = vmatprep.subr.mxu0 0.0
        %2332 = vmatpush1.msra.mxu0 0.0
        %2333 = vmatprep.subr.mxu0 0.0
        %2334 = vmatpush1.msra.mxu0 0.0
        %2335 = vmatprep.subr.mxu0 0.0
        %2336 = vmatpush1.msra.mxu0 0.0
        %2337 = vmatprep.subr.mxu0 0.0
        %2338 = vmatpush1.msra.mxu0 0.0
        %2339 = vmatprep.subr.mxu0 0.0
        %2340 = vmatpush1.msra.mxu0 0.0
        %2341 = vmatprep.subr.mxu0 0.0
        %2342 = vmatpush1.msra.mxu0 0.0
        %2343 = vmatprep.subr.mxu0 0.0
        %2344 = vmatpush1.msra.mxu0 0.0
        %2345 = vmatprep.subr.mxu0 0.0
        %2346 = vmatpush1.msra.mxu0 0.0
        %2347 = vmatprep.subr.mxu0 0.0
        %2348 = vmatpush1.msra.mxu0 0.0
        %2349 = vmatprep.subr.mxu0 0.0
        %2350 = vmatpush1.msra.mxu0 0.0
        %2351 = vmatprep.subr.mxu0 0.0
        %2352 = vmatpush1.msra.mxu0 0.0
        %2353 = vmatprep.mubr.f32.mxu0 0.0
        %2354 = vmatmul.mubr.f32.gmra.mrb[0].mxu0 %v2287
        %v2355 = vpop.f32.mrb[0].mxu0
        %v2356 = vadd.f32 0.0, %v2355
        %v2357 = vpop.f32.mrb[0].mxu0
        %2358 = vdwg.mxu0
        %2359 = vmatprep.subr.mxu0 0.0
        %2360 = vmatpush1.msra.mxu0 %v2250
        %2361 = vmatprep.subr.mxu0 0.0
        %2362 = vmatpush1.msra.mxu0 %v2251
        %2363 = vmatprep.subr.mxu0 0.0
        %2364 = vmatpush1.msra.mxu0 %v2252
        %2365 = vmatprep.subr.mxu0 0.0
        %2366 = vmatpush1.msra.mxu0 %v2253
        %2367 = vmatprep.subr.mxu0 0.0
        %2368 = vmatpush1.msra.mxu0 %v2254
        %2369 = vmatprep.subr.mxu0 0.0
        %2370 = vmatpush1.msra.mxu0 %v2255
        %2371 = vmatprep.subr.mxu0 0.0
        %2372 = vmatpush1.msra.mxu0 %v2256
        %2373 = vmatprep.subr.mxu0 0.0
        %2374 = vmatpush1.msra.mxu0 %v2257
        %2375 = vmatprep.subr.mxu0 0.0
        %2376 = vmatpush1.msra.mxu0 0.0
        %2377 = vmatprep.subr.mxu0 0.0
        %2378 = vmatpush1.msra.mxu0 0.0
        %2379 = vmatprep.subr.mxu0 0.0
        %2380 = vmatpush1.msra.mxu0 0.0
        %2381 = vmatprep.subr.mxu0 0.0
        %2382 = vmatpush1.msra.mxu0 0.0
        %2383 = vmatprep.subr.mxu0 0.0
        %2384 = vmatpush1.msra.mxu0 0.0
        %2385 = vmatprep.subr.mxu0 0.0
        %2386 = vmatpush1.msra.mxu0 0.0
        %2387 = vmatprep.subr.mxu0 0.0
        %2388 = vmatpush1.msra.mxu0 0.0
        %2389 = vmatprep.subr.mxu0 0.0
        %2390 = vmatpush1.msra.mxu0 0.0
        %2391 = vmatprep.subr.mxu0 0.0
        %2392 = vmatpush1.msra.mxu0 0.0
        %2393 = vmatprep.subr.mxu0 0.0
        %2394 = vmatpush1.msra.mxu0 0.0
        %2395 = vmatprep.subr.mxu0 0.0
        %2396 = vmatpush1.msra.mxu0 0.0
        %2397 = vmatprep.subr.mxu0 0.0
        %2398 = vmatpush1.msra.mxu0 0.0
        %2399 = vmatprep.subr.mxu0 0.0
        %2400 = vmatpush1.msra.mxu0 0.0
        %2401 = vmatprep.subr.mxu0 0.0
        %2402 = vmatpush1.msra.mxu0 0.0
        %2403 = vmatprep.subr.mxu0 0.0
        %2404 = vmatpush1.msra.mxu0 0.0
        %2405 = vmatprep.subr.mxu0 0.0
        %2406 = vmatpush1.msra.mxu0 0.0
        %2407 = vmatprep.subr.mxu0 0.0
        %2408 = vmatpush1.msra.mxu0 0.0
        %2409 = vmatprep.subr.mxu0 0.0
        %2410 = vmatpush1.msra.mxu0 0.0
        %2411 = vmatprep.subr.mxu0 0.0
        %2412 = vmatpush1.msra.mxu0 0.0
        %2413 = vmatprep.subr.mxu0 0.0
        %2414 = vmatpush1.msra.mxu0 0.0
        %2415 = vmatprep.subr.mxu0 0.0
        %2416 = vmatpush1.msra.mxu0 0.0
        %2417 = vmatprep.subr.mxu0 0.0
        %2418 = vmatpush1.msra.mxu0 0.0
        %2419 = vmatprep.subr.mxu0 0.0
        %2420 = vmatpush1.msra.mxu0 0.0
        %2421 = vmatprep.subr.mxu0 0.0
        %2422 = vmatpush1.msra.mxu0 0.0
        %2423 = vmatprep.mubr.f32.mxu0 0.0
        %2424 = vmatmul.mubr.f32.gmra.mrb[0].mxu0 %v1094
        %v2425 = vpop.f32.mrb[0].mxu0
        %v2426 = vadd.f32 %v2356, %v2425
        %v2427 = vpop.f32.mrb[0].mxu0
        %2428 = vdwg.mxu0
        %v2430 = vlaneseq
        %v2431 = vshrl.u32 %v2430, 7
        %v2432 = vsub.s32 0, %v2431
        %v2433 = vrot.slane %v2266, %v2432
        %v2435 = vadd.f32 %v2426, %v2433
        %2436 = vadd.xlane.f32.xlu0 %v2435
        %v2437 = vpop.xlane.xlu0 %2436
        %v2438 = vrcp.pop 128.0
        %v2439 = vmul.f32 %v2437, %v2438
        %v2440 = vsub.f32 %v2435, %v2439
        %v2441 = vmul.f32 %v2440, %v2440
        %2442 = vadd.xlane.f32.xlu0 %v2441
        %v2443 = vpop.xlane.xlu0 %2442
        %v2444 = vmul.f32 %v2443, %v2438
        %v2445 = vadd.f32 %v2444, 1e-05
        %v2446 = vrsqrt.pop %v2445
        %v2447 = vmul.f32 %v2440, %v2446
        %v2449 = vlaneseq
        %v2450 = vshrl.u32 %v2449, 7
        %v2451 = vsub.s32 0, %v2450
        %v2452 = vrot.slane %v2267, %v2451
        %v2454 = vmul.f32 %v2447, %v2452
        %v2456 = vlaneseq
        %v2457 = vshrl.u32 %v2456, 7
        %v2458 = vsub.s32 0, %v2457
        %v2459 = vrot.slane %v2268, %v2458
        %v2461 = vadd.f32 %v2454, %v2459
        %v2462 = vmul.f32 %v2461, 0.5
        %v2463 = vmul.f32 %v2461, 0.70710677
        %vm2464 = vcmp.lt.f32.partialorder %v2463, 0.0
        %v2465 = vsel %vm2464, -1.0, 1.0
        %v2466 = vand.u32 2147483647, %v2463
        %v2467 = vmul.f32 %v2466, 0.3275911
        %v2468 = vadd.f32 %v2467, 1.0
        %v2469 = vrcp.pop %v2468
        %v2470 = vmul.f32 1.0, %v2469
        %v2471 = vmul.f32 %v2470, 1.0614054
        %v2472 = vadd.f32 %v2471, -1.4531521
        %v2473 = vmul.f32 %v2472, %v2470
        %v2474 = vadd.f32 %v2473, 1.4214138
        %v2475 = vmul.f32 %v2474, %v2470
        %v2476 = vadd.f32 %v2475, -0.28449672
        %v2477 = vmul.f32 %v2476, %v2470
        %v2478 = vadd.f32 %v2477, 0.2548296
        %v2479 = vmul.f32 %v2478, %v2470
        %v2480 = vsub.f32 0.0, %v2466
        %v2481 = vmul.f32 %v2480, %v2466
        %v2482 = vmul.f32 %v2481, 1.442695
        %v2483 = vpow.pop %v2482
        %v2484 = vmul.f32 %v2479, %v2483
        %v2485 = vsub.f32 1.0, %v2484
        %v2486 = vmul.f32 %v2465, %v2485
        %v2487 = vadd.f32 %v2486, 1.0
        %v2488 = vmul.f32 %v2462, %v2487
        %v2490 = vlaneseq
        %v2491 = vshrl.u32 %v2490, 7
        %v2492 = vsub.s32 0, %v2491
        %v2493 = vrot.slane %v2285, %v2492
        %2495 = vmatprep.subr.mxu0 0.0
        %2496 = vmatpush1.msra.mxu0 %v2269
        %2497 = vmatprep.subr.mxu0 0.0
        %2498 = vmatpush1.msra.mxu0 %v2270
        %2499 = vmatprep.subr.mxu0 0.0
        %2500 = vmatpush1.msra.mxu0 %v2271
        %2501 = vmatprep.subr.mxu0 0.0
        %2502 = vmatpush1.msra.mxu0 %v2272
        %2503 = vmatprep.subr.mxu0 0.0
        %2504 = vmatpush1.msra.mxu0 %v2273
        %2505 = vmatprep.subr.mxu0 0.0
        %2506 = vmatpush1.msra.mxu0 %v2274
        %2507 = vmatprep.subr.mxu0 0.0
        %2508 = vmatpush1.msra.mxu0 %v2275
        %2509 = vmatprep.subr.mxu0 0.0
        %2510 = vmatpush1.msra.mxu0 %v2276
        %2511 = vmatprep.subr.mxu0 0.0
        %2512 = vmatpush1.msra.mxu0 %v2277
        %2513 = vmatprep.subr.mxu0 0.0
        %2514 = vmatpush1.msra.mxu0 %v2278
        %2515 = vmatprep.subr.mxu0 0.0
        %2516 = vmatpush1.msra.mxu0 %v2279
        %2517 = vmatprep.subr.mxu0 0.0
        %2518 = vmatpush1.msra.mxu0 %v2280
        %2519 = vmatprep.subr.mxu0 0.0
        %2520 = vmatpush1.msra.mxu0 %v2281
        %2521 = vmatprep.subr.mxu0 0.0
        %2522 = vmatpush1.msra.mxu0 %v2282
        %2523 = vmatprep.subr.mxu0 0.0
        %2524 = vmatpush1.msra.mxu0 %v2283
        %2525 = vmatprep.subr.mxu0 0.0
        %2526 = vmatpush1.msra.mxu0 %v2284
        %2527 = vmatprep.subr.mxu0 0.0
        %2528 = vmatpush1.msra.mxu0 0.0
        %2529 = vmatprep.subr.mxu0 0.0
        %2530 = vmatpush1.msra.mxu0 0.0
        %2531 = vmatprep.subr.mxu0 0.0
        %2532 = vmatpush1.msra.mxu0 0.0
        %2533 = vmatprep.subr.mxu0 0.0
        %2534 = vmatpush1.msra.mxu0 0.0
        %2535 = vmatprep.subr.mxu0 0.0
        %2536 = vmatpush1.msra.mxu0 0.0
        %2537 = vmatprep.subr.mxu0 0.0
        %2538 = vmatpush1.msra.mxu0 0.0
        %2539 = vmatprep.subr.mxu0 0.0
        %2540 = vmatpush1.msra.mxu0 0.0
        %2541 = vmatprep.subr.mxu0 0.0
        %2542 = vmatpush1.msra.mxu0 0.0
        %2543 = vmatprep.subr.mxu0 0.0
        %2544 = vmatpush1.msra.mxu0 0.0
        %2545 = vmatprep.subr.mxu0 0.0
        %2546 = vmatpush1.msra.mxu0 0.0
        %2547 = vmatprep.subr.mxu0 0.0
        %2548 = vmatpush1.msra.mxu0 0.0
        %2549 = vmatprep.subr.mxu0 0.0
        %2550 = vmatpush1.msra.mxu0 0.0
        %2551 = vmatprep.subr.mxu0 0.0
        %2552 = vmatpush1.msra.mxu0 0.0
        %2553 = vmatprep.subr.mxu0 0.0
        %2554 = vmatpush1.msra.mxu0 0.0
        %2555 = vmatprep.subr.mxu0 0.0
        %2556 = vmatpush1.msra.mxu0 0.0
        %2557 = vmatprep.subr.mxu0 0.0
        %2558 = vmatpush1.msra.mxu0 0.0
        %2559 = vmatprep.mubr.f32.mxu0 0.0
        %2560 = vmatmul.mubr.f32.gmra.mrb[0].mxu0 %v2488
        %v2561 = vpop.f32.mrb[0].mxu0
        %v2562 = vadd.f32 %v2493, %v2561
        %v2563 = vpop.f32.mrb[0].mxu0
        %2564 = vdwg.mxu0
        %v2565 = vadd.f32 %v1075, %v2562
        %2566 = vst.msk [vmem:[%s1074] sm:$0xff] %vm1092, %v2565
        %s2567 = sand.u32 %s553, 1
        %s2568 = scalar_lea.sflag [#allocation4], %s2567
        %s2569 = sand.u32 %s553, 1
        %s2570 = smul.addr %s2569, 8
        %s2571 = scalar_lea.vmem [#allocation35], %s2570
        // Predicated region
        $region189: #{tpu_custom_call.1} parent=103 // pred_check
          %p2572 = pneg %p563
        $region190: #{tpu_custom_call.1} parent=103 // pred_check_branch
          %2574 = sbr.rel (%p2572) target = $region192
        $region191: #{tpu_custom_call.1} parent=103 // pred_region
          %s2576 = ssub.s32 128, 128
          %2577 = vsyncadd %s2568, %s2576
          %s2578 = sadd.s32 %s59, %s58
          %s2579 = smul.addr %s2578, 128
          %s2580 = scalar_lea.hbm %s21, %s2579
          %s2582 = sshll.u32 %s2571, 4
          %s2583 = int_to_ptr.vmem [resolvable:$true] %s2582
          %2585 = dma.vmem_to_hbm [thread:$0]  %s2583, 128, %s2580, %s2568
        $region192: #{tpu_custom_call.1} parent=103 // pred_fallthru
          _
      $region104: #{tpu_custom_call.1} parent=5 // pred_fallthru
        _
      %p2586 = scmp.le.s32.totalorder 2, %s49
      // Predicated region
      $region193: #{tpu_custom_call.1} parent=5 // pred_check
        %p2587 = pneg %p2586
      $region194: #{tpu_custom_call.1} parent=5 // pred_check_branch
        %2589 = sbr.rel (%p2587) target = $region196
      $region195: #{tpu_custom_call.1} parent=5 // pred_region
        %s2590 = ssub.s32 %s49, 2
        // Predicated region
        $region197: #{tpu_custom_call.1} parent=195 // pred_check
          %p2591 = pneg %p569
        $region198: #{tpu_custom_call.1} parent=195 // pred_check_branch
          %2593 = sbr.rel (%p2591) target = $region200
        $region199: #{tpu_custom_call.1} parent=195 // pred_region
          %s2594 = sand.u32 %s554, 1
          %s2595 = scalar_lea.sflag [#allocation4], %s2594
          %s2596 = sand.u32 %s554, 1
          %s2597 = smul.addr %s2596, 8
          %s2598 = scalar_lea.vmem [#allocation35], %s2597
          %2599 = dma.done %s2595, 128
        $region200: #{tpu_custom_call.1} parent=195 // pred_fallthru
          _
      $region196: #{tpu_custom_call.1} parent=5 // pred_fallthru
        _
    $region6: #{tpu_custom_call.1} parent=1 // loop_footer
      %s53 = sadd.s32 1, %s49
    $region7: #{tpu_custom_call.1} parent=1 // loop_footer_branch
      %48 = sbr.rel target = $region3
    $region8: #{tpu_custom_call.1} parent=1 // loop_exit
      _
    %2600 = vsyncpa [#allocation3], 1
    %s2601 = scalar_lea.sflag [#allocation3], 1
    %2602 = vsyncpa %s2601, 1
    %2603 = vsyncpa [#allocation6], 1
    %s2604 = scalar_lea.sflag [#allocation6], 1
    %2605 = vsyncpa %s2604, 1
    %2606 = vsyncpa [#allocation9], 1
    %s2607 = scalar_lea.sflag [#allocation9], 1
    %2608 = vsyncpa %s2607, 1
    %2609 = vsyncpa [#allocation12], 1
    %s2610 = scalar_lea.sflag [#allocation12], 1
    %2611 = vsyncpa %s2610, 1
    %2612 = vsyncpa [#allocation15], 1
    %2613 = vsyncpa [#allocation18], 1
    %2614 = vsyncpa [#allocation21], 1
    %2615 = vsyncpa [#allocation24], 1
    %2616 = vsyncpa [#allocation27], 1
    %2617 = vsyncpa [#allocation30], 1
    %2618 = vsyncpa [#allocation33], 1
    %2619 = vsyncpa [#allocation4], 1
    %s2620 = scalar_lea.sflag [#allocation4], 1
    %2621 = vsyncpa %s2620, 1

</llo_original>
